<compile_context>
chip_gen: v5e
topology: v5e:2x2
jax: 0.10.0
libtpu: 0.0.40
codegen_flags: <defaults>
</compile_context>

<pallas_src>
import math
from functools import partial

import jax
import jax.numpy as jnp
from jax.experimental import pallas as pl
from jax.experimental.pallas import tpu as pltpu


def _pair(v):
    return (v, v) if isinstance(v, int) else tuple(v)


def _ceil_to(v, m):
    return ((v + m - 1) // m) * m


def _block_vmem_bytes(shape, dtype):
    """Rough VMEM footprint of a block ((8,128)-rounded last two dims)."""
    itemsize = jnp.dtype(dtype).itemsize
    if len(shape) < 2:
        return _ceil_to(int(shape[0]) if shape else 1, 128) * itemsize
    lead = 1
    for s in shape[:-2]:
        lead *= int(s)
    return lead * _ceil_to(int(shape[-2]), 8) * _ceil_to(int(shape[-1]), 128) * itemsize


def _pick_cout_tile(cout):
    """Cout (lane) tile: MXU N-dim is 256 on v6e/v7x, 128 on v5e and older."""
    tc = 128
    try:
        kind = jax.devices()[0].device_kind.lower()
        if any(t in kind for t in ("v6", "v7", "7x")):
            tc = 256
    except Exception:  # pragma: no cover - device query is best-effort only
        pass
    if cout <= 128:
        tc = 128                      # don't over-pad tiny Cout
    return tc


# ----------------------------------------------------------------------------
# Pallas kernel: strided + perforated conv "down" pass.
# One (batch, cout-tile, output-row-tile) block per grid step.
# ----------------------------------------------------------------------------
def _down_conv_kernel(x_ref, w_ref, b_ref, o_ref, *,
                      KH, KW, dh, dw, SH, SW, TOH, OWD, CIN, HQ, CONCAT_KW):
    # x_ref: (1, SH*SW*Hq, Wq, CIN)  phase-decomposed, zero-padded image (bf16)
    # w_ref: (KH*KW*CIN, TC)         folded weights, lane-dense Cout tile
    # b_ref: (1, TC)                 f32 bias tile
    # o_ref: (1, TOH, OWD, TC)       output tile
    r = pl.program_id(2)                       # output-row-tile index
    row0 = r * TOH
    TC = o_ref.shape[-1]
    M = TOH * OWD
    acc = jnp.zeros((M, TC), jnp.float32)

    def tap(i, j):
        # static phase / quotient for input position (oh*SH + i*dh, ow*SW + j*dw)
        qi, pi = divmod(i * dh, SH)
        qj, pj = divmod(j * dw, SW)
        phase = pi * SW + pj                   # static
        v = x_ref[0, pl.ds(phase * HQ + qi + row0, TOH), pl.ds(qj, OWD), :]
        return v.reshape(M, CIN)               # OWD % 8 == 0 -> free regroup

    for i in range(KH):                        # static, unrolled
        if CONCAT_KW:
            # lane-aligned (CIN % 128 == 0) concat of the KW taps of one kernel
            # row -> single deeper-K MXU dot, no full im2col buffer.
            lhs = jnp.concatenate([tap(i, j) for j in range(KW)], axis=-1)
            w_row = w_ref[pl.ds(i * KW * CIN, KW * CIN), :]
            acc = acc + jnp.dot(lhs, w_row, preferred_element_type=jnp.float32)
        else:
            # per-tap dots (K = CIN): no cross-lane relayout for small /
            # non-128-multiple Cin.
            for j in range(KW):
                w_tap = w_ref[pl.ds((i * KW + j) * CIN, CIN), :]
                acc = acc + jnp.dot(tap(i, j), w_tap,
                                    preferred_element_type=jnp.float32)

    acc = acc + b_ref[...]                     # (1, TC) broadcasts
    o_ref[0] = acc.reshape(TOH, OWD, TC).astype(o_ref.dtype)


# ----------------------------------------------------------------------------
# Wrapper: conv2d evaluated only on the (stride * perf_stride) output grid.
# ----------------------------------------------------------------------------
def perforated_conv2d_down_nhwc(x_nhwc, weight_oihw, bias, stride, padding,
                                dilation, perf_stride,
                                compute_dtype=jnp.bfloat16, out_dtype=None):
    """Returns the 'down' conv output in NHWC: (N, OHD, OWD, Cout)."""
    N, H, W, Cin = x_nhwc.shape
    Cout, Cin_g, KH, KW = weight_oihw.shape
    assert Cin_g == Cin, "groups != 1 not supported"   # TODO(synk): grouped conv
    sh, sw = stride
    ph, pw = padding
    dh, dw = dilation
    p1, p2 = perf_stride
    SH, SW = sh * p1, sw * p2                          # effective output stride

    h_eff = H + 2 * ph - dh * (KH - 1)
    w_eff = W + 2 * pw - dw * (KW - 1)
    OHD = (h_eff - 1) // SH + 1                        # rows actually computed
    OWD = (w_eff - 1) // SW + 1                        # cols actually computed

    # ---- tiling choices --------------------------------------------------
    TC = _pick_cout_tile(Cout)                         # 256 on v6e/v7x else 128
    Cout_pad = _ceil_to(Cout, TC)
    n_ct = Cout_pad // TC
    OWD_pad = _ceil_to(OWD, 8)                         # sublane-aligned width
    TOH = max(1, min(OHD, pl.cdiv(256, OWD_pad)))      # target M ~ 256
    n_rt = pl.cdiv(OHD, TOH)
    OHD_pad = n_rt * TOH
    Cin_p = _ceil_to(Cin, 8)                           # aligned K slices

    # ---- input: pad + phase-decompose the effective stride ----------------
    # Hq/Wq sized so the last (cdiv) row tile and the kernel halo stay in-bounds.
    Hq = max(OHD_pad + ((KH - 1) * dh) // SH, pl.cdiv(H + 2 * ph, SH))
    Wq = max(OWD_pad + ((KW - 1) * dw) // SW, pl.cdiv(W + 2 * pw, SW))
    Hp, Wp = Hq * SH, Wq * SW
    x = jnp.pad(x_nhwc.astype(compute_dtype),
                ((0, 0), (ph, Hp - H - ph), (pw, Wp - W - pw), (0, Cin_p - Cin)))
    # (N,Hp,Wp,C) -> (N, SH*SW*Hq, Wq, C): one cheap XLA transpose (a no-op when
    # SH == SW == 1).  All in-kernel loads become unit-stride rectangles.
    x = x.reshape(N, Hq, SH, Wq, SW, Cin_p).transpose(0, 2, 4, 1, 3, 5)
    x = x.reshape(N, SH * SW * Hq, Wq, Cin_p)

    # ---- weights folded to (KH*KW*Cin_p, Cout_pad), tap-major rows --------
    w = jnp.transpose(weight_oihw, (2, 3, 1, 0))       # (KH, KW, Cin, Cout)
    w = jnp.pad(w, ((0, 0), (0, 0), (0, Cin_p - Cin), (0, Cout_pad - Cout)))
    w = w.reshape(KH * KW * Cin_p, Cout_pad).astype(compute_dtype)
    if bias is None:
        b = jnp.zeros((1, Cout_pad), jnp.float32)
    else:
        b = jnp.pad(bias.astype(jnp.float32),
                    (0, Cout_pad - Cout)).reshape(1, Cout_pad)

    out_dtype = x_nhwc.dtype if out_dtype is None else out_dtype
    concat_kw = (Cin_p % 128 == 0) and (KW > 1)

    kern = partial(_down_conv_kernel, KH=KH, KW=KW, dh=dh, dw=dw, SH=SH, SW=SW,
                   TOH=TOH, OWD=OWD_pad, CIN=Cin_p, HQ=Hq, CONCAT_KW=concat_kw)

    x_spec = pl.BlockSpec((1, SH * SW * Hq, Wq, Cin_p),
                          lambda n, c, r: (n, 0, 0, 0))
    w_spec = pl.BlockSpec((KH * KW * Cin_p, TC), lambda n, c, r: (0, c))
    b_spec = pl.BlockSpec((1, TC), lambda n, c, r: (0, c))
    o_spec = pl.BlockSpec((1, TOH, OWD_pad, TC), lambda n, c, r: (n, r, 0, c))

    # Explicit VMEM limit: image/weight/bias/output blocks are double-buffered
    # by the auto-pipeline; add accumulator + headroom.
    vmem_need = 2 * (_block_vmem_bytes((1, SH * SW * Hq, Wq, Cin_p), compute_dtype)
                     + _block_vmem_bytes((KH * KW * Cin_p, TC), compute_dtype)
                     + _block_vmem_bytes((1, TC), jnp.float32)
                     + _block_vmem_bytes((1, TOH, OWD_pad, TC), out_dtype)) \
        + 4 * _block_vmem_bytes((TOH * OWD_pad, TC), jnp.float32)
    vmem_limit = max(24 << 20, min(int(1.5 * vmem_need) + (4 << 20), 110 << 20))

    flops = 2 * N * OHD * OWD * KH * KW * Cin * Cout
    bytes_accessed = (x.size * x.dtype.itemsize + w.size * w.dtype.itemsize
                      + N * OHD_pad * OWD_pad * Cout_pad
                      * jnp.dtype(out_dtype).itemsize)

    out = pl.pallas_call(
        kern,
        out_shape=jax.ShapeDtypeStruct((N, OHD_pad, OWD_pad, Cout_pad), out_dtype),
        grid_spec=pltpu.PrefetchScalarGridSpec(
            num_scalar_prefetch=0,
            grid=(N, n_ct, n_rt),
            in_specs=[x_spec, w_spec, b_spec],
            out_specs=o_spec),
        compiler_params=pltpu.CompilerParams(
            dimension_semantics=("parallel", "parallel", "parallel"),
            vmem_limit_bytes=vmem_limit),
        cost_estimate=pl.CostEstimate(flops=flops, transcendentals=0,
                                      bytes_accessed=bytes_accessed),
    )(x, w, b)

    if (OHD_pad, OWD_pad, Cout_pad) != (OHD, OWD, Cout):
        out = out[:, :OHD, :OWD, :Cout]                # elided when no padding
    return out                                         # (N, OHD, OWD, Cout)


# ----------------------------------------------------------------------------
# Module-equivalent wrapper (forward semantics of DownActivUp)
# ----------------------------------------------------------------------------
class DownActivUpPallas:
    def __init__(self, in_channels, out_channels, kernel_size=(1, 1), stride=1,
                 padding=(0, 0), dilation=1, groups=1, bias=True,
                 activation=None, perf_stride=None, up=True, down=True,
                 compute_dtype=jnp.bfloat16, out_dtype=None, key=None):
        self.in_channels = in_channels
        self.out_channels = out_channels
        self.kernel_size = _pair(kernel_size)
        self.stride = _pair(stride)
        self.padding = _pair(padding)
        self.dilation = _pair(dilation)
        self.groups = groups
        assert groups == 1, "groups != 1 not supported"          # TODO(synk): groups
        assert up and down, "partial up/down paths unsupported"  # TODO(synk): down=False rand path
        self.activation = activation          # applied only on the perforated path
        self.perf_stride = _pair(perf_stride) if perf_stride is not None else (1, 1)
        self.is_bias = bool(bias)
        self.hard_limit = self.kernel_size == (1, 1)
        # bf16 compute (f32 accumulation) is an explicit knob; pass
        # compute_dtype=jnp.float32 for full-precision parity with PyTorch.
        self.compute_dtype = compute_dtype
        self.out_dtype = out_dtype            # None -> same as input dtype
        self.recompute = True
        self._cached_hw = None
        self.out_x = 0
        self.out_y = 0

        # Deterministic init matching nn.init.kaiming_uniform_(a=sqrt(5)):
        # bound = 1/sqrt(fan_in) for both weight and bias.
        if key is None:
            key = jax.random.PRNGKey(0)
        kw_key, kb_key = jax.random.split(key)
        fan_in = (in_channels // groups) * self.kernel_size[0] * self.kernel_size[1]
        bound = 1.0 / math.sqrt(fan_in)
        self.weight = jax.random.uniform(
            kw_key,
            (out_channels, in_channels // groups,
             self.kernel_size[0], self.kernel_size[1]),
            dtype=jnp.float32, minval=-bound, maxval=bound)
        self.bias = (jax.random.uniform(kb_key, (out_channels,),
                                        dtype=jnp.float32,
                                        minval=-bound, maxval=bound)
                     if self.is_bias else None)

    def set_perf(self, perf):
        self.perf_stride = _pair(perf)
        self.recompute = True

    def _do_recomputing(self, H, W):
        kh, kw = self.kernel_size
        dh, dw = self.dilation
        ph, pw = self.padding
        sh, sw = self.stride

        self.out_x = (H - (kh - 1) * dh + 2 * ph - 1) // sh + 1
        tmp = 0
        t1 = self.perf_stride[0] + 1
        while tmp <= 1:
            t1 -= 1
            if t1 == 0:
                t1 = 1
                break
            tmp = (H - (kh - 1) * dh + 2 * ph - 1) // (sh * t1) + 1

        self.out_y = (W - (kw - 1) * dw + 2 * pw - 1) // sw + 1
        tmp = 0
        t2 = self.perf_stride[1] + 1
        while tmp <= 1:
            t2 -= 1
            if t2 == 0:
                t2 = 1
                break
            tmp = (W - (kw - 1) * dw + 2 * pw - 1) // (sw * t2) + 1

        self.perf_stride = (t1, t2)
        self._cached_hw = (H, W)
        self.recompute = False

    def forward_nhwc(self, x_nhwc):
        H, W = int(x_nhwc.shape[1]), int(x_nhwc.shape[2])
        if self.hard_limit:
            self.perf_stride = (1, 1)
        if self.recompute or self._cached_hw != (H, W):
            self._do_recomputing(H, W)
        p1, p2 = self.perf_stride

        down = perforated_conv2d_down_nhwc(
            x_nhwc, self.weight, self.bias, self.stride, self.padding,
            self.dilation, (p1, p2), self.compute_dtype, self.out_dtype)

        if (p1, p2) == (1, 1):
            # Matches the module's F.conv2d fast path: no activation, no upsample.
            return down

        if self.activation is not None:
            down = self.activation(down)

        # "Up": nearest-neighbour replication of the computed (perforated) grid
        # back to the full conv output size.  reshape->broadcast->reshape on the
        # small perforated tensor (cheaper than chained gathers).
        # TODO(synk): perfconv.upscale_newUp's exact interpolation mode is not
        # published; nearest replication (consistent with Up.backward's ::p
        # subsampling) is used.
        nb, hh, ww, cc = down.shape
        up = jnp.broadcast_to(down[:, :, None, :, None, :],
                              (nb, hh, p1, ww, p2, cc))
        up = up.reshape(nb, hh * p1, ww * p2, cc)[:, :self.out_x, :self.out_y, :]
        return up

    def __call__(self, x_nchw):
        # PyTorch-style NCHW interface; layout transposes happen once at the
        # module boundary, everything inside runs NHWC / lane-dense Cout.
        y = self.forward_nhwc(jnp.transpose(x_nchw, (0, 2, 3, 1)))
        return jnp.transpose(y, (0, 3, 1, 2))


# ----------------------------------------------------------------------------
# Demo / correctness check
# ----------------------------------------------------------------------------
def _ref_conv(x, w, b, stride, padding, dilation, compute_dtype):
    out = jax.lax.conv_general_dilated(
        x.astype(compute_dtype), w.astype(compute_dtype),
        window_strides=stride,
        padding=[(padding[0], padding[0]), (padding[1], padding[1])],
        rhs_dilation=dilation,
        dimension_numbers=("NCHW", "OIHW", "NCHW"),
        preferred_element_type=jnp.float32)
    if b is not None:
        out = out + b[None, :, None, None].astype(jnp.float32)
    return out


if __name__ == "__main__":
    key = jax.random.PRNGKey(0)
    kx, kmod = jax.random.split(key)
    x = jax.random.normal(kx, (2, 4, 16, 16), dtype=jnp.float32)

    # --- default path (perf_stride=(1,1)) == standard conv2d -----------------
    mod = DownActivUpPallas(4, 8, kernel_size=3, stride=1, padding=1,
                            bias=True, key=kmod)
    out = jax.block_until_ready(mod(x))
    ref = _ref_conv(x, mod.weight, mod.bias, mod.stride, mod.padding,
                    mod.dilation, mod.compute_dtype)
    assert out.shape == ref.shape == (2, 8, 16, 16)
    assert jnp.allclose(out, ref, atol=2e-2, rtol=2e-2)

    # --- strided conv path (stride folded into the kernel) -------------------
    mod_s = DownActivUpPallas(4, 8, kernel_size=3, stride=2, padding=1,
                              bias=True, key=kmod)
    out_s = jax.block_until_ready(mod_s(x))
    ref_s = _ref_conv(x, mod_s.weight, mod_s.bias, mod_s.stride, mod_s.padding,
                      mod_s.dilation, mod_s.compute_dtype)
    assert out_s.shape == ref_s.shape == (2, 8, 8, 8)
    assert jnp.allclose(out_s, ref_s, atol=2e-2, rtol=2e-2)

    # --- perforated path (perf_stride=(2,2)) ---------------------------------
    mod_p = DownActivUpPallas(4, 8, kernel_size=3, stride=1, padding=1,
                              bias=True, perf_stride=(2, 2), key=kmod)
    out_p = jax.block_until_ready(mod_p(x))
    assert out_p.shape == (2, 8, 16, 16)
    # values on the computed (perforated) grid must equal the exact conv there
    assert jnp.allclose(out_p[:, :, ::2, ::2], ref[:, :, ::2, ::2],
                        atol=2e-2, rtol=2e-2)

    # --- dilated + perforated path (review: exercise dh/dw > 1 with SW > 1) --
    mod_d = DownActivUpPallas(4, 8, kernel_size=3, stride=1, padding=2,
                              dilation=2, bias=True, perf_stride=(2, 2), key=kmod)
    out_d = jax.block_until_ready(mod_d(x))
    ref_d = _ref_conv(x, mod_d.weight, mod_d.bias, mod_d.stride, mod_d.padding,
                      mod_d.dilation, mod_d.compute_dtype)
    assert out_d.shape == ref_d.shape == (2, 8, 16, 16)
    assert jnp.allclose(out_d[:, :, ::2, ::2], ref_d[:, :, ::2, ::2],
                        atol=2e-2, rtol=2e-2)

    print("KERNEL_OK")
</pallas_src>

<mosaic_0001>
module attributes {stable_mosaic.version = 11 : i64} {
  func.func @_down_conv_kernel(%arg0: i32, %arg1: i32, %arg2: i32, %arg3: memref<1x18x18x8xbf16, #tpu.memory_space<vmem>>, %arg4: memref<72x128xbf16, #tpu.memory_space<vmem>>, %arg5: memref<1x128xf32, #tpu.memory_space<vmem>>, %arg6: memref<1x16x16x128xf32, #tpu.memory_space<vmem>>) attributes {dimension_semantics = [#tpu.dimension_semantics<parallel>, #tpu.dimension_semantics<parallel>, #tpu.dimension_semantics<parallel>], iteration_bounds = array<i64: 2, 1, 1>, scalar_prefetch = 0 : i64, scratch_operands = 0 : i64, tpu.core_type = #tpu.core_type<tc>, window_params = [{transform_indices = @transform_0, window_bounds = array<i64: 1, 18, 18, 8>}, {transform_indices = @transform_1, window_bounds = array<i64: 72, 128>}, {transform_indices = @transform_2, window_bounds = array<i64: 1, 128>}, {transform_indices = @transform_3, window_bounds = array<i64: 1, 16, 16, 128>}]} {
    %c16_i32 = arith.constant 16 : i32
    %0 = arith.muli %arg2, %c16_i32 : i32
    %cst = arith.constant 0.000000e+00 : f32
    %1 = vector.broadcast %cst : f32 to vector<256x128xf32>
    %c0 = arith.constant 0 : index
    %c0_0 = arith.constant 0 : index
    %2 = vector.load %arg4[%c0, %c0_0] : memref<72x128xbf16, #tpu.memory_space<vmem>>, vector<8x128xbf16>
    %c0_i32 = arith.constant 0 : i32
    %3 = arith.addi %c0_i32, %0 : i32
    %c0_1 = arith.constant 0 : index
    %4 = arith.index_cast %3 : i32 to index
    %c0_2 = arith.constant 0 : index
    %c0_3 = arith.constant 0 : index
    %5 = vector.load %arg3[%c0_1, %4, %c0_2, %c0_3] : memref<1x18x18x8xbf16, #tpu.memory_space<vmem>>, vector<1x16x16x8xbf16>
    %6 = vector.shape_cast %5 : vector<1x16x16x8xbf16> to vector<16x16x8xbf16>
    %7 = vector.shape_cast %6 : vector<16x16x8xbf16> to vector<256x8xbf16>
    %cst_4 = arith.constant dense<0.000000e+00> : vector<256x128xf32>
    %8 = tpu.matmul %7, %2, %cst_4 {dimension_numbers = #tpu.dot_dimension_numbers<[1], [0], [0], [1], [0, 0, 1, 1], [], []>} : vector<256x8xbf16>, vector<8x128xbf16>, vector<256x128xf32> -> vector<256x128xf32>
    %9 = arith.addf %1, %8 : vector<256x128xf32>
    %c8 = arith.constant 8 : index
    %c0_5 = arith.constant 0 : index
    %10 = vector.load %arg4[%c8, %c0_5] : memref<72x128xbf16, #tpu.memory_space<vmem>>, vector<8x128xbf16>
    %c0_i32_6 = arith.constant 0 : i32
    %11 = arith.addi %c0_i32_6, %0 : i32
    %c0_7 = arith.constant 0 : index
    %12 = arith.index_cast %11 : i32 to index
    %c1 = arith.constant 1 : index
    %c0_8 = arith.constant 0 : index
    %13 = vector.load %arg3[%c0_7, %12, %c1, %c0_8] : memref<1x18x18x8xbf16, #tpu.memory_space<vmem>>, vector<1x16x16x8xbf16>
    %14 = vector.shape_cast %13 : vector<1x16x16x8xbf16> to vector<16x16x8xbf16>
    %15 = vector.shape_cast %14 : vector<16x16x8xbf16> to vector<256x8xbf16>
    %cst_9 = arith.constant dense<0.000000e+00> : vector<256x128xf32>
    %16 = tpu.matmul %15, %10, %cst_9 {dimension_numbers = #tpu.dot_dimension_numbers<[1], [0], [0], [1], [0, 0, 1, 1], [], []>} : vector<256x8xbf16>, vector<8x128xbf16>, vector<256x128xf32> -> vector<256x128xf32>
    %17 = arith.addf %9, %16 : vector<256x128xf32>
    %c16 = arith.constant 16 : index
    %c0_10 = arith.constant 0 : index
    %18 = vector.load %arg4[%c16, %c0_10] : memref<72x128xbf16, #tpu.memory_space<vmem>>, vector<8x128xbf16>
    %c0_i32_11 = arith.constant 0 : i32
    %19 = arith.addi %c0_i32_11, %0 : i32
    %c0_12 = arith.constant 0 : index
    %20 = arith.index_cast %19 : i32 to index
    %c2 = arith.constant 2 : index
    %c0_13 = arith.constant 0 : index
    %21 = vector.load %arg3[%c0_12, %20, %c2, %c0_13] : memref<1x18x18x8xbf16, #tpu.memory_space<vmem>>, vector<1x16x16x8xbf16>
    %22 = vector.shape_cast %21 : vector<1x16x16x8xbf16> to vector<16x16x8xbf16>
    %23 = vector.shape_cast %22 : vector<16x16x8xbf16> to vector<256x8xbf16>
    %cst_14 = arith.constant dense<0.000000e+00> : vector<256x128xf32>
    %24 = tpu.matmul %23, %18, %cst_14 {dimension_numbers = #tpu.dot_dimension_numbers<[1], [0], [0], [1], [0, 0, 1, 1], [], []>} : vector<256x8xbf16>, vector<8x128xbf16>, vector<256x128xf32> -> vector<256x128xf32>
    %25 = arith.addf %17, %24 : vector<256x128xf32>
    %c24 = arith.constant 24 : index
    %c0_15 = arith.constant 0 : index
    %26 = vector.load %arg4[%c24, %c0_15] : memref<72x128xbf16, #tpu.memory_space<vmem>>, vector<8x128xbf16>
    %c1_i32 = arith.constant 1 : i32
    %27 = arith.addi %c1_i32, %0 : i32
    %c0_16 = arith.constant 0 : index
    %28 = arith.index_cast %27 : i32 to index
    %c0_17 = arith.constant 0 : index
    %c0_18 = arith.constant 0 : index
    %29 = vector.load %arg3[%c0_16, %28, %c0_17, %c0_18] : memref<1x18x18x8xbf16, #tpu.memory_space<vmem>>, vector<1x16x16x8xbf16>
    %30 = vector.shape_cast %29 : vector<1x16x16x8xbf16> to vector<16x16x8xbf16>
    %31 = vector.shape_cast %30 : vector<16x16x8xbf16> to vector<256x8xbf16>
    %cst_19 = arith.constant dense<0.000000e+00> : vector<256x128xf32>
    %32 = tpu.matmul %31, %26, %cst_19 {dimension_numbers = #tpu.dot_dimension_numbers<[1], [0], [0], [1], [0, 0, 1, 1], [], []>} : vector<256x8xbf16>, vector<8x128xbf16>, vector<256x128xf32> -> vector<256x128xf32>
    %33 = arith.addf %25, %32 : vector<256x128xf32>
    %c32 = arith.constant 32 : index
    %c0_20 = arith.constant 0 : index
    %34 = vector.load %arg4[%c32, %c0_20] : memref<72x128xbf16, #tpu.memory_space<vmem>>, vector<8x128xbf16>
    %c1_i32_21 = arith.constant 1 : i32
    %35 = arith.addi %c1_i32_21, %0 : i32
    %c0_22 = arith.constant 0 : index
    %36 = arith.index_cast %35 : i32 to index
    %c1_23 = arith.constant 1 : index
    %c0_24 = arith.constant 0 : index
    %37 = vector.load %arg3[%c0_22, %36, %c1_23, %c0_24] : memref<1x18x18x8xbf16, #tpu.memory_space<vmem>>, vector<1x16x16x8xbf16>
    %38 = vector.shape_cast %37 : vector<1x16x16x8xbf16> to vector<16x16x8xbf16>
    %39 = vector.shape_cast %38 : vector<16x16x8xbf16> to vector<256x8xbf16>
    %cst_25 = arith.constant dense<0.000000e+00> : vector<256x128xf32>
    %40 = tpu.matmul %39, %34, %cst_25 {dimension_numbers = #tpu.dot_dimension_numbers<[1], [0], [0], [1], [0, 0, 1, 1], [], []>} : vector<256x8xbf16>, vector<8x128xbf16>, vector<256x128xf32> -> vector<256x128xf32>
    %41 = arith.addf %33, %40 : vector<256x128xf32>
    %c40 = arith.constant 40 : index
    %c0_26 = arith.constant 0 : index
    %42 = vector.load %arg4[%c40, %c0_26] : memref<72x128xbf16, #tpu.memory_space<vmem>>, vector<8x128xbf16>
    %c1_i32_27 = arith.constant 1 : i32
    %43 = arith.addi %c1_i32_27, %0 : i32
    %c0_28 = arith.constant 0 : index
    %44 = arith.index_cast %43 : i32 to index
    %c2_29 = arith.constant 2 : index
    %c0_30 = arith.constant 0 : index
    %45 = vector.load %arg3[%c0_28, %44, %c2_29, %c0_30] : memref<1x18x18x8xbf16, #tpu.memory_space<vmem>>, vector<1x16x16x8xbf16>
    %46 = vector.shape_cast %45 : vector<1x16x16x8xbf16> to vector<16x16x8xbf16>
    %47 = vector.shape_cast %46 : vector<16x16x8xbf16> to vector<256x8xbf16>
    %cst_31 = arith.constant dense<0.000000e+00> : vector<256x128xf32>
    %48 = tpu.matmul %47, %42, %cst_31 {dimension_numbers = #tpu.dot_dimension_numbers<[1], [0], [0], [1], [0, 0, 1, 1], [], []>} : vector<256x8xbf16>, vector<8x128xbf16>, vector<256x128xf32> -> vector<256x128xf32>
    %49 = arith.addf %41, %48 : vector<256x128xf32>
    %c48 = arith.constant 48 : index
    %c0_32 = arith.constant 0 : index
    %50 = vector.load %arg4[%c48, %c0_32] : memref<72x128xbf16, #tpu.memory_space<vmem>>, vector<8x128xbf16>
    %c2_i32 = arith.constant 2 : i32
    %51 = arith.addi %c2_i32, %0 : i32
    %c0_33 = arith.constant 0 : index
    %52 = arith.index_cast %51 : i32 to index
    %c0_34 = arith.constant 0 : index
    %c0_35 = arith.constant 0 : index
    %53 = vector.load %arg3[%c0_33, %52, %c0_34, %c0_35] : memref<1x18x18x8xbf16, #tpu.memory_space<vmem>>, vector<1x16x16x8xbf16>
    %54 = vector.shape_cast %53 : vector<1x16x16x8xbf16> to vector<16x16x8xbf16>
    %55 = vector.shape_cast %54 : vector<16x16x8xbf16> to vector<256x8xbf16>
    %cst_36 = arith.constant dense<0.000000e+00> : vector<256x128xf32>
    %56 = tpu.matmul %55, %50, %cst_36 {dimension_numbers = #tpu.dot_dimension_numbers<[1], [0], [0], [1], [0, 0, 1, 1], [], []>} : vector<256x8xbf16>, vector<8x128xbf16>, vector<256x128xf32> -> vector<256x128xf32>
    %57 = arith.addf %49, %56 : vector<256x128xf32>
    %c56 = arith.constant 56 : index
    %c0_37 = arith.constant 0 : index
    %58 = vector.load %arg4[%c56, %c0_37] : memref<72x128xbf16, #tpu.memory_space<vmem>>, vector<8x128xbf16>
    %c2_i32_38 = arith.constant 2 : i32
    %59 = arith.addi %c2_i32_38, %0 : i32
    %c0_39 = arith.constant 0 : index
    %60 = arith.index_cast %59 : i32 to index
    %c1_40 = arith.constant 1 : index
    %c0_41 = arith.constant 0 : index
    %61 = vector.load %arg3[%c0_39, %60, %c1_40, %c0_41] : memref<1x18x18x8xbf16, #tpu.memory_space<vmem>>, vector<1x16x16x8xbf16>
    %62 = vector.shape_cast %61 : vector<1x16x16x8xbf16> to vector<16x16x8xbf16>
    %63 = vector.shape_cast %62 : vector<16x16x8xbf16> to vector<256x8xbf16>
    %cst_42 = arith.constant dense<0.000000e+00> : vector<256x128xf32>
    %64 = tpu.matmul %63, %58, %cst_42 {dimension_numbers = #tpu.dot_dimension_numbers<[1], [0], [0], [1], [0, 0, 1, 1], [], []>} : vector<256x8xbf16>, vector<8x128xbf16>, vector<256x128xf32> -> vector<256x128xf32>
    %65 = arith.addf %57, %64 : vector<256x128xf32>
    %c64 = arith.constant 64 : index
    %c0_43 = arith.constant 0 : index
    %66 = vector.load %arg4[%c64, %c0_43] : memref<72x128xbf16, #tpu.memory_space<vmem>>, vector<8x128xbf16>
    %c2_i32_44 = arith.constant 2 : i32
    %67 = arith.addi %c2_i32_44, %0 : i32
    %c0_45 = arith.constant 0 : index
    %68 = arith.index_cast %67 : i32 to index
    %c2_46 = arith.constant 2 : index
    %c0_47 = arith.constant 0 : index
    %69 = vector.load %arg3[%c0_45, %68, %c2_46, %c0_47] : memref<1x18x18x8xbf16, #tpu.memory_space<vmem>>, vector<1x16x16x8xbf16>
    %70 = vector.shape_cast %69 : vector<1x16x16x8xbf16> to vector<16x16x8xbf16>
    %71 = vector.shape_cast %70 : vector<16x16x8xbf16> to vector<256x8xbf16>
    %cst_48 = arith.constant dense<0.000000e+00> : vector<256x128xf32>
    %72 = tpu.matmul %71, %66, %cst_48 {dimension_numbers = #tpu.dot_dimension_numbers<[1], [0], [0], [1], [0, 0, 1, 1], [], []>} : vector<256x8xbf16>, vector<8x128xbf16>, vector<256x128xf32> -> vector<256x128xf32>
    %73 = arith.addf %65, %72 : vector<256x128xf32>
    %c0_49 = arith.constant 0 : index
    %c0_50 = arith.constant 0 : index
    %74 = vector.load %arg5[%c0_49, %c0_50] : memref<1x128xf32, #tpu.memory_space<vmem>>, vector<1x128xf32>
    %75 = vector.broadcast %74 : vector<1x128xf32> to vector<256x128xf32>
    %76 = arith.addf %73, %75 : vector<256x128xf32>
    %77 = vector.shape_cast %76 : vector<256x128xf32> to vector<16x16x128xf32>
    %c0_51 = arith.constant 0 : index
    %c0_52 = arith.constant 0 : index
    %c0_53 = arith.constant 0 : index
    %c0_54 = arith.constant 0 : index
    %78 = vector.load %arg6[%c0_51, %c0_52, %c0_53, %c0_54] : memref<1x16x16x128xf32, #tpu.memory_space<vmem>>, vector<1x16x16x128xf32>
    %79 = vector.shape_cast %78 : vector<1x16x16x128xf32> to vector<16x16x128xf32>
    %80 = vector.shape_cast %77 : vector<16x16x128xf32> to vector<1x16x16x128xf32>
    tpu.vector_store %arg6[%c0_51, %c0_52, %c0_53, %c0_54], %80 {strides = array<i32>} : memref<1x16x16x128xf32, #tpu.memory_space<vmem>>, vector<1x16x16x128xf32>,
    return
  }
  func.func @transform_0(%arg0: i32, %arg1: i32, %arg2: i32) -> (i32, i32, i32, i32) {
    %c0_i32 = arith.constant 0 : i32
    %c0_i32_0 = arith.constant 0 : i32
    %c0_i32_1 = arith.constant 0 : i32
    %c0_i32_2 = arith.constant 0 : i32
    return %arg0, %c0_i32, %c0_i32_0, %c0_i32_1 : i32, i32, i32, i32
  }
  func.func @transform_1(%arg0: i32, %arg1: i32, %arg2: i32) -> (i32, i32) {
    %c0_i32 = arith.constant 0 : i32
    %c0_i32_0 = arith.constant 0 : i32
    return %c0_i32, %arg1 : i32, i32
  }
  func.func @transform_2(%arg0: i32, %arg1: i32, %arg2: i32) -> (i32, i32) {
    %c0_i32 = arith.constant 0 : i32
    %c0_i32_0 = arith.constant 0 : i32
    return %c0_i32, %arg1 : i32, i32
  }
  func.func @transform_3(%arg0: i32, %arg1: i32, %arg2: i32) -> (i32, i32, i32, i32) {
    %c0_i32 = arith.constant 0 : i32
    %c0_i32_0 = arith.constant 0 : i32
    return %arg0, %arg2, %c0_i32, %arg1 : i32, i32, i32, i32
  }
}

</mosaic_0001>

<llo_original>
// kernel: tpu_custom_call.1
$region0: #{tpu_custom_call.1}
  #allocation0 [shape = 'u32[]', space=smem, size = 0x4, offset = 0x4, fixed_abs, tag = 'smem constant byte address 0x4 - core index']
  #allocation1 [shape = 'u32[72,128]{1,0:T(1,128)}', space=vmem, size = 0x9000, scoped, tag = 'internal scratch']
  %s0 = inlined_call_operand.vmem [shape: bf16[2,18,18,8], index: 0, kind: input, shape index: {}]
  %s1 = inlined_call_operand.vmem [shape: bf16[72,128], index: 1, kind: input, shape index: {}]
  %s2 = inlined_call_operand.vmem [shape: f32[1,128], index: 2, kind: input, shape index: {}]
  %s3 = inlined_call_operand.hbm [shape: f32[2,16,16,128], index: 3, kind: output, shape index: {}]
  %s4 = sld [smem:[#allocation0]]
  $region45: #{tpu_custom_call.1} parent=0
    _
  %s6 = ssub.s32 1, %s4
  %s7 = scalar_select 0, %s6, %s4
  $region1: #{tpu_custom_call.1} parent=0
    #allocation2 [shape = 'u8[262144]{0}', space=vmem, size = 0x40000, scoped, tag = 'output window, operand 0']
    #allocation3 [shape = 's32[2]{0}', space=sflag, size = 0x8, scoped, tag = 'scoped memory for tpu_custom_call.1']
    %8 = vsyncpa [#allocation3], 0
    %s9 = scalar_lea.sflag [#allocation3], 1
    %10 = vsyncpa %s9, 0
    loop: start=0, step=1, limit=4
    $region2: #{tpu_custom_call.1} parent=1 // loop_pre_header
      _
    $region3: #{tpu_custom_call.1} parent=1 // loop_header
      %s12 = sphi 0, %s16
      %p13 = scmp.ge.s32.totalorder %s12, 4
      %s19 = sphi 0, %s38
      %s20 = sphi 0, %s34
      %s21 = sphi 0, %s30
      %s22 = sphi 0, %s19
      %s23 = sphi 0, %s20
      %s24 = sphi 0, %s21
      %s25 = sphi 0, %s22
      %s26 = sphi 0, %s23
      %s27 = sphi 0, %s24
      %s41 = sphi 0, %s43
      %s44 = sphi 0, %s41
      %s45 = sphi 0, %s44
      %s61 = sphi 0, %s45
      %s67 = sphi 0, %s69
      %s70 = sphi 0, %s67
      %s71 = sphi 0, %s70
      %s87 = sphi 0, %s71
      %s93 = sphi 0, %s95
      %s96 = sphi 0, %s93
      %s97 = sphi 0, %s96
      %s113 = sphi 0, %s97
      %s123 = sphi 0, %s125
      %s126 = sphi 0, %s123
      %s127 = sphi 0, %s126
      %s143 = sphi 0, %s127
    $region4: #{tpu_custom_call.1} parent=1 // loop_header_branch
      %15 = sbr.rel (%p13) target = $region8
    $region5: #{tpu_custom_call.1} parent=1 // loop_body
      %s17 = ssub.s32 %s12, 1
      %s18 = ssub.s32 %s12, 2
      %s28 = sadd.s32 1, %s21
      %p29 = scmp.ge.s32.totalorder %s28, 1
      %s30 = scalar_select %p29, 0, %s28
      %s31 = sadd.s32 1, %s20
      %s32 = scalar_select %p29, %s31, %s20
      %p33 = scmp.ge.s32.totalorder %s32, 1
      %s34 = scalar_select %p33, 0, %s32
      %s35 = sadd.s32 1, %s19
      %s36 = scalar_select %p33, %s35, %s19
      %p37 = scmp.ge.s32.totalorder %s36, 2
      %s38 = scalar_select %p37, 0, %s36
      %s39 = ssub.s32 %s19, %s38
      %p40 = scmp.eq.s32.totalorder %s39, 0
      %s42 = sadd.s32 %s41, 1
      %s43 = scalar_select %p40, %s41, %s42
      %p46 = pneg %p40
      %p47 = scmp.eq.s32.totalorder %s12, 1
      %p48 = por %p46, %p47
      %p49 = scmp.ne.s32.totalorder %s41, %s44
      %p50 = scmp.eq.s32.totalorder %s12, 0
      %p51 = por %p49, %p50
      %p52 = scmp.ne.s32.totalorder %s41, %s44
      %p53 = scmp.eq.s32.totalorder %s17, 1
      %p54 = por %p52, %p53
      %p55 = scmp.ne.s32.totalorder %s44, %s45
      %p56 = scmp.eq.s32.totalorder %s17, 0
      %p57 = por %p55, %p56
      %p58 = scmp.ne.s32.totalorder %s44, %s45
      %p59 = scmp.eq.s32.totalorder %s18, 1
      %p60 = por %p58, %p59
      %p62 = scmp.ne.s32.totalorder %s45, %s61
      %p63 = scmp.eq.s32.totalorder %s18, 0
      %p64 = por %p62, %p63
      %s65 = ssub.s32 %s20, %s34
      %p66 = scmp.eq.s32.totalorder %s65, 0
      %s68 = sadd.s32 %s67, 1
      %s69 = scalar_select %p66, %s67, %s68
      %p72 = pneg %p66
      %p73 = scmp.eq.s32.totalorder %s12, 1
      %p74 = por %p72, %p73
      %p75 = scmp.ne.s32.totalorder %s67, %s70
      %p76 = scmp.eq.s32.totalorder %s12, 0
      %p77 = por %p75, %p76
      %p78 = scmp.ne.s32.totalorder %s67, %s70
      %p79 = scmp.eq.s32.totalorder %s17, 1
      %p80 = por %p78, %p79
      %p81 = scmp.ne.s32.totalorder %s70, %s71
      %p82 = scmp.eq.s32.totalorder %s17, 0
      %p83 = por %p81, %p82
      %p84 = scmp.ne.s32.totalorder %s70, %s71
      %p85 = scmp.eq.s32.totalorder %s18, 1
      %p86 = por %p84, %p85
      %p88 = scmp.ne.s32.totalorder %s71, %s87
      %p89 = scmp.eq.s32.totalorder %s18, 0
      %p90 = por %p88, %p89
      %s91 = ssub.s32 %s20, %s34
      %p92 = scmp.eq.s32.totalorder %s91, 0
      %s94 = sadd.s32 %s93, 1
      %s95 = scalar_select %p92, %s93, %s94
      %p98 = pneg %p92
      %p99 = scmp.eq.s32.totalorder %s12, 1
      %p100 = por %p98, %p99
      %p101 = scmp.ne.s32.totalorder %s93, %s96
      %p102 = scmp.eq.s32.totalorder %s12, 0
      %p103 = por %p101, %p102
      %p104 = scmp.ne.s32.totalorder %s93, %s96
      %p105 = scmp.eq.s32.totalorder %s17, 1
      %p106 = por %p104, %p105
      %p107 = scmp.ne.s32.totalorder %s96, %s97
      %p108 = scmp.eq.s32.totalorder %s17, 0
      %p109 = por %p107, %p108
      %p110 = scmp.ne.s32.totalorder %s96, %s97
      %p111 = scmp.eq.s32.totalorder %s18, 1
      %p112 = por %p110, %p111
      %p114 = scmp.ne.s32.totalorder %s97, %s113
      %p115 = scmp.eq.s32.totalorder %s18, 0
      %p116 = por %p114, %p115
      %s117 = ssub.s32 %s19, %s38
      %s118 = ssub.s32 %s21, %s30
      %s119 = sor.u32 %s117, %s118
      %s120 = ssub.s32 %s20, %s34
      %s121 = sor.u32 %s119, %s120
      %p122 = scmp.eq.s32.totalorder %s121, 0
      %s124 = sadd.s32 %s123, 1
      %s125 = scalar_select %p122, %s123, %s124
      %p128 = pneg %p122
      %p129 = scmp.eq.s32.totalorder %s12, 1
      %p130 = por %p128, %p129
      %p131 = scmp.ne.s32.totalorder %s123, %s126
      %p132 = scmp.eq.s32.totalorder %s12, 0
      %p133 = por %p131, %p132
      %p134 = scmp.ne.s32.totalorder %s123, %s126
      %p135 = scmp.eq.s32.totalorder %s17, 1
      %p136 = por %p134, %p135
      %p137 = scmp.ne.s32.totalorder %s126, %s127
      %p138 = scmp.eq.s32.totalorder %s17, 0
      %p139 = por %p137, %p138
      %p140 = scmp.ne.s32.totalorder %s126, %s127
      %p141 = scmp.eq.s32.totalorder %s18, 1
      %p142 = por %p140, %p141
      %p144 = scmp.ne.s32.totalorder %s127, %s143
      %p145 = scmp.eq.s32.totalorder %s18, 0
      %p146 = por %p144, %p145
      %p147 = scmp.le.s32.totalorder 1, %s12
      %p148 = scmp.lt.s32.totalorder %s12, 3
      %p149 = pnand %p147, %p148
      %p150 = pneg %p149
      // Predicated region
      $region9: #{tpu_custom_call.1} parent=5 // pred_check
        _
      $region10: #{tpu_custom_call.1} parent=5 // pred_check_branch
        %152 = sbr.rel (%p149) target = $region12
      $region11: #{tpu_custom_call.1} parent=5 // pred_region
        %s153 = ssub.s32 %s12, 1
        // Predicated region
        $region13: #{tpu_custom_call.1} parent=11 // pred_check
          %p154 = pneg %p83
        $region14: #{tpu_custom_call.1} parent=11 // pred_check_branch
          %156 = sbr.rel (%p154) target = $region16
        $region15: #{tpu_custom_call.1} parent=11 // pred_region
          %p157 = scmp.lt.s32.totalorder %s23, 0
          %s158 = scalar_select %p157, %s23, 0
          %s159 = smul.addr %s158, 4
          %s160 = scalar_lea.vmem %s1, %s159
        $region16: #{tpu_custom_call.1} parent=11 // pred_fallthru
          _
        // Predicated region
        $region17: #{tpu_custom_call.1} parent=11 // pred_check
          %p161 = pneg %p109
        $region18: #{tpu_custom_call.1} parent=11 // pred_check_branch
          %163 = sbr.rel (%p161) target = $region20
        $region19: #{tpu_custom_call.1} parent=11 // pred_region
          %p164 = scmp.lt.s32.totalorder %s23, 0
          %s165 = scalar_select %p164, %s23, 0
          %s166 = scalar_lea.vmem %s2, %s165
        $region20: #{tpu_custom_call.1} parent=11 // pred_fallthru
          _
      $region12: #{tpu_custom_call.1} parent=5 // pred_fallthru
        _
      %p167 = scmp.lt.s32.totalorder %s12, 2
      // Predicated region
      $region21: #{tpu_custom_call.1} parent=5 // pred_check
        %p168 = pneg %p167
      $region22: #{tpu_custom_call.1} parent=5 // pred_check_branch
        %170 = sbr.rel (%p168) target = $region24
      $region23: #{tpu_custom_call.1} parent=5 // pred_region
        // Predicated region
        $region25: #{tpu_custom_call.1} parent=23 // pred_check
          %p171 = pneg %p51
        $region26: #{tpu_custom_call.1} parent=23 // pred_check_branch
          %173 = sbr.rel (%p171) target = $region28
        $region27: #{tpu_custom_call.1} parent=23 // pred_region
          %p174 = scmp.lt.s32.totalorder %s19, 1
          %s175 = scalar_select %p174, %s19, 1
          %s176 = smul.addr %s175, 54
          %s177 = smul.addr %s176, 4
          %s178 = scalar_lea.vmem %s0, %s177
        $region28: #{tpu_custom_call.1} parent=23 // pred_fallthru
          _
      $region24: #{tpu_custom_call.1} parent=5 // pred_fallthru
        _
      %p179 = scmp.le.s32.totalorder 1, %s12
      %p180 = scmp.lt.s32.totalorder %s12, 3
      %p181 = pnand %p179, %p180
      %p182 = pneg %p181
      // Predicated region
      $region29: #{tpu_custom_call.1} parent=5 // pred_check
        _
      $region30: #{tpu_custom_call.1} parent=5 // pred_check_branch
        %184 = sbr.rel (%p181) target = $region32
      $region31: #{tpu_custom_call.1} parent=5 // pred_region
        %s185 = ssub.s32 %s12, 1
        %p186 = scmp.lt.s32.totalorder %s22, 1
        %s187 = scalar_select %p186, %s22, 1
        %s188 = smul.addr %s187, 54
        %s189 = smul.addr %s188, 4
        %s190 = scalar_lea.vmem %s0, %s189
        %p191 = pneg %p57
        %p192 = pneg %p54
        %p193 = scmp.lt.s32.totalorder %s23, 0
        %s194 = scalar_select %p193, %s23, 0
        %s195 = smul.addr %s194, 4
        %s196 = scalar_lea.vmem %s1, %s195
        %p197 = pneg %p83
        %p198 = pneg %p80
        %p199 = scmp.lt.s32.totalorder %s23, 0
        %s200 = scalar_select %p199, %s23, 0
        %s201 = scalar_lea.vmem %s2, %s200
        %p202 = pneg %p109
        %p203 = pneg %p106
        %p204 = pneg %p139
        %p205 = pneg %p136
        %s206 = sand.u32 %s126, 1
        %s207 = scalar_lea.sflag [#allocation3], %s206
        %s208 = sand.u32 %s126, 1
        %s209 = smul.addr %s208, 256
        %s210 = scalar_lea.vmem [#allocation2], %s209
        %p211 = scmp.lt.s32.totalorder %s22, 1
        %s212 = scalar_select %p211, %s22, 1
        %s213 = smul.addr %s212, 54
        %s214 = smul.addr %s213, 4
        %s215 = scalar_lea.vmem %s0, %s214
        %p216 = scmp.lt.s32.totalorder %s23, 0
        %s217 = scalar_select %p216, %s23, 0
        %s218 = smul.addr %s217, 4
        %s219 = scalar_lea.vmem %s1, %s218
        %p220 = scmp.lt.s32.totalorder %s23, 0
        %s221 = scalar_select %p220, %s23, 0
        %s222 = scalar_lea.vmem %s2, %s221
        %s223 = smul.u32 16, %s24
        %s225 = smul.u32 %s24, 16
        %v226 = vld [vmem:[%s219] sm:$0xf]
        %s227 = smul.u32 %s225, 3
        %s228 = smul.addr %s227, 4
        %s229 = scalar_lea.vmem %s215, %s228
        %v230 = vld [vmem:[%s229] sm:$0xf]
        %v231 = vld [vmem:[%s229 + $0x4] sm:$0xf]
        %v232 = vld [vmem:[%s229 + $0xc] sm:$0xf]
        %v233 = vld [vmem:[%s229 + $0x10] sm:$0xf]
        %v234 = vld [vmem:[%s229 + $0x18] sm:$0xf]
        %v235 = vld [vmem:[%s229 + $0x1c] sm:$0xf]
        %v236 = vld [vmem:[%s229 + $0x24] sm:$0xf]
        %v237 = vld [vmem:[%s229 + $0x28] sm:$0xf]
        %v238 = vld [vmem:[%s229 + $0x30] sm:$0xf]
        %v239 = vld [vmem:[%s229 + $0x34] sm:$0xf]
        %v240 = vld [vmem:[%s229 + $0x3c] sm:$0xf]
        %v241 = vld [vmem:[%s229 + $0x40] sm:$0xf]
        %v242 = vld [vmem:[%s229 + $0x48] sm:$0xf]
        %v243 = vld [vmem:[%s229 + $0x4c] sm:$0xf]
        %v244 = vld [vmem:[%s229 + $0x54] sm:$0xf]
        %v245 = vld [vmem:[%s229 + $0x58] sm:$0xf]
        %v246 = vld [vmem:[%s229 + $0x60] sm:$0xf]
        %v247 = vld [vmem:[%s229 + $0x64] sm:$0xf]
        %v248 = vld [vmem:[%s229 + $0x6c] sm:$0xf]
        %v249 = vld [vmem:[%s229 + $0x70] sm:$0xf]
        %v250 = vld [vmem:[%s229 + $0x78] sm:$0xf]
        %v251 = vld [vmem:[%s229 + $0x7c] sm:$0xf]
        %v252 = vld [vmem:[%s229 + $0x84] sm:$0xf]
        %v253 = vld [vmem:[%s229 + $0x88] sm:$0xf]
        %v254 = vld [vmem:[%s229 + $0x90] sm:$0xf]
        %v255 = vld [vmem:[%s229 + $0x94] sm:$0xf]
        %v256 = vld [vmem:[%s229 + $0x9c] sm:$0xf]
        %v257 = vld [vmem:[%s229 + $0xa0] sm:$0xf]
        %v258 = vld [vmem:[%s229 + $0xa8] sm:$0xf]
        %v259 = vld [vmem:[%s229 + $0xac] sm:$0xf]
        %v260 = vld [vmem:[%s229 + $0xb4] sm:$0xf]
        %v261 = vld [vmem:[%s229 + $0xb8] sm:$0xf]
        %v262 = vld [vmem:[%s219 + $0x4] sm:$0xf]
        %v263 = vld [vmem:[%s229 + $0x8] sm:$0x1]
        %v264 = vld [vmem:[%s229 + $0x14] sm:$0x1]
        %v265 = vld [vmem:[%s229 + $0x20] sm:$0x1]
        %v266 = vld [vmem:[%s229 + $0x2c] sm:$0x1]
        %v267 = vld [vmem:[%s229 + $0x38] sm:$0x1]
        %v268 = vld [vmem:[%s229 + $0x44] sm:$0x1]
        %v269 = vld [vmem:[%s229 + $0x50] sm:$0x1]
        %v270 = vld [vmem:[%s229 + $0x5c] sm:$0x1]
        %v271 = vld [vmem:[%s229 + $0x68] sm:$0x1]
        %v272 = vld [vmem:[%s229 + $0x74] sm:$0x1]
        %v273 = vld [vmem:[%s229 + $0x80] sm:$0x1]
        %v274 = vld [vmem:[%s229 + $0x8c] sm:$0x1]
        %v275 = vld [vmem:[%s229 + $0x98] sm:$0x1]
        %v276 = vld [vmem:[%s229 + $0xa4] sm:$0x1]
        %v277 = vld [vmem:[%s229 + $0xb0] sm:$0x1]
        %v278 = vld [vmem:[%s229 + $0xbc] sm:$0x1]
        %vm279 = vsmask.f32 3328
        %vm280 = vsmask.f32 7440
        %vm281 = vmor %vm279, %vm280
        %v283 = vshrl.u32 %v230, 16
        %v285 = vrot.slane %v283, 4
        %v286 = vshll.u32 %v230, 16
        %v288 = vrot.slane %v286, 5
        %v289 = vor.u32 %v285, %v288
        %v290 = vrot.slane %v289, 4
        %v292 = vshll.u32 %v231, 16
        %v294 = vrot.slane %v292, 5
        %v295 = vsel %vm281, %v290, %v294
        %v296 = vshrl.u32 %v231, 16
        %v298 = vrot.slane %v296, 4
        %v299 = vor.u32 %v298, %v294
        %v300 = vrot.slane %v299, 4
        %v302 = vshll.u32 %v263, 16
        %v304 = vrot.slane %v302, 5
        %v305 = vsel %vm281, %v300, %v304
        %v307 = vshrl.u32 %v232, 16
        %v309 = vrot.slane %v307, 4
        %v310 = vshll.u32 %v232, 16
        %v312 = vrot.slane %v310, 5
        %v313 = vor.u32 %v309, %v312
        %v314 = vrot.slane %v313, 4
        %v316 = vshll.u32 %v233, 16
        %v318 = vrot.slane %v316, 5
        %v319 = vsel %vm281, %v314, %v318
        %v320 = vshrl.u32 %v233, 16
        %v322 = vrot.slane %v320, 4
        %v323 = vor.u32 %v322, %v318
        %v324 = vrot.slane %v323, 4
        %v326 = vshll.u32 %v264, 16
        %v328 = vrot.slane %v326, 5
        %v329 = vsel %vm281, %v324, %v328
        %v331 = vshrl.u32 %v234, 16
        %v333 = vrot.slane %v331, 4
        %v334 = vshll.u32 %v234, 16
        %v336 = vrot.slane %v334, 5
        %v337 = vor.u32 %v333, %v336
        %v338 = vrot.slane %v337, 4
        %v340 = vshll.u32 %v235, 16
        %v342 = vrot.slane %v340, 5
        %v343 = vsel %vm281, %v338, %v342
        %v344 = vshrl.u32 %v235, 16
        %v346 = vrot.slane %v344, 4
        %v347 = vor.u32 %v346, %v342
        %v348 = vrot.slane %v347, 4
        %v350 = vshll.u32 %v265, 16
        %v352 = vrot.slane %v350, 5
        %v353 = vsel %vm281, %v348, %v352
        %v355 = vshrl.u32 %v236, 16
        %v357 = vrot.slane %v355, 4
        %v358 = vshll.u32 %v236, 16
        %v360 = vrot.slane %v358, 5
        %v361 = vor.u32 %v357, %v360
        %v362 = vrot.slane %v361, 4
        %v364 = vshll.u32 %v237, 16
        %v366 = vrot.slane %v364, 5
        %v367 = vsel %vm281, %v362, %v366
        %v368 = vshrl.u32 %v237, 16
        %v370 = vrot.slane %v368, 4
        %v371 = vor.u32 %v370, %v366
        %v372 = vrot.slane %v371, 4
        %v374 = vshll.u32 %v266, 16
        %v376 = vrot.slane %v374, 5
        %v377 = vsel %vm281, %v372, %v376
        %v379 = vshrl.u32 %v238, 16
        %v381 = vrot.slane %v379, 4
        %v382 = vshll.u32 %v238, 16
        %v384 = vrot.slane %v382, 5
        %v385 = vor.u32 %v381, %v384
        %v386 = vrot.slane %v385, 4
        %v388 = vshll.u32 %v239, 16
        %v390 = vrot.slane %v388, 5
        %v391 = vsel %vm281, %v386, %v390
        %v392 = vshrl.u32 %v239, 16
        %v394 = vrot.slane %v392, 4
        %v395 = vor.u32 %v394, %v390
        %v396 = vrot.slane %v395, 4
        %v398 = vshll.u32 %v267, 16
        %v400 = vrot.slane %v398, 5
        %v401 = vsel %vm281, %v396, %v400
        %v403 = vshrl.u32 %v240, 16
        %v405 = vrot.slane %v403, 4
        %v406 = vshll.u32 %v240, 16
        %v408 = vrot.slane %v406, 5
        %v409 = vor.u32 %v405, %v408
        %v410 = vrot.slane %v409, 4
        %v412 = vshll.u32 %v241, 16
        %v414 = vrot.slane %v412, 5
        %v415 = vsel %vm281, %v410, %v414
        %v416 = vshrl.u32 %v241, 16
        %v418 = vrot.slane %v416, 4
        %v419 = vor.u32 %v418, %v414
        %v420 = vrot.slane %v419, 4
        %v422 = vshll.u32 %v268, 16
        %v424 = vrot.slane %v422, 5
        %v425 = vsel %vm281, %v420, %v424
        %v427 = vshrl.u32 %v242, 16
        %v429 = vrot.slane %v427, 4
        %v430 = vshll.u32 %v242, 16
        %v432 = vrot.slane %v430, 5
        %v433 = vor.u32 %v429, %v432
        %v434 = vrot.slane %v433, 4
        %v436 = vshll.u32 %v243, 16
        %v438 = vrot.slane %v436, 5
        %v439 = vsel %vm281, %v434, %v438
        %v440 = vshrl.u32 %v243, 16
        %v442 = vrot.slane %v440, 4
        %v443 = vor.u32 %v442, %v438
        %v444 = vrot.slane %v443, 4
        %v446 = vshll.u32 %v269, 16
        %v448 = vrot.slane %v446, 5
        %v449 = vsel %vm281, %v444, %v448
        %v451 = vshrl.u32 %v244, 16
        %v453 = vrot.slane %v451, 4
        %v454 = vshll.u32 %v244, 16
        %v456 = vrot.slane %v454, 5
        %v457 = vor.u32 %v453, %v456
        %v458 = vrot.slane %v457, 4
        %v460 = vshll.u32 %v245, 16
        %v462 = vrot.slane %v460, 5
        %v463 = vsel %vm281, %v458, %v462
        %v464 = vshrl.u32 %v245, 16
        %v466 = vrot.slane %v464, 4
        %v467 = vor.u32 %v466, %v462
        %v468 = vrot.slane %v467, 4
        %v470 = vshll.u32 %v270, 16
        %v472 = vrot.slane %v470, 5
        %v473 = vsel %vm281, %v468, %v472
        %v475 = vshrl.u32 %v246, 16
        %v477 = vrot.slane %v475, 4
        %v478 = vshll.u32 %v246, 16
        %v480 = vrot.slane %v478, 5
        %v481 = vor.u32 %v477, %v480
        %v482 = vrot.slane %v481, 4
        %v484 = vshll.u32 %v247, 16
        %v486 = vrot.slane %v484, 5
        %v487 = vsel %vm281, %v482, %v486
        %v488 = vshrl.u32 %v247, 16
        %v490 = vrot.slane %v488, 4
        %v491 = vor.u32 %v490, %v486
        %v492 = vrot.slane %v491, 4
        %v494 = vshll.u32 %v271, 16
        %v496 = vrot.slane %v494, 5
        %v497 = vsel %vm281, %v492, %v496
        %v499 = vshrl.u32 %v248, 16
        %v501 = vrot.slane %v499, 4
        %v502 = vshll.u32 %v248, 16
        %v504 = vrot.slane %v502, 5
        %v505 = vor.u32 %v501, %v504
        %v506 = vrot.slane %v505, 4
        %v508 = vshll.u32 %v249, 16
        %v510 = vrot.slane %v508, 5
        %v511 = vsel %vm281, %v506, %v510
        %v512 = vshrl.u32 %v249, 16
        %v514 = vrot.slane %v512, 4
        %v515 = vor.u32 %v514, %v510
        %v516 = vrot.slane %v515, 4
        %v518 = vshll.u32 %v272, 16
        %v520 = vrot.slane %v518, 5
        %v521 = vsel %vm281, %v516, %v520
        %v523 = vshrl.u32 %v250, 16
        %v525 = vrot.slane %v523, 4
        %v526 = vshll.u32 %v250, 16
        %v528 = vrot.slane %v526, 5
        %v529 = vor.u32 %v525, %v528
        %v530 = vrot.slane %v529, 4
        %v532 = vshll.u32 %v251, 16
        %v534 = vrot.slane %v532, 5
        %v535 = vsel %vm281, %v530, %v534
        %v536 = vshrl.u32 %v251, 16
        %v538 = vrot.slane %v536, 4
        %v539 = vor.u32 %v538, %v534
        %v540 = vrot.slane %v539, 4
        %v542 = vshll.u32 %v273, 16
        %v544 = vrot.slane %v542, 5
        %v545 = vsel %vm281, %v540, %v544
        %v547 = vshrl.u32 %v252, 16
        %v549 = vrot.slane %v547, 4
        %v550 = vshll.u32 %v252, 16
        %v552 = vrot.slane %v550, 5
        %v553 = vor.u32 %v549, %v552
        %v554 = vrot.slane %v553, 4
        %v556 = vshll.u32 %v253, 16
        %v558 = vrot.slane %v556, 5
        %v559 = vsel %vm281, %v554, %v558
        %v560 = vshrl.u32 %v253, 16
        %v562 = vrot.slane %v560, 4
        %v563 = vor.u32 %v562, %v558
        %v564 = vrot.slane %v563, 4
        %v566 = vshll.u32 %v274, 16
        %v568 = vrot.slane %v566, 5
        %v569 = vsel %vm281, %v564, %v568
        %v571 = vshrl.u32 %v254, 16
        %v573 = vrot.slane %v571, 4
        %v574 = vshll.u32 %v254, 16
        %v576 = vrot.slane %v574, 5
        %v577 = vor.u32 %v573, %v576
        %v578 = vrot.slane %v577, 4
        %v580 = vshll.u32 %v255, 16
        %v582 = vrot.slane %v580, 5
        %v583 = vsel %vm281, %v578, %v582
        %v584 = vshrl.u32 %v255, 16
        %v586 = vrot.slane %v584, 4
        %v587 = vor.u32 %v586, %v582
        %v588 = vrot.slane %v587, 4
        %v590 = vshll.u32 %v275, 16
        %v592 = vrot.slane %v590, 5
        %v593 = vsel %vm281, %v588, %v592
        %v595 = vshrl.u32 %v256, 16
        %v597 = vrot.slane %v595, 4
        %v598 = vshll.u32 %v256, 16
        %v600 = vrot.slane %v598, 5
        %v601 = vor.u32 %v597, %v600
        %v602 = vrot.slane %v601, 4
        %v604 = vshll.u32 %v257, 16
        %v606 = vrot.slane %v604, 5
        %v607 = vsel %vm281, %v602, %v606
        %v608 = vshrl.u32 %v257, 16
        %v610 = vrot.slane %v608, 4
        %v611 = vor.u32 %v610, %v606
        %v612 = vrot.slane %v611, 4
        %v614 = vshll.u32 %v276, 16
        %v616 = vrot.slane %v614, 5
        %v617 = vsel %vm281, %v612, %v616
        %v619 = vshrl.u32 %v258, 16
        %v621 = vrot.slane %v619, 4
        %v622 = vshll.u32 %v258, 16
        %v624 = vrot.slane %v622, 5
        %v625 = vor.u32 %v621, %v624
        %v626 = vrot.slane %v625, 4
        %v628 = vshll.u32 %v259, 16
        %v630 = vrot.slane %v628, 5
        %v631 = vsel %vm281, %v626, %v630
        %v632 = vshrl.u32 %v259, 16
        %v634 = vrot.slane %v632, 4
        %v635 = vor.u32 %v634, %v630
        %v636 = vrot.slane %v635, 4
        %v638 = vshll.u32 %v277, 16
        %v640 = vrot.slane %v638, 5
        %v641 = vsel %vm281, %v636, %v640
        %v643 = vshrl.u32 %v260, 16
        %v645 = vrot.slane %v643, 4
        %v646 = vshll.u32 %v260, 16
        %v648 = vrot.slane %v646, 5
        %v649 = vor.u32 %v645, %v648
        %v650 = vrot.slane %v649, 4
        %v652 = vshll.u32 %v261, 16
        %v654 = vrot.slane %v652, 5
        %v655 = vsel %vm281, %v650, %v654
        %v656 = vshrl.u32 %v261, 16
        %v658 = vrot.slane %v656, 4
        %v659 = vor.u32 %v658, %v654
        %v660 = vrot.slane %v659, 4
        %v662 = vshll.u32 %v278, 16
        %v664 = vrot.slane %v662, 5
        %v665 = vsel %vm281, %v660, %v664
        %v666 = vunpack.c.l.b16 %v295
        %v667 = vunpack.c.l.b16 %v305
        %v668 = vunpack.c.l.b16 %v319
        %v669 = vunpack.c.l.b16 %v329
        %v670 = vunpack.c.l.b16 %v343
        %v671 = vunpack.c.l.b16 %v353
        %v672 = vunpack.c.l.b16 %v367
        %v673 = vunpack.c.l.b16 %v377
        %v674 = vunpack.c.l.b16 %v391
        %v675 = vunpack.c.l.b16 %v401
        %v676 = vunpack.c.l.b16 %v415
        %v677 = vunpack.c.l.b16 %v425
        %v678 = vunpack.c.l.b16 %v439
        %v679 = vunpack.c.l.b16 %v449
        %v680 = vunpack.c.l.b16 %v463
        %v681 = vunpack.c.l.b16 %v473
        %v682 = vunpack.c.l.b16 %v487
        %v683 = vunpack.c.l.b16 %v497
        %v684 = vunpack.c.l.b16 %v511
        %v685 = vunpack.c.l.b16 %v521
        %v686 = vunpack.c.l.b16 %v535
        %v687 = vunpack.c.l.b16 %v545
        %v688 = vunpack.c.l.b16 %v559
        %v689 = vunpack.c.l.b16 %v569
        %v690 = vunpack.c.l.b16 %v583
        %v691 = vunpack.c.l.b16 %v593
        %v692 = vunpack.c.l.b16 %v607
        %v693 = vunpack.c.l.b16 %v617
        %v694 = vunpack.c.l.b16 %v631
        %v695 = vunpack.c.l.b16 %v641
        %v696 = vunpack.c.l.b16 %v655
        %v697 = vunpack.c.l.b16 %v665
        %v698 = vpack.c.b16 %v667, %v666
        %v699 = vpack.c.b16 %v669, %v668
        %v700 = vpack.c.b16 %v671, %v670
        %v701 = vpack.c.b16 %v673, %v672
        %v702 = vpack.c.b16 %v675, %v674
        %v703 = vpack.c.b16 %v677, %v676
        %v704 = vpack.c.b16 %v679, %v678
        %v705 = vpack.c.b16 %v681, %v680
        %v706 = vpack.c.b16 %v683, %v682
        %v707 = vpack.c.b16 %v685, %v684
        %v708 = vpack.c.b16 %v687, %v686
        %v709 = vpack.c.b16 %v689, %v688
        %v710 = vpack.c.b16 %v691, %v690
        %v711 = vpack.c.b16 %v693, %v692
        %v712 = vpack.c.b16 %v695, %v694
        %v713 = vpack.c.b16 %v697, %v696
        %vm714 = vcmask 64512
        %v716 = vsel %vm714, %v698, 0
        %v719 = vsel %vm714, %v699, 0
        %v722 = vsel %vm714, %v700, 0
        %v725 = vsel %vm714, %v701, 0
        %v728 = vsel %vm714, %v702, 0
        %v731 = vsel %vm714, %v703, 0
        %v734 = vsel %vm714, %v704, 0
        %v737 = vsel %vm714, %v705, 0
        %v740 = vsel %vm714, %v706, 0
        %v743 = vsel %vm714, %v707, 0
        %v746 = vsel %vm714, %v708, 0
        %v749 = vsel %vm714, %v709, 0
        %v752 = vsel %vm714, %v710, 0
        %v755 = vsel %vm714, %v711, 0
        %v758 = vsel %vm714, %v712, 0
        %v761 = vsel %vm714, %v713, 0
        %vm763 = vcmask 1043456
        %v765 = vsel %vm763, %v262, 0
        %767 = vmatpush.bf16.msra.mxu0 0
        %768 = vmatpush.bf16.msra.mxu0 0
        %769 = vmatpush.bf16.msra.mxu0 0
        %770 = vmatpush.bf16.msra.mxu0 0
        %771 = vmatpush.bf16.msra.mxu0 0
        %772 = vmatpush.bf16.msra.mxu0 0
        %773 = vmatpush.bf16.msra.mxu0 0
        %774 = vmatpush.bf16.msra.mxu0 %v765
        %775 = vmatmul.bf16.gmra.mxu0 %v716
        %v776 = vpop.f32.mrf.mxu0
        %v777 = vadd.f32 0.0, %v776
        %v778 = vpop.f32.mrf.mxu0
        %v779 = vadd.f32 0.0, %v778
        %780 = vmatmul.bf16.gmra.mxu0 %v719
        %v781 = vpop.f32.mrf.mxu0
        %v782 = vadd.f32 0.0, %v781
        %v783 = vpop.f32.mrf.mxu0
        %v784 = vadd.f32 0.0, %v783
        %785 = vmatmul.bf16.gmra.mxu0 %v722
        %v786 = vpop.f32.mrf.mxu0
        %v787 = vadd.f32 0.0, %v786
        %v788 = vpop.f32.mrf.mxu0
        %v789 = vadd.f32 0.0, %v788
        %790 = vmatmul.bf16.gmra.mxu0 %v725
        %v791 = vpop.f32.mrf.mxu0
        %v792 = vadd.f32 0.0, %v791
        %v793 = vpop.f32.mrf.mxu0
        %v794 = vadd.f32 0.0, %v793
        %795 = vmatmul.bf16.gmra.mxu0 %v728
        %v796 = vpop.f32.mrf.mxu0
        %v797 = vadd.f32 0.0, %v796
        %v798 = vpop.f32.mrf.mxu0
        %v799 = vadd.f32 0.0, %v798
        %800 = vmatmul.bf16.gmra.mxu0 %v731
        %v801 = vpop.f32.mrf.mxu0
        %v802 = vadd.f32 0.0, %v801
        %v803 = vpop.f32.mrf.mxu0
        %v804 = vadd.f32 0.0, %v803
        %805 = vmatmul.bf16.gmra.mxu0 %v734
        %v806 = vpop.f32.mrf.mxu0
        %v807 = vadd.f32 0.0, %v806
        %v808 = vpop.f32.mrf.mxu0
        %v809 = vadd.f32 0.0, %v808
        %810 = vmatmul.bf16.gmra.mxu0 %v737
        %v811 = vpop.f32.mrf.mxu0
        %v812 = vadd.f32 0.0, %v811
        %v813 = vpop.f32.mrf.mxu0
        %v814 = vadd.f32 0.0, %v813
        %815 = vmatmul.bf16.gmra.mxu0 %v740
        %v816 = vpop.f32.mrf.mxu0
        %v817 = vadd.f32 0.0, %v816
        %v818 = vpop.f32.mrf.mxu0
        %v819 = vadd.f32 0.0, %v818
        %820 = vmatmul.bf16.gmra.mxu0 %v743
        %v821 = vpop.f32.mrf.mxu0
        %v822 = vadd.f32 0.0, %v821
        %v823 = vpop.f32.mrf.mxu0
        %v824 = vadd.f32 0.0, %v823
        %825 = vmatmul.bf16.gmra.mxu0 %v746
        %v826 = vpop.f32.mrf.mxu0
        %v827 = vadd.f32 0.0, %v826
        %v828 = vpop.f32.mrf.mxu0
        %v829 = vadd.f32 0.0, %v828
        %830 = vmatmul.bf16.gmra.mxu0 %v749
        %v831 = vpop.f32.mrf.mxu0
        %v832 = vadd.f32 0.0, %v831
        %v833 = vpop.f32.mrf.mxu0
        %v834 = vadd.f32 0.0, %v833
        %835 = vmatmul.bf16.gmra.mxu0 %v752
        %v836 = vpop.f32.mrf.mxu0
        %v837 = vadd.f32 0.0, %v836
        %v838 = vpop.f32.mrf.mxu0
        %v839 = vadd.f32 0.0, %v838
        %840 = vmatmul.bf16.gmra.mxu0 %v755
        %v841 = vpop.f32.mrf.mxu0
        %v842 = vadd.f32 0.0, %v841
        %v843 = vpop.f32.mrf.mxu0
        %v844 = vadd.f32 0.0, %v843
        %845 = vmatmul.bf16.gmra.mxu0 %v758
        %v846 = vpop.f32.mrf.mxu0
        %v847 = vadd.f32 0.0, %v846
        %v848 = vpop.f32.mrf.mxu0
        %v849 = vadd.f32 0.0, %v848
        %850 = vmatmul.bf16.gmra.mxu0 %v761
        %v851 = vpop.f32.mrf.mxu0
        %v852 = vadd.f32 0.0, %v851
        %v853 = vpop.f32.mrf.mxu0
        %v854 = vadd.f32 0.0, %v853
        %855 = vdwg.mxu0
        %v888 = vunpack.c.l.b16 %v230
        %v889 = vunpack.c.l.b16 %v231
        %v890 = vunpack.c.l.b16 %v232
        %v891 = vunpack.c.l.b16 %v233
        %v892 = vunpack.c.l.b16 %v234
        %v893 = vunpack.c.l.b16 %v235
        %v894 = vunpack.c.l.b16 %v236
        %v895 = vunpack.c.l.b16 %v237
        %v896 = vunpack.c.l.b16 %v238
        %v897 = vunpack.c.l.b16 %v239
        %v898 = vunpack.c.l.b16 %v240
        %v899 = vunpack.c.l.b16 %v241
        %v900 = vunpack.c.l.b16 %v242
        %v901 = vunpack.c.l.b16 %v243
        %v902 = vunpack.c.l.b16 %v244
        %v903 = vunpack.c.l.b16 %v245
        %v904 = vunpack.c.l.b16 %v246
        %v905 = vunpack.c.l.b16 %v247
        %v906 = vunpack.c.l.b16 %v248
        %v907 = vunpack.c.l.b16 %v249
        %v908 = vunpack.c.l.b16 %v250
        %v909 = vunpack.c.l.b16 %v251
        %v910 = vunpack.c.l.b16 %v252
        %v911 = vunpack.c.l.b16 %v253
        %v912 = vunpack.c.l.b16 %v254
        %v913 = vunpack.c.l.b16 %v255
        %v914 = vunpack.c.l.b16 %v256
        %v915 = vunpack.c.l.b16 %v257
        %v916 = vunpack.c.l.b16 %v258
        %v917 = vunpack.c.l.b16 %v259
        %v918 = vunpack.c.l.b16 %v260
        %v919 = vunpack.c.l.b16 %v261
        %v920 = vpack.c.b16 %v889, %v888
        %v921 = vpack.c.b16 %v891, %v890
        %v922 = vpack.c.b16 %v893, %v892
        %v923 = vpack.c.b16 %v895, %v894
        %v924 = vpack.c.b16 %v897, %v896
        %v925 = vpack.c.b16 %v899, %v898
        %v926 = vpack.c.b16 %v901, %v900
        %v927 = vpack.c.b16 %v903, %v902
        %v928 = vpack.c.b16 %v905, %v904
        %v929 = vpack.c.b16 %v907, %v906
        %v930 = vpack.c.b16 %v909, %v908
        %v931 = vpack.c.b16 %v911, %v910
        %v932 = vpack.c.b16 %v913, %v912
        %v933 = vpack.c.b16 %v915, %v914
        %v934 = vpack.c.b16 %v917, %v916
        %v935 = vpack.c.b16 %v919, %v918
        %v937 = vsel %vm714, %v920, 0
        %v940 = vsel %vm714, %v921, 0
        %v943 = vsel %vm714, %v922, 0
        %v946 = vsel %vm714, %v923, 0
        %v949 = vsel %vm714, %v924, 0
        %v952 = vsel %vm714, %v925, 0
        %v955 = vsel %vm714, %v926, 0
        %v958 = vsel %vm714, %v927, 0
        %v961 = vsel %vm714, %v928, 0
        %v964 = vsel %vm714, %v929, 0
        %v967 = vsel %vm714, %v930, 0
        %v970 = vsel %vm714, %v931, 0
        %v973 = vsel %vm714, %v932, 0
        %v976 = vsel %vm714, %v933, 0
        %v979 = vsel %vm714, %v934, 0
        %v982 = vsel %vm714, %v935, 0
        %v985 = vsel %vm763, %v226, 0
        %987 = vmatpush.bf16.msra.mxu0 0
        %988 = vmatpush.bf16.msra.mxu0 0
        %989 = vmatpush.bf16.msra.mxu0 0
        %990 = vmatpush.bf16.msra.mxu0 0
        %991 = vmatpush.bf16.msra.mxu0 0
        %992 = vmatpush.bf16.msra.mxu0 0
        %993 = vmatpush.bf16.msra.mxu0 0
        %994 = vmatpush.bf16.msra.mxu0 %v985
        %995 = vmatmul.bf16.gmra.mxu0 %v937
        %v996 = vpop.f32.mrf.mxu0
        %v997 = vadd.f32 %v777, %v996
        %v998 = vpop.f32.mrf.mxu0
        %v999 = vadd.f32 %v779, %v998
        %1000 = vmatmul.bf16.gmra.mxu0 %v940
        %v1001 = vpop.f32.mrf.mxu0
        %v1002 = vadd.f32 %v782, %v1001
        %v1003 = vpop.f32.mrf.mxu0
        %v1004 = vadd.f32 %v784, %v1003
        %1005 = vmatmul.bf16.gmra.mxu0 %v943
        %v1006 = vpop.f32.mrf.mxu0
        %v1007 = vadd.f32 %v787, %v1006
        %v1008 = vpop.f32.mrf.mxu0
        %v1009 = vadd.f32 %v789, %v1008
        %1010 = vmatmul.bf16.gmra.mxu0 %v946
        %v1011 = vpop.f32.mrf.mxu0
        %v1012 = vadd.f32 %v792, %v1011
        %v1013 = vpop.f32.mrf.mxu0
        %v1014 = vadd.f32 %v794, %v1013
        %1015 = vmatmul.bf16.gmra.mxu0 %v949
        %v1016 = vpop.f32.mrf.mxu0
        %v1017 = vadd.f32 %v797, %v1016
        %v1018 = vpop.f32.mrf.mxu0
        %v1019 = vadd.f32 %v799, %v1018
        %1020 = vmatmul.bf16.gmra.mxu0 %v952
        %v1021 = vpop.f32.mrf.mxu0
        %v1022 = vadd.f32 %v802, %v1021
        %v1023 = vpop.f32.mrf.mxu0
        %v1024 = vadd.f32 %v804, %v1023
        %1025 = vmatmul.bf16.gmra.mxu0 %v955
        %v1026 = vpop.f32.mrf.mxu0
        %v1027 = vadd.f32 %v807, %v1026
        %v1028 = vpop.f32.mrf.mxu0
        %v1029 = vadd.f32 %v809, %v1028
        %1030 = vmatmul.bf16.gmra.mxu0 %v958
        %v1031 = vpop.f32.mrf.mxu0
        %v1032 = vadd.f32 %v812, %v1031
        %v1033 = vpop.f32.mrf.mxu0
        %v1034 = vadd.f32 %v814, %v1033
        %1035 = vmatmul.bf16.gmra.mxu0 %v961
        %v1036 = vpop.f32.mrf.mxu0
        %v1037 = vadd.f32 %v817, %v1036
        %v1038 = vpop.f32.mrf.mxu0
        %v1039 = vadd.f32 %v819, %v1038
        %1040 = vmatmul.bf16.gmra.mxu0 %v964
        %v1041 = vpop.f32.mrf.mxu0
        %v1042 = vadd.f32 %v822, %v1041
        %v1043 = vpop.f32.mrf.mxu0
        %v1044 = vadd.f32 %v824, %v1043
        %1045 = vmatmul.bf16.gmra.mxu0 %v967
        %v1046 = vpop.f32.mrf.mxu0
        %v1047 = vadd.f32 %v827, %v1046
        %v1048 = vpop.f32.mrf.mxu0
        %v1049 = vadd.f32 %v829, %v1048
        %1050 = vmatmul.bf16.gmra.mxu0 %v970
        %v1051 = vpop.f32.mrf.mxu0
        %v1052 = vadd.f32 %v832, %v1051
        %v1053 = vpop.f32.mrf.mxu0
        %v1054 = vadd.f32 %v834, %v1053
        %1055 = vmatmul.bf16.gmra.mxu0 %v973
        %v1056 = vpop.f32.mrf.mxu0
        %v1057 = vadd.f32 %v837, %v1056
        %v1058 = vpop.f32.mrf.mxu0
        %v1059 = vadd.f32 %v839, %v1058
        %1060 = vmatmul.bf16.gmra.mxu0 %v976
        %v1061 = vpop.f32.mrf.mxu0
        %v1062 = vadd.f32 %v842, %v1061
        %v1063 = vpop.f32.mrf.mxu0
        %v1064 = vadd.f32 %v844, %v1063
        %1065 = vmatmul.bf16.gmra.mxu0 %v979
        %v1066 = vpop.f32.mrf.mxu0
        %v1067 = vadd.f32 %v847, %v1066
        %v1068 = vpop.f32.mrf.mxu0
        %v1069 = vadd.f32 %v849, %v1068
        %1070 = vmatmul.bf16.gmra.mxu0 %v982
        %v1071 = vpop.f32.mrf.mxu0
        %v1072 = vadd.f32 %v852, %v1071
        %v1073 = vpop.f32.mrf.mxu0
        %v1074 = vadd.f32 %v854, %v1073
        %1075 = vdwg.mxu0
        %v1076 = vld [vmem:[%s219 + $0x8] sm:$0xf]
        %v1077 = vld [vmem:[%s229] sm:$0xe]
        %v1078 = vld [vmem:[%s229 + $0xc] sm:$0xe]
        %v1079 = vld [vmem:[%s229 + $0x18] sm:$0xe]
        %v1080 = vld [vmem:[%s229 + $0x24] sm:$0xe]
        %v1081 = vld [vmem:[%s229 + $0x30] sm:$0xe]
        %v1082 = vld [vmem:[%s229 + $0x3c] sm:$0xe]
        %v1083 = vld [vmem:[%s229 + $0x48] sm:$0xe]
        %v1084 = vld [vmem:[%s229 + $0x54] sm:$0xe]
        %v1085 = vld [vmem:[%s229 + $0x60] sm:$0xe]
        %v1086 = vld [vmem:[%s229 + $0x6c] sm:$0xe]
        %v1087 = vld [vmem:[%s229 + $0x78] sm:$0xe]
        %v1088 = vld [vmem:[%s229 + $0x84] sm:$0xe]
        %v1089 = vld [vmem:[%s229 + $0x90] sm:$0xe]
        %v1090 = vld [vmem:[%s229 + $0x9c] sm:$0xe]
        %v1091 = vld [vmem:[%s229 + $0xa8] sm:$0xe]
        %v1092 = vld [vmem:[%s229 + $0xb4] sm:$0xe]
        %vm1125 = vcmask 1042432
        %vm1126 = vcmask 1046532
        %vm1127 = vmor %vm1125, %vm1126
        %v1128 = vrot.slane %v1077, 5
        %v1129 = vrot.slane %v1128, 4
        %v1130 = vrot.slane %v231, 5
        %v1131 = vsel %vm1127, %v1129, %v1130
        %v1132 = vrot.slane %v1130, 4
        %v1133 = vrot.slane %v263, 5
        %v1134 = vsel %vm1127, %v1132, %v1133
        %v1135 = vrot.slane %v1078, 5
        %v1136 = vrot.slane %v1135, 4
        %v1137 = vrot.slane %v233, 5
        %v1138 = vsel %vm1127, %v1136, %v1137
        %v1139 = vrot.slane %v1137, 4
        %v1140 = vrot.slane %v264, 5
        %v1141 = vsel %vm1127, %v1139, %v1140
        %v1142 = vrot.slane %v1079, 5
        %v1143 = vrot.slane %v1142, 4
        %v1144 = vrot.slane %v235, 5
        %v1145 = vsel %vm1127, %v1143, %v1144
        %v1146 = vrot.slane %v1144, 4
        %v1147 = vrot.slane %v265, 5
        %v1148 = vsel %vm1127, %v1146, %v1147
        %v1149 = vrot.slane %v1080, 5
        %v1150 = vrot.slane %v1149, 4
        %v1151 = vrot.slane %v237, 5
        %v1152 = vsel %vm1127, %v1150, %v1151
        %v1153 = vrot.slane %v1151, 4
        %v1154 = vrot.slane %v266, 5
        %v1155 = vsel %vm1127, %v1153, %v1154
        %v1156 = vrot.slane %v1081, 5
        %v1157 = vrot.slane %v1156, 4
        %v1158 = vrot.slane %v239, 5
        %v1159 = vsel %vm1127, %v1157, %v1158
        %v1160 = vrot.slane %v1158, 4
        %v1161 = vrot.slane %v267, 5
        %v1162 = vsel %vm1127, %v1160, %v1161
        %v1163 = vrot.slane %v1082, 5
        %v1164 = vrot.slane %v1163, 4
        %v1165 = vrot.slane %v241, 5
        %v1166 = vsel %vm1127, %v1164, %v1165
        %v1167 = vrot.slane %v1165, 4
        %v1168 = vrot.slane %v268, 5
        %v1169 = vsel %vm1127, %v1167, %v1168
        %v1170 = vrot.slane %v1083, 5
        %v1171 = vrot.slane %v1170, 4
        %v1172 = vrot.slane %v243, 5
        %v1173 = vsel %vm1127, %v1171, %v1172
        %v1174 = vrot.slane %v1172, 4
        %v1175 = vrot.slane %v269, 5
        %v1176 = vsel %vm1127, %v1174, %v1175
        %v1177 = vrot.slane %v1084, 5
        %v1178 = vrot.slane %v1177, 4
        %v1179 = vrot.slane %v245, 5
        %v1180 = vsel %vm1127, %v1178, %v1179
        %v1181 = vrot.slane %v1179, 4
        %v1182 = vrot.slane %v270, 5
        %v1183 = vsel %vm1127, %v1181, %v1182
        %v1184 = vrot.slane %v1085, 5
        %v1185 = vrot.slane %v1184, 4
        %v1186 = vrot.slane %v247, 5
        %v1187 = vsel %vm1127, %v1185, %v1186
        %v1188 = vrot.slane %v1186, 4
        %v1189 = vrot.slane %v271, 5
        %v1190 = vsel %vm1127, %v1188, %v1189
        %v1191 = vrot.slane %v1086, 5
        %v1192 = vrot.slane %v1191, 4
        %v1193 = vrot.slane %v249, 5
        %v1194 = vsel %vm1127, %v1192, %v1193
        %v1195 = vrot.slane %v1193, 4
        %v1196 = vrot.slane %v272, 5
        %v1197 = vsel %vm1127, %v1195, %v1196
        %v1198 = vrot.slane %v1087, 5
        %v1199 = vrot.slane %v1198, 4
        %v1200 = vrot.slane %v251, 5
        %v1201 = vsel %vm1127, %v1199, %v1200
        %v1202 = vrot.slane %v1200, 4
        %v1203 = vrot.slane %v273, 5
        %v1204 = vsel %vm1127, %v1202, %v1203
        %v1205 = vrot.slane %v1088, 5
        %v1206 = vrot.slane %v1205, 4
        %v1207 = vrot.slane %v253, 5
        %v1208 = vsel %vm1127, %v1206, %v1207
        %v1209 = vrot.slane %v1207, 4
        %v1210 = vrot.slane %v274, 5
        %v1211 = vsel %vm1127, %v1209, %v1210
        %v1212 = vrot.slane %v1089, 5
        %v1213 = vrot.slane %v1212, 4
        %v1214 = vrot.slane %v255, 5
        %v1215 = vsel %vm1127, %v1213, %v1214
        %v1216 = vrot.slane %v1214, 4
        %v1217 = vrot.slane %v275, 5
        %v1218 = vsel %vm1127, %v1216, %v1217
        %v1219 = vrot.slane %v1090, 5
        %v1220 = vrot.slane %v1219, 4
        %v1221 = vrot.slane %v257, 5
        %v1222 = vsel %vm1127, %v1220, %v1221
        %v1223 = vrot.slane %v1221, 4
        %v1224 = vrot.slane %v276, 5
        %v1225 = vsel %vm1127, %v1223, %v1224
        %v1226 = vrot.slane %v1091, 5
        %v1227 = vrot.slane %v1226, 4
        %v1228 = vrot.slane %v259, 5
        %v1229 = vsel %vm1127, %v1227, %v1228
        %v1230 = vrot.slane %v1228, 4
        %v1231 = vrot.slane %v277, 5
        %v1232 = vsel %vm1127, %v1230, %v1231
        %v1233 = vrot.slane %v1092, 5
        %v1234 = vrot.slane %v1233, 4
        %v1235 = vrot.slane %v261, 5
        %v1236 = vsel %vm1127, %v1234, %v1235
        %v1237 = vrot.slane %v1235, 4
        %v1238 = vrot.slane %v278, 5
        %v1239 = vsel %vm1127, %v1237, %v1238
        %v1240 = vunpack.c.l.b16 %v1131
        %v1241 = vunpack.c.l.b16 %v1134
        %v1242 = vunpack.c.l.b16 %v1138
        %v1243 = vunpack.c.l.b16 %v1141
        %v1244 = vunpack.c.l.b16 %v1145
        %v1245 = vunpack.c.l.b16 %v1148
        %v1246 = vunpack.c.l.b16 %v1152
        %v1247 = vunpack.c.l.b16 %v1155
        %v1248 = vunpack.c.l.b16 %v1159
        %v1249 = vunpack.c.l.b16 %v1162
        %v1250 = vunpack.c.l.b16 %v1166
        %v1251 = vunpack.c.l.b16 %v1169
        %v1252 = vunpack.c.l.b16 %v1173
        %v1253 = vunpack.c.l.b16 %v1176
        %v1254 = vunpack.c.l.b16 %v1180
        %v1255 = vunpack.c.l.b16 %v1183
        %v1256 = vunpack.c.l.b16 %v1187
        %v1257 = vunpack.c.l.b16 %v1190
        %v1258 = vunpack.c.l.b16 %v1194
        %v1259 = vunpack.c.l.b16 %v1197
        %v1260 = vunpack.c.l.b16 %v1201
        %v1261 = vunpack.c.l.b16 %v1204
        %v1262 = vunpack.c.l.b16 %v1208
        %v1263 = vunpack.c.l.b16 %v1211
        %v1264 = vunpack.c.l.b16 %v1215
        %v1265 = vunpack.c.l.b16 %v1218
        %v1266 = vunpack.c.l.b16 %v1222
        %v1267 = vunpack.c.l.b16 %v1225
        %v1268 = vunpack.c.l.b16 %v1229
        %v1269 = vunpack.c.l.b16 %v1232
        %v1270 = vunpack.c.l.b16 %v1236
        %v1271 = vunpack.c.l.b16 %v1239
        %v1272 = vpack.c.b16 %v1241, %v1240
        %v1273 = vpack.c.b16 %v1243, %v1242
        %v1274 = vpack.c.b16 %v1245, %v1244
        %v1275 = vpack.c.b16 %v1247, %v1246
        %v1276 = vpack.c.b16 %v1249, %v1248
        %v1277 = vpack.c.b16 %v1251, %v1250
        %v1278 = vpack.c.b16 %v1253, %v1252
        %v1279 = vpack.c.b16 %v1255, %v1254
        %v1280 = vpack.c.b16 %v1257, %v1256
        %v1281 = vpack.c.b16 %v1259, %v1258
        %v1282 = vpack.c.b16 %v1261, %v1260
        %v1283 = vpack.c.b16 %v1263, %v1262
        %v1284 = vpack.c.b16 %v1265, %v1264
        %v1285 = vpack.c.b16 %v1267, %v1266
        %v1286 = vpack.c.b16 %v1269, %v1268
        %v1287 = vpack.c.b16 %v1271, %v1270
        %v1289 = vsel %vm714, %v1272, 0
        %v1292 = vsel %vm714, %v1273, 0
        %v1295 = vsel %vm714, %v1274, 0
        %v1298 = vsel %vm714, %v1275, 0
        %v1301 = vsel %vm714, %v1276, 0
        %v1304 = vsel %vm714, %v1277, 0
        %v1307 = vsel %vm714, %v1278, 0
        %v1310 = vsel %vm714, %v1279, 0
        %v1313 = vsel %vm714, %v1280, 0
        %v1316 = vsel %vm714, %v1281, 0
        %v1319 = vsel %vm714, %v1282, 0
        %v1322 = vsel %vm714, %v1283, 0
        %v1325 = vsel %vm714, %v1284, 0
        %v1328 = vsel %vm714, %v1285, 0
        %v1331 = vsel %vm714, %v1286, 0
        %v1334 = vsel %vm714, %v1287, 0
        %v1337 = vsel %vm763, %v1076, 0
        %1339 = vmatpush.bf16.msra.mxu0 0
        %1340 = vmatpush.bf16.msra.mxu0 0
        %1341 = vmatpush.bf16.msra.mxu0 0
        %1342 = vmatpush.bf16.msra.mxu0 0
        %1343 = vmatpush.bf16.msra.mxu0 0
        %1344 = vmatpush.bf16.msra.mxu0 0
        %1345 = vmatpush.bf16.msra.mxu0 0
        %1346 = vmatpush.bf16.msra.mxu0 %v1337
        %1347 = vmatmul.bf16.gmra.mxu0 %v1289
        %v1348 = vpop.f32.mrf.mxu0
        %v1349 = vadd.f32 0.0, %v1348
        %v1350 = vpop.f32.mrf.mxu0
        %v1351 = vadd.f32 0.0, %v1350
        %1352 = vmatmul.bf16.gmra.mxu0 %v1292
        %v1353 = vpop.f32.mrf.mxu0
        %v1354 = vadd.f32 0.0, %v1353
        %v1355 = vpop.f32.mrf.mxu0
        %v1356 = vadd.f32 0.0, %v1355
        %1357 = vmatmul.bf16.gmra.mxu0 %v1295
        %v1358 = vpop.f32.mrf.mxu0
        %v1359 = vadd.f32 0.0, %v1358
        %v1360 = vpop.f32.mrf.mxu0
        %v1361 = vadd.f32 0.0, %v1360
        %1362 = vmatmul.bf16.gmra.mxu0 %v1298
        %v1363 = vpop.f32.mrf.mxu0
        %v1364 = vadd.f32 0.0, %v1363
        %v1365 = vpop.f32.mrf.mxu0
        %v1366 = vadd.f32 0.0, %v1365
        %1367 = vmatmul.bf16.gmra.mxu0 %v1301
        %v1368 = vpop.f32.mrf.mxu0
        %v1369 = vadd.f32 0.0, %v1368
        %v1370 = vpop.f32.mrf.mxu0
        %v1371 = vadd.f32 0.0, %v1370
        %1372 = vmatmul.bf16.gmra.mxu0 %v1304
        %v1373 = vpop.f32.mrf.mxu0
        %v1374 = vadd.f32 0.0, %v1373
        %v1375 = vpop.f32.mrf.mxu0
        %v1376 = vadd.f32 0.0, %v1375
        %1377 = vmatmul.bf16.gmra.mxu0 %v1307
        %v1378 = vpop.f32.mrf.mxu0
        %v1379 = vadd.f32 0.0, %v1378
        %v1380 = vpop.f32.mrf.mxu0
        %v1381 = vadd.f32 0.0, %v1380
        %1382 = vmatmul.bf16.gmra.mxu0 %v1310
        %v1383 = vpop.f32.mrf.mxu0
        %v1384 = vadd.f32 0.0, %v1383
        %v1385 = vpop.f32.mrf.mxu0
        %v1386 = vadd.f32 0.0, %v1385
        %1387 = vmatmul.bf16.gmra.mxu0 %v1313
        %v1388 = vpop.f32.mrf.mxu0
        %v1389 = vadd.f32 0.0, %v1388
        %v1390 = vpop.f32.mrf.mxu0
        %v1391 = vadd.f32 0.0, %v1390
        %1392 = vmatmul.bf16.gmra.mxu0 %v1316
        %v1393 = vpop.f32.mrf.mxu0
        %v1394 = vadd.f32 0.0, %v1393
        %v1395 = vpop.f32.mrf.mxu0
        %v1396 = vadd.f32 0.0, %v1395
        %1397 = vmatmul.bf16.gmra.mxu0 %v1319
        %v1398 = vpop.f32.mrf.mxu0
        %v1399 = vadd.f32 0.0, %v1398
        %v1400 = vpop.f32.mrf.mxu0
        %v1401 = vadd.f32 0.0, %v1400
        %1402 = vmatmul.bf16.gmra.mxu0 %v1322
        %v1403 = vpop.f32.mrf.mxu0
        %v1404 = vadd.f32 0.0, %v1403
        %v1405 = vpop.f32.mrf.mxu0
        %v1406 = vadd.f32 0.0, %v1405
        %1407 = vmatmul.bf16.gmra.mxu0 %v1325
        %v1408 = vpop.f32.mrf.mxu0
        %v1409 = vadd.f32 0.0, %v1408
        %v1410 = vpop.f32.mrf.mxu0
        %v1411 = vadd.f32 0.0, %v1410
        %1412 = vmatmul.bf16.gmra.mxu0 %v1328
        %v1413 = vpop.f32.mrf.mxu0
        %v1414 = vadd.f32 0.0, %v1413
        %v1415 = vpop.f32.mrf.mxu0
        %v1416 = vadd.f32 0.0, %v1415
        %1417 = vmatmul.bf16.gmra.mxu0 %v1331
        %v1418 = vpop.f32.mrf.mxu0
        %v1419 = vadd.f32 0.0, %v1418
        %v1420 = vpop.f32.mrf.mxu0
        %v1421 = vadd.f32 0.0, %v1420
        %1422 = vmatmul.bf16.gmra.mxu0 %v1334
        %v1423 = vpop.f32.mrf.mxu0
        %v1424 = vadd.f32 0.0, %v1423
        %v1425 = vpop.f32.mrf.mxu0
        %v1426 = vadd.f32 0.0, %v1425
        %1427 = vdwg.mxu0
        %v1428 = vadd.f32 %v997, %v1349
        %v1429 = vadd.f32 %v999, %v1351
        %v1430 = vadd.f32 %v1002, %v1354
        %v1431 = vadd.f32 %v1004, %v1356
        %v1432 = vadd.f32 %v1007, %v1359
        %v1433 = vadd.f32 %v1009, %v1361
        %v1434 = vadd.f32 %v1012, %v1364
        %v1435 = vadd.f32 %v1014, %v1366
        %v1436 = vadd.f32 %v1017, %v1369
        %v1437 = vadd.f32 %v1019, %v1371
        %v1438 = vadd.f32 %v1022, %v1374
        %v1439 = vadd.f32 %v1024, %v1376
        %v1440 = vadd.f32 %v1027, %v1379
        %v1441 = vadd.f32 %v1029, %v1381
        %v1442 = vadd.f32 %v1032, %v1384
        %v1443 = vadd.f32 %v1034, %v1386
        %v1444 = vadd.f32 %v1037, %v1389
        %v1445 = vadd.f32 %v1039, %v1391
        %v1446 = vadd.f32 %v1042, %v1394
        %v1447 = vadd.f32 %v1044, %v1396
        %v1448 = vadd.f32 %v1047, %v1399
        %v1449 = vadd.f32 %v1049, %v1401
        %v1450 = vadd.f32 %v1052, %v1404
        %v1451 = vadd.f32 %v1054, %v1406
        %v1452 = vadd.f32 %v1057, %v1409
        %v1453 = vadd.f32 %v1059, %v1411
        %v1454 = vadd.f32 %v1062, %v1414
        %v1455 = vadd.f32 %v1064, %v1416
        %v1456 = vadd.f32 %v1067, %v1419
        %v1457 = vadd.f32 %v1069, %v1421
        %v1458 = vadd.f32 %v1072, %v1424
        %v1459 = vadd.f32 %v1074, %v1426
        %v1460 = vld [vmem:[%s219 + $0xc] sm:$0xf]
        %s1461 = sadd.s32 %s225, 1
        %s1462 = smul.u32 %s1461, 3
        %s1463 = smul.addr %s1462, 4
        %s1464 = scalar_lea.vmem %s215, %s1463
        %v1465 = vld [vmem:[%s1464] sm:$0xf]
        %v1466 = vld [vmem:[%s1464 + $0x4] sm:$0xf]
        %v1467 = vld [vmem:[%s1464 + $0xc] sm:$0xf]
        %v1468 = vld [vmem:[%s1464 + $0x10] sm:$0xf]
        %v1469 = vld [vmem:[%s1464 + $0x18] sm:$0xf]
        %v1470 = vld [vmem:[%s1464 + $0x1c] sm:$0xf]
        %v1471 = vld [vmem:[%s1464 + $0x24] sm:$0xf]
        %v1472 = vld [vmem:[%s1464 + $0x28] sm:$0xf]
        %v1473 = vld [vmem:[%s1464 + $0x30] sm:$0xf]
        %v1474 = vld [vmem:[%s1464 + $0x34] sm:$0xf]
        %v1475 = vld [vmem:[%s1464 + $0x3c] sm:$0xf]
        %v1476 = vld [vmem:[%s1464 + $0x40] sm:$0xf]
        %v1477 = vld [vmem:[%s1464 + $0x48] sm:$0xf]
        %v1478 = vld [vmem:[%s1464 + $0x4c] sm:$0xf]
        %v1479 = vld [vmem:[%s1464 + $0x54] sm:$0xf]
        %v1480 = vld [vmem:[%s1464 + $0x58] sm:$0xf]
        %v1481 = vld [vmem:[%s1464 + $0x60] sm:$0xf]
        %v1482 = vld [vmem:[%s1464 + $0x64] sm:$0xf]
        %v1483 = vld [vmem:[%s1464 + $0x6c] sm:$0xf]
        %v1484 = vld [vmem:[%s1464 + $0x70] sm:$0xf]
        %v1485 = vld [vmem:[%s1464 + $0x78] sm:$0xf]
        %v1486 = vld [vmem:[%s1464 + $0x7c] sm:$0xf]
        %v1487 = vld [vmem:[%s1464 + $0x84] sm:$0xf]
        %v1488 = vld [vmem:[%s1464 + $0x88] sm:$0xf]
        %v1489 = vld [vmem:[%s1464 + $0x90] sm:$0xf]
        %v1490 = vld [vmem:[%s1464 + $0x94] sm:$0xf]
        %v1491 = vld [vmem:[%s1464 + $0x9c] sm:$0xf]
        %v1492 = vld [vmem:[%s1464 + $0xa0] sm:$0xf]
        %v1493 = vld [vmem:[%s1464 + $0xa8] sm:$0xf]
        %v1494 = vld [vmem:[%s1464 + $0xac] sm:$0xf]
        %v1495 = vld [vmem:[%s1464 + $0xb4] sm:$0xf]
        %v1496 = vld [vmem:[%s1464 + $0xb8] sm:$0xf]
        %v1529 = vunpack.c.l.b16 %v1465
        %v1530 = vunpack.c.l.b16 %v1466
        %v1531 = vunpack.c.l.b16 %v1467
        %v1532 = vunpack.c.l.b16 %v1468
        %v1533 = vunpack.c.l.b16 %v1469
        %v1534 = vunpack.c.l.b16 %v1470
        %v1535 = vunpack.c.l.b16 %v1471
        %v1536 = vunpack.c.l.b16 %v1472
        %v1537 = vunpack.c.l.b16 %v1473
        %v1538 = vunpack.c.l.b16 %v1474
        %v1539 = vunpack.c.l.b16 %v1475
        %v1540 = vunpack.c.l.b16 %v1476
        %v1541 = vunpack.c.l.b16 %v1477
        %v1542 = vunpack.c.l.b16 %v1478
        %v1543 = vunpack.c.l.b16 %v1479
        %v1544 = vunpack.c.l.b16 %v1480
        %v1545 = vunpack.c.l.b16 %v1481
        %v1546 = vunpack.c.l.b16 %v1482
        %v1547 = vunpack.c.l.b16 %v1483
        %v1548 = vunpack.c.l.b16 %v1484
        %v1549 = vunpack.c.l.b16 %v1485
        %v1550 = vunpack.c.l.b16 %v1486
        %v1551 = vunpack.c.l.b16 %v1487
        %v1552 = vunpack.c.l.b16 %v1488
        %v1553 = vunpack.c.l.b16 %v1489
        %v1554 = vunpack.c.l.b16 %v1490
        %v1555 = vunpack.c.l.b16 %v1491
        %v1556 = vunpack.c.l.b16 %v1492
        %v1557 = vunpack.c.l.b16 %v1493
        %v1558 = vunpack.c.l.b16 %v1494
        %v1559 = vunpack.c.l.b16 %v1495
        %v1560 = vunpack.c.l.b16 %v1496
        %v1561 = vpack.c.b16 %v1530, %v1529
        %v1562 = vpack.c.b16 %v1532, %v1531
        %v1563 = vpack.c.b16 %v1534, %v1533
        %v1564 = vpack.c.b16 %v1536, %v1535
        %v1565 = vpack.c.b16 %v1538, %v1537
        %v1566 = vpack.c.b16 %v1540, %v1539
        %v1567 = vpack.c.b16 %v1542, %v1541
        %v1568 = vpack.c.b16 %v1544, %v1543
        %v1569 = vpack.c.b16 %v1546, %v1545
        %v1570 = vpack.c.b16 %v1548, %v1547
        %v1571 = vpack.c.b16 %v1550, %v1549
        %v1572 = vpack.c.b16 %v1552, %v1551
        %v1573 = vpack.c.b16 %v1554, %v1553
        %v1574 = vpack.c.b16 %v1556, %v1555
        %v1575 = vpack.c.b16 %v1558, %v1557
        %v1576 = vpack.c.b16 %v1560, %v1559
        %v1578 = vsel %vm714, %v1561, 0
        %v1581 = vsel %vm714, %v1562, 0
        %v1584 = vsel %vm714, %v1563, 0
        %v1587 = vsel %vm714, %v1564, 0
        %v1590 = vsel %vm714, %v1565, 0
        %v1593 = vsel %vm714, %v1566, 0
        %v1596 = vsel %vm714, %v1567, 0
        %v1599 = vsel %vm714, %v1568, 0
        %v1602 = vsel %vm714, %v1569, 0
        %v1605 = vsel %vm714, %v1570, 0
        %v1608 = vsel %vm714, %v1571, 0
        %v1611 = vsel %vm714, %v1572, 0
        %v1614 = vsel %vm714, %v1573, 0
        %v1617 = vsel %vm714, %v1574, 0
        %v1620 = vsel %vm714, %v1575, 0
        %v1623 = vsel %vm714, %v1576, 0
        %v1626 = vsel %vm763, %v1460, 0
        %1628 = vmatpush.bf16.msra.mxu0 0
        %1629 = vmatpush.bf16.msra.mxu0 0
        %1630 = vmatpush.bf16.msra.mxu0 0
        %1631 = vmatpush.bf16.msra.mxu0 0
        %1632 = vmatpush.bf16.msra.mxu0 0
        %1633 = vmatpush.bf16.msra.mxu0 0
        %1634 = vmatpush.bf16.msra.mxu0 0
        %1635 = vmatpush.bf16.msra.mxu0 %v1626
        %1636 = vmatmul.bf16.gmra.mxu0 %v1578
        %v1637 = vpop.f32.mrf.mxu0
        %v1638 = vadd.f32 0.0, %v1637
        %v1639 = vpop.f32.mrf.mxu0
        %v1640 = vadd.f32 0.0, %v1639
        %1641 = vmatmul.bf16.gmra.mxu0 %v1581
        %v1642 = vpop.f32.mrf.mxu0
        %v1643 = vadd.f32 0.0, %v1642
        %v1644 = vpop.f32.mrf.mxu0
        %v1645 = vadd.f32 0.0, %v1644
        %1646 = vmatmul.bf16.gmra.mxu0 %v1584
        %v1647 = vpop.f32.mrf.mxu0
        %v1648 = vadd.f32 0.0, %v1647
        %v1649 = vpop.f32.mrf.mxu0
        %v1650 = vadd.f32 0.0, %v1649
        %1651 = vmatmul.bf16.gmra.mxu0 %v1587
        %v1652 = vpop.f32.mrf.mxu0
        %v1653 = vadd.f32 0.0, %v1652
        %v1654 = vpop.f32.mrf.mxu0
        %v1655 = vadd.f32 0.0, %v1654
        %1656 = vmatmul.bf16.gmra.mxu0 %v1590
        %v1657 = vpop.f32.mrf.mxu0
        %v1658 = vadd.f32 0.0, %v1657
        %v1659 = vpop.f32.mrf.mxu0
        %v1660 = vadd.f32 0.0, %v1659
        %1661 = vmatmul.bf16.gmra.mxu0 %v1593
        %v1662 = vpop.f32.mrf.mxu0
        %v1663 = vadd.f32 0.0, %v1662
        %v1664 = vpop.f32.mrf.mxu0
        %v1665 = vadd.f32 0.0, %v1664
        %1666 = vmatmul.bf16.gmra.mxu0 %v1596
        %v1667 = vpop.f32.mrf.mxu0
        %v1668 = vadd.f32 0.0, %v1667
        %v1669 = vpop.f32.mrf.mxu0
        %v1670 = vadd.f32 0.0, %v1669
        %1671 = vmatmul.bf16.gmra.mxu0 %v1599
        %v1672 = vpop.f32.mrf.mxu0
        %v1673 = vadd.f32 0.0, %v1672
        %v1674 = vpop.f32.mrf.mxu0
        %v1675 = vadd.f32 0.0, %v1674
        %1676 = vmatmul.bf16.gmra.mxu0 %v1602
        %v1677 = vpop.f32.mrf.mxu0
        %v1678 = vadd.f32 0.0, %v1677
        %v1679 = vpop.f32.mrf.mxu0
        %v1680 = vadd.f32 0.0, %v1679
        %1681 = vmatmul.bf16.gmra.mxu0 %v1605
        %v1682 = vpop.f32.mrf.mxu0
        %v1683 = vadd.f32 0.0, %v1682
        %v1684 = vpop.f32.mrf.mxu0
        %v1685 = vadd.f32 0.0, %v1684
        %1686 = vmatmul.bf16.gmra.mxu0 %v1608
        %v1687 = vpop.f32.mrf.mxu0
        %v1688 = vadd.f32 0.0, %v1687
        %v1689 = vpop.f32.mrf.mxu0
        %v1690 = vadd.f32 0.0, %v1689
        %1691 = vmatmul.bf16.gmra.mxu0 %v1611
        %v1692 = vpop.f32.mrf.mxu0
        %v1693 = vadd.f32 0.0, %v1692
        %v1694 = vpop.f32.mrf.mxu0
        %v1695 = vadd.f32 0.0, %v1694
        %1696 = vmatmul.bf16.gmra.mxu0 %v1614
        %v1697 = vpop.f32.mrf.mxu0
        %v1698 = vadd.f32 0.0, %v1697
        %v1699 = vpop.f32.mrf.mxu0
        %v1700 = vadd.f32 0.0, %v1699
        %1701 = vmatmul.bf16.gmra.mxu0 %v1617
        %v1702 = vpop.f32.mrf.mxu0
        %v1703 = vadd.f32 0.0, %v1702
        %v1704 = vpop.f32.mrf.mxu0
        %v1705 = vadd.f32 0.0, %v1704
        %1706 = vmatmul.bf16.gmra.mxu0 %v1620
        %v1707 = vpop.f32.mrf.mxu0
        %v1708 = vadd.f32 0.0, %v1707
        %v1709 = vpop.f32.mrf.mxu0
        %v1710 = vadd.f32 0.0, %v1709
        %1711 = vmatmul.bf16.gmra.mxu0 %v1623
        %v1712 = vpop.f32.mrf.mxu0
        %v1713 = vadd.f32 0.0, %v1712
        %v1714 = vpop.f32.mrf.mxu0
        %v1715 = vadd.f32 0.0, %v1714
        %1716 = vdwg.mxu0
        %v1717 = vadd.f32 %v1428, %v1638
        %v1718 = vadd.f32 %v1429, %v1640
        %v1719 = vadd.f32 %v1430, %v1643
        %v1720 = vadd.f32 %v1431, %v1645
        %v1721 = vadd.f32 %v1432, %v1648
        %v1722 = vadd.f32 %v1433, %v1650
        %v1723 = vadd.f32 %v1434, %v1653
        %v1724 = vadd.f32 %v1435, %v1655
        %v1725 = vadd.f32 %v1436, %v1658
        %v1726 = vadd.f32 %v1437, %v1660
        %v1727 = vadd.f32 %v1438, %v1663
        %v1728 = vadd.f32 %v1439, %v1665
        %v1729 = vadd.f32 %v1440, %v1668
        %v1730 = vadd.f32 %v1441, %v1670
        %v1731 = vadd.f32 %v1442, %v1673
        %v1732 = vadd.f32 %v1443, %v1675
        %v1733 = vadd.f32 %v1444, %v1678
        %v1734 = vadd.f32 %v1445, %v1680
        %v1735 = vadd.f32 %v1446, %v1683
        %v1736 = vadd.f32 %v1447, %v1685
        %v1737 = vadd.f32 %v1448, %v1688
        %v1738 = vadd.f32 %v1449, %v1690
        %v1739 = vadd.f32 %v1450, %v1693
        %v1740 = vadd.f32 %v1451, %v1695
        %v1741 = vadd.f32 %v1452, %v1698
        %v1742 = vadd.f32 %v1453, %v1700
        %v1743 = vadd.f32 %v1454, %v1703
        %v1744 = vadd.f32 %v1455, %v1705
        %v1745 = vadd.f32 %v1456, %v1708
        %v1746 = vadd.f32 %v1457, %v1710
        %v1747 = vadd.f32 %v1458, %v1713
        %v1748 = vadd.f32 %v1459, %v1715
        %v1749 = vld [vmem:[%s219 + $0x10] sm:$0xf]
        %v1750 = vld [vmem:[%s1464] sm:$0xf]
        %v1751 = vld [vmem:[%s1464 + $0x4] sm:$0xf]
        %v1752 = vld [vmem:[%s1464 + $0x8] sm:$0x1]
        %v1753 = vld [vmem:[%s1464 + $0xc] sm:$0xf]
        %v1754 = vld [vmem:[%s1464 + $0x10] sm:$0xf]
        %v1755 = vld [vmem:[%s1464 + $0x14] sm:$0x1]
        %v1756 = vld [vmem:[%s1464 + $0x18] sm:$0xf]
        %v1757 = vld [vmem:[%s1464 + $0x1c] sm:$0xf]
        %v1758 = vld [vmem:[%s1464 + $0x20] sm:$0x1]
        %v1759 = vld [vmem:[%s1464 + $0x24] sm:$0xf]
        %v1760 = vld [vmem:[%s1464 + $0x28] sm:$0xf]
        %v1761 = vld [vmem:[%s1464 + $0x2c] sm:$0x1]
        %v1762 = vld [vmem:[%s1464 + $0x30] sm:$0xf]
        %v1763 = vld [vmem:[%s1464 + $0x34] sm:$0xf]
        %v1764 = vld [vmem:[%s1464 + $0x38] sm:$0x1]
        %v1765 = vld [vmem:[%s1464 + $0x3c] sm:$0xf]
        %v1766 = vld [vmem:[%s1464 + $0x40] sm:$0xf]
        %v1767 = vld [vmem:[%s1464 + $0x44] sm:$0x1]
        %v1768 = vld [vmem:[%s1464 + $0x48] sm:$0xf]
        %v1769 = vld [vmem:[%s1464 + $0x4c] sm:$0xf]
        %v1770 = vld [vmem:[%s1464 + $0x50] sm:$0x1]
        %v1771 = vld [vmem:[%s1464 + $0x54] sm:$0xf]
        %v1772 = vld [vmem:[%s1464 + $0x58] sm:$0xf]
        %v1773 = vld [vmem:[%s1464 + $0x5c] sm:$0x1]
        %v1774 = vld [vmem:[%s1464 + $0x60] sm:$0xf]
        %v1775 = vld [vmem:[%s1464 + $0x64] sm:$0xf]
        %v1776 = vld [vmem:[%s1464 + $0x68] sm:$0x1]
        %v1777 = vld [vmem:[%s1464 + $0x6c] sm:$0xf]
        %v1778 = vld [vmem:[%s1464 + $0x70] sm:$0xf]
        %v1779 = vld [vmem:[%s1464 + $0x74] sm:$0x1]
        %v1780 = vld [vmem:[%s1464 + $0x78] sm:$0xf]
        %v1781 = vld [vmem:[%s1464 + $0x7c] sm:$0xf]
        %v1782 = vld [vmem:[%s1464 + $0x80] sm:$0x1]
        %v1783 = vld [vmem:[%s1464 + $0x84] sm:$0xf]
        %v1784 = vld [vmem:[%s1464 + $0x88] sm:$0xf]
        %v1785 = vld [vmem:[%s1464 + $0x8c] sm:$0x1]
        %v1786 = vld [vmem:[%s1464 + $0x90] sm:$0xf]
        %v1787 = vld [vmem:[%s1464 + $0x94] sm:$0xf]
        %v1788 = vld [vmem:[%s1464 + $0x98] sm:$0x1]
        %v1789 = vld [vmem:[%s1464 + $0x9c] sm:$0xf]
        %v1790 = vld [vmem:[%s1464 + $0xa0] sm:$0xf]
        %v1791 = vld [vmem:[%s1464 + $0xa4] sm:$0x1]
        %v1792 = vld [vmem:[%s1464 + $0xa8] sm:$0xf]
        %v1793 = vld [vmem:[%s1464 + $0xac] sm:$0xf]
        %v1794 = vld [vmem:[%s1464 + $0xb0] sm:$0x1]
        %v1795 = vld [vmem:[%s1464 + $0xb4] sm:$0xf]
        %v1796 = vld [vmem:[%s1464 + $0xb8] sm:$0xf]
        %v1797 = vld [vmem:[%s1464 + $0xbc] sm:$0x1]
        %v1799 = vshrl.u32 %v1750, 16
        %v1801 = vrot.slane %v1799, 4
        %v1802 = vshll.u32 %v1750, 16
        %v1804 = vrot.slane %v1802, 5
        %v1805 = vor.u32 %v1801, %v1804
        %v1806 = vrot.slane %v1805, 4
        %v1808 = vshll.u32 %v1751, 16
        %v1810 = vrot.slane %v1808, 5
        %v1811 = vsel %vm281, %v1806, %v1810
        %v1812 = vshrl.u32 %v1751, 16
        %v1814 = vrot.slane %v1812, 4
        %v1815 = vor.u32 %v1814, %v1810
        %v1816 = vrot.slane %v1815, 4
        %v1818 = vshll.u32 %v1752, 16
        %v1820 = vrot.slane %v1818, 5
        %v1821 = vsel %vm281, %v1816, %v1820
        %v1823 = vshrl.u32 %v1753, 16
        %v1825 = vrot.slane %v1823, 4
        %v1826 = vshll.u32 %v1753, 16
        %v1828 = vrot.slane %v1826, 5
        %v1829 = vor.u32 %v1825, %v1828
        %v1830 = vrot.slane %v1829, 4
        %v1832 = vshll.u32 %v1754, 16
        %v1834 = vrot.slane %v1832, 5
        %v1835 = vsel %vm281, %v1830, %v1834
        %v1836 = vshrl.u32 %v1754, 16
        %v1838 = vrot.slane %v1836, 4
        %v1839 = vor.u32 %v1838, %v1834
        %v1840 = vrot.slane %v1839, 4
        %v1842 = vshll.u32 %v1755, 16
        %v1844 = vrot.slane %v1842, 5
        %v1845 = vsel %vm281, %v1840, %v1844
        %v1847 = vshrl.u32 %v1756, 16
        %v1849 = vrot.slane %v1847, 4
        %v1850 = vshll.u32 %v1756, 16
        %v1852 = vrot.slane %v1850, 5
        %v1853 = vor.u32 %v1849, %v1852
        %v1854 = vrot.slane %v1853, 4
        %v1856 = vshll.u32 %v1757, 16
        %v1858 = vrot.slane %v1856, 5
        %v1859 = vsel %vm281, %v1854, %v1858
        %v1860 = vshrl.u32 %v1757, 16
        %v1862 = vrot.slane %v1860, 4
        %v1863 = vor.u32 %v1862, %v1858
        %v1864 = vrot.slane %v1863, 4
        %v1866 = vshll.u32 %v1758, 16
        %v1868 = vrot.slane %v1866, 5
        %v1869 = vsel %vm281, %v1864, %v1868
        %v1871 = vshrl.u32 %v1759, 16
        %v1873 = vrot.slane %v1871, 4
        %v1874 = vshll.u32 %v1759, 16
        %v1876 = vrot.slane %v1874, 5
        %v1877 = vor.u32 %v1873, %v1876
        %v1878 = vrot.slane %v1877, 4
        %v1880 = vshll.u32 %v1760, 16
        %v1882 = vrot.slane %v1880, 5
        %v1883 = vsel %vm281, %v1878, %v1882
        %v1884 = vshrl.u32 %v1760, 16
        %v1886 = vrot.slane %v1884, 4
        %v1887 = vor.u32 %v1886, %v1882
        %v1888 = vrot.slane %v1887, 4
        %v1890 = vshll.u32 %v1761, 16
        %v1892 = vrot.slane %v1890, 5
        %v1893 = vsel %vm281, %v1888, %v1892
        %v1895 = vshrl.u32 %v1762, 16
        %v1897 = vrot.slane %v1895, 4
        %v1898 = vshll.u32 %v1762, 16
        %v1900 = vrot.slane %v1898, 5
        %v1901 = vor.u32 %v1897, %v1900
        %v1902 = vrot.slane %v1901, 4
        %v1904 = vshll.u32 %v1763, 16
        %v1906 = vrot.slane %v1904, 5
        %v1907 = vsel %vm281, %v1902, %v1906
        %v1908 = vshrl.u32 %v1763, 16
        %v1910 = vrot.slane %v1908, 4
        %v1911 = vor.u32 %v1910, %v1906
        %v1912 = vrot.slane %v1911, 4
        %v1914 = vshll.u32 %v1764, 16
        %v1916 = vrot.slane %v1914, 5
        %v1917 = vsel %vm281, %v1912, %v1916
        %v1919 = vshrl.u32 %v1765, 16
        %v1921 = vrot.slane %v1919, 4
        %v1922 = vshll.u32 %v1765, 16
        %v1924 = vrot.slane %v1922, 5
        %v1925 = vor.u32 %v1921, %v1924
        %v1926 = vrot.slane %v1925, 4
        %v1928 = vshll.u32 %v1766, 16
        %v1930 = vrot.slane %v1928, 5
        %v1931 = vsel %vm281, %v1926, %v1930
        %v1932 = vshrl.u32 %v1766, 16
        %v1934 = vrot.slane %v1932, 4
        %v1935 = vor.u32 %v1934, %v1930
        %v1936 = vrot.slane %v1935, 4
        %v1938 = vshll.u32 %v1767, 16
        %v1940 = vrot.slane %v1938, 5
        %v1941 = vsel %vm281, %v1936, %v1940
        %v1943 = vshrl.u32 %v1768, 16
        %v1945 = vrot.slane %v1943, 4
        %v1946 = vshll.u32 %v1768, 16
        %v1948 = vrot.slane %v1946, 5
        %v1949 = vor.u32 %v1945, %v1948
        %v1950 = vrot.slane %v1949, 4
        %v1952 = vshll.u32 %v1769, 16
        %v1954 = vrot.slane %v1952, 5
        %v1955 = vsel %vm281, %v1950, %v1954
        %v1956 = vshrl.u32 %v1769, 16
        %v1958 = vrot.slane %v1956, 4
        %v1959 = vor.u32 %v1958, %v1954
        %v1960 = vrot.slane %v1959, 4
        %v1962 = vshll.u32 %v1770, 16
        %v1964 = vrot.slane %v1962, 5
        %v1965 = vsel %vm281, %v1960, %v1964
        %v1967 = vshrl.u32 %v1771, 16
        %v1969 = vrot.slane %v1967, 4
        %v1970 = vshll.u32 %v1771, 16
        %v1972 = vrot.slane %v1970, 5
        %v1973 = vor.u32 %v1969, %v1972
        %v1974 = vrot.slane %v1973, 4
        %v1976 = vshll.u32 %v1772, 16
        %v1978 = vrot.slane %v1976, 5
        %v1979 = vsel %vm281, %v1974, %v1978
        %v1980 = vshrl.u32 %v1772, 16
        %v1982 = vrot.slane %v1980, 4
        %v1983 = vor.u32 %v1982, %v1978
        %v1984 = vrot.slane %v1983, 4
        %v1986 = vshll.u32 %v1773, 16
        %v1988 = vrot.slane %v1986, 5
        %v1989 = vsel %vm281, %v1984, %v1988
        %v1991 = vshrl.u32 %v1774, 16
        %v1993 = vrot.slane %v1991, 4
        %v1994 = vshll.u32 %v1774, 16
        %v1996 = vrot.slane %v1994, 5
        %v1997 = vor.u32 %v1993, %v1996
        %v1998 = vrot.slane %v1997, 4
        %v2000 = vshll.u32 %v1775, 16
        %v2002 = vrot.slane %v2000, 5
        %v2003 = vsel %vm281, %v1998, %v2002
        %v2004 = vshrl.u32 %v1775, 16
        %v2006 = vrot.slane %v2004, 4
        %v2007 = vor.u32 %v2006, %v2002
        %v2008 = vrot.slane %v2007, 4
        %v2010 = vshll.u32 %v1776, 16
        %v2012 = vrot.slane %v2010, 5
        %v2013 = vsel %vm281, %v2008, %v2012
        %v2015 = vshrl.u32 %v1777, 16
        %v2017 = vrot.slane %v2015, 4
        %v2018 = vshll.u32 %v1777, 16
        %v2020 = vrot.slane %v2018, 5
        %v2021 = vor.u32 %v2017, %v2020
        %v2022 = vrot.slane %v2021, 4
        %v2024 = vshll.u32 %v1778, 16
        %v2026 = vrot.slane %v2024, 5
        %v2027 = vsel %vm281, %v2022, %v2026
        %v2028 = vshrl.u32 %v1778, 16
        %v2030 = vrot.slane %v2028, 4
        %v2031 = vor.u32 %v2030, %v2026
        %v2032 = vrot.slane %v2031, 4
        %v2034 = vshll.u32 %v1779, 16
        %v2036 = vrot.slane %v2034, 5
        %v2037 = vsel %vm281, %v2032, %v2036
        %v2039 = vshrl.u32 %v1780, 16
        %v2041 = vrot.slane %v2039, 4
        %v2042 = vshll.u32 %v1780, 16
        %v2044 = vrot.slane %v2042, 5
        %v2045 = vor.u32 %v2041, %v2044
        %v2046 = vrot.slane %v2045, 4
        %v2048 = vshll.u32 %v1781, 16
        %v2050 = vrot.slane %v2048, 5
        %v2051 = vsel %vm281, %v2046, %v2050
        %v2052 = vshrl.u32 %v1781, 16
        %v2054 = vrot.slane %v2052, 4
        %v2055 = vor.u32 %v2054, %v2050
        %v2056 = vrot.slane %v2055, 4
        %v2058 = vshll.u32 %v1782, 16
        %v2060 = vrot.slane %v2058, 5
        %v2061 = vsel %vm281, %v2056, %v2060
        %v2063 = vshrl.u32 %v1783, 16
        %v2065 = vrot.slane %v2063, 4
        %v2066 = vshll.u32 %v1783, 16
        %v2068 = vrot.slane %v2066, 5
        %v2069 = vor.u32 %v2065, %v2068
        %v2070 = vrot.slane %v2069, 4
        %v2072 = vshll.u32 %v1784, 16
        %v2074 = vrot.slane %v2072, 5
        %v2075 = vsel %vm281, %v2070, %v2074
        %v2076 = vshrl.u32 %v1784, 16
        %v2078 = vrot.slane %v2076, 4
        %v2079 = vor.u32 %v2078, %v2074
        %v2080 = vrot.slane %v2079, 4
        %v2082 = vshll.u32 %v1785, 16
        %v2084 = vrot.slane %v2082, 5
        %v2085 = vsel %vm281, %v2080, %v2084
        %v2087 = vshrl.u32 %v1786, 16
        %v2089 = vrot.slane %v2087, 4
        %v2090 = vshll.u32 %v1786, 16
        %v2092 = vrot.slane %v2090, 5
        %v2093 = vor.u32 %v2089, %v2092
        %v2094 = vrot.slane %v2093, 4
        %v2096 = vshll.u32 %v1787, 16
        %v2098 = vrot.slane %v2096, 5
        %v2099 = vsel %vm281, %v2094, %v2098
        %v2100 = vshrl.u32 %v1787, 16
        %v2102 = vrot.slane %v2100, 4
        %v2103 = vor.u32 %v2102, %v2098
        %v2104 = vrot.slane %v2103, 4
        %v2106 = vshll.u32 %v1788, 16
        %v2108 = vrot.slane %v2106, 5
        %v2109 = vsel %vm281, %v2104, %v2108
        %v2111 = vshrl.u32 %v1789, 16
        %v2113 = vrot.slane %v2111, 4
        %v2114 = vshll.u32 %v1789, 16
        %v2116 = vrot.slane %v2114, 5
        %v2117 = vor.u32 %v2113, %v2116
        %v2118 = vrot.slane %v2117, 4
        %v2120 = vshll.u32 %v1790, 16
        %v2122 = vrot.slane %v2120, 5
        %v2123 = vsel %vm281, %v2118, %v2122
        %v2124 = vshrl.u32 %v1790, 16
        %v2126 = vrot.slane %v2124, 4
        %v2127 = vor.u32 %v2126, %v2122
        %v2128 = vrot.slane %v2127, 4
        %v2130 = vshll.u32 %v1791, 16
        %v2132 = vrot.slane %v2130, 5
        %v2133 = vsel %vm281, %v2128, %v2132
        %v2135 = vshrl.u32 %v1792, 16
        %v2137 = vrot.slane %v2135, 4
        %v2138 = vshll.u32 %v1792, 16
        %v2140 = vrot.slane %v2138, 5
        %v2141 = vor.u32 %v2137, %v2140
        %v2142 = vrot.slane %v2141, 4
        %v2144 = vshll.u32 %v1793, 16
        %v2146 = vrot.slane %v2144, 5
        %v2147 = vsel %vm281, %v2142, %v2146
        %v2148 = vshrl.u32 %v1793, 16
        %v2150 = vrot.slane %v2148, 4
        %v2151 = vor.u32 %v2150, %v2146
        %v2152 = vrot.slane %v2151, 4
        %v2154 = vshll.u32 %v1794, 16
        %v2156 = vrot.slane %v2154, 5
        %v2157 = vsel %vm281, %v2152, %v2156
        %v2159 = vshrl.u32 %v1795, 16
        %v2161 = vrot.slane %v2159, 4
        %v2162 = vshll.u32 %v1795, 16
        %v2164 = vrot.slane %v2162, 5
        %v2165 = vor.u32 %v2161, %v2164
        %v2166 = vrot.slane %v2165, 4
        %v2168 = vshll.u32 %v1796, 16
        %v2170 = vrot.slane %v2168, 5
        %v2171 = vsel %vm281, %v2166, %v2170
        %v2172 = vshrl.u32 %v1796, 16
        %v2174 = vrot.slane %v2172, 4
        %v2175 = vor.u32 %v2174, %v2170
        %v2176 = vrot.slane %v2175, 4
        %v2178 = vshll.u32 %v1797, 16
        %v2180 = vrot.slane %v2178, 5
        %v2181 = vsel %vm281, %v2176, %v2180
        %v2182 = vunpack.c.l.b16 %v1811
        %v2183 = vunpack.c.l.b16 %v1821
        %v2184 = vunpack.c.l.b16 %v1835
        %v2185 = vunpack.c.l.b16 %v1845
        %v2186 = vunpack.c.l.b16 %v1859
        %v2187 = vunpack.c.l.b16 %v1869
        %v2188 = vunpack.c.l.b16 %v1883
        %v2189 = vunpack.c.l.b16 %v1893
        %v2190 = vunpack.c.l.b16 %v1907
        %v2191 = vunpack.c.l.b16 %v1917
        %v2192 = vunpack.c.l.b16 %v1931
        %v2193 = vunpack.c.l.b16 %v1941
        %v2194 = vunpack.c.l.b16 %v1955
        %v2195 = vunpack.c.l.b16 %v1965
        %v2196 = vunpack.c.l.b16 %v1979
        %v2197 = vunpack.c.l.b16 %v1989
        %v2198 = vunpack.c.l.b16 %v2003
        %v2199 = vunpack.c.l.b16 %v2013
        %v2200 = vunpack.c.l.b16 %v2027
        %v2201 = vunpack.c.l.b16 %v2037
        %v2202 = vunpack.c.l.b16 %v2051
        %v2203 = vunpack.c.l.b16 %v2061
        %v2204 = vunpack.c.l.b16 %v2075
        %v2205 = vunpack.c.l.b16 %v2085
        %v2206 = vunpack.c.l.b16 %v2099
        %v2207 = vunpack.c.l.b16 %v2109
        %v2208 = vunpack.c.l.b16 %v2123
        %v2209 = vunpack.c.l.b16 %v2133
        %v2210 = vunpack.c.l.b16 %v2147
        %v2211 = vunpack.c.l.b16 %v2157
        %v2212 = vunpack.c.l.b16 %v2171
        %v2213 = vunpack.c.l.b16 %v2181
        %v2214 = vpack.c.b16 %v2183, %v2182
        %v2215 = vpack.c.b16 %v2185, %v2184
        %v2216 = vpack.c.b16 %v2187, %v2186
        %v2217 = vpack.c.b16 %v2189, %v2188
        %v2218 = vpack.c.b16 %v2191, %v2190
        %v2219 = vpack.c.b16 %v2193, %v2192
        %v2220 = vpack.c.b16 %v2195, %v2194
        %v2221 = vpack.c.b16 %v2197, %v2196
        %v2222 = vpack.c.b16 %v2199, %v2198
        %v2223 = vpack.c.b16 %v2201, %v2200
        %v2224 = vpack.c.b16 %v2203, %v2202
        %v2225 = vpack.c.b16 %v2205, %v2204
        %v2226 = vpack.c.b16 %v2207, %v2206
        %v2227 = vpack.c.b16 %v2209, %v2208
        %v2228 = vpack.c.b16 %v2211, %v2210
        %v2229 = vpack.c.b16 %v2213, %v2212
        %v2231 = vsel %vm714, %v2214, 0
        %v2234 = vsel %vm714, %v2215, 0
        %v2237 = vsel %vm714, %v2216, 0
        %v2240 = vsel %vm714, %v2217, 0
        %v2243 = vsel %vm714, %v2218, 0
        %v2246 = vsel %vm714, %v2219, 0
        %v2249 = vsel %vm714, %v2220, 0
        %v2252 = vsel %vm714, %v2221, 0
        %v2255 = vsel %vm714, %v2222, 0
        %v2258 = vsel %vm714, %v2223, 0
        %v2261 = vsel %vm714, %v2224, 0
        %v2264 = vsel %vm714, %v2225, 0
        %v2267 = vsel %vm714, %v2226, 0
        %v2270 = vsel %vm714, %v2227, 0
        %v2273 = vsel %vm714, %v2228, 0
        %v2276 = vsel %vm714, %v2229, 0
        %v2279 = vsel %vm763, %v1749, 0
        %2281 = vmatpush.bf16.msra.mxu0 0
        %2282 = vmatpush.bf16.msra.mxu0 0
        %2283 = vmatpush.bf16.msra.mxu0 0
        %2284 = vmatpush.bf16.msra.mxu0 0
        %2285 = vmatpush.bf16.msra.mxu0 0
        %2286 = vmatpush.bf16.msra.mxu0 0
        %2287 = vmatpush.bf16.msra.mxu0 0
        %2288 = vmatpush.bf16.msra.mxu0 %v2279
        %2289 = vmatmul.bf16.gmra.mxu0 %v2231
        %v2290 = vpop.f32.mrf.mxu0
        %v2291 = vadd.f32 0.0, %v2290
        %v2292 = vpop.f32.mrf.mxu0
        %v2293 = vadd.f32 0.0, %v2292
        %2294 = vmatmul.bf16.gmra.mxu0 %v2234
        %v2295 = vpop.f32.mrf.mxu0
        %v2296 = vadd.f32 0.0, %v2295
        %v2297 = vpop.f32.mrf.mxu0
        %v2298 = vadd.f32 0.0, %v2297
        %2299 = vmatmul.bf16.gmra.mxu0 %v2237
        %v2300 = vpop.f32.mrf.mxu0
        %v2301 = vadd.f32 0.0, %v2300
        %v2302 = vpop.f32.mrf.mxu0
        %v2303 = vadd.f32 0.0, %v2302
        %2304 = vmatmul.bf16.gmra.mxu0 %v2240
        %v2305 = vpop.f32.mrf.mxu0
        %v2306 = vadd.f32 0.0, %v2305
        %v2307 = vpop.f32.mrf.mxu0
        %v2308 = vadd.f32 0.0, %v2307
        %2309 = vmatmul.bf16.gmra.mxu0 %v2243
        %v2310 = vpop.f32.mrf.mxu0
        %v2311 = vadd.f32 0.0, %v2310
        %v2312 = vpop.f32.mrf.mxu0
        %v2313 = vadd.f32 0.0, %v2312
        %2314 = vmatmul.bf16.gmra.mxu0 %v2246
        %v2315 = vpop.f32.mrf.mxu0
        %v2316 = vadd.f32 0.0, %v2315
        %v2317 = vpop.f32.mrf.mxu0
        %v2318 = vadd.f32 0.0, %v2317
        %2319 = vmatmul.bf16.gmra.mxu0 %v2249
        %v2320 = vpop.f32.mrf.mxu0
        %v2321 = vadd.f32 0.0, %v2320
        %v2322 = vpop.f32.mrf.mxu0
        %v2323 = vadd.f32 0.0, %v2322
        %2324 = vmatmul.bf16.gmra.mxu0 %v2252
        %v2325 = vpop.f32.mrf.mxu0
        %v2326 = vadd.f32 0.0, %v2325
        %v2327 = vpop.f32.mrf.mxu0
        %v2328 = vadd.f32 0.0, %v2327
        %2329 = vmatmul.bf16.gmra.mxu0 %v2255
        %v2330 = vpop.f32.mrf.mxu0
        %v2331 = vadd.f32 0.0, %v2330
        %v2332 = vpop.f32.mrf.mxu0
        %v2333 = vadd.f32 0.0, %v2332
        %2334 = vmatmul.bf16.gmra.mxu0 %v2258
        %v2335 = vpop.f32.mrf.mxu0
        %v2336 = vadd.f32 0.0, %v2335
        %v2337 = vpop.f32.mrf.mxu0
        %v2338 = vadd.f32 0.0, %v2337
        %2339 = vmatmul.bf16.gmra.mxu0 %v2261
        %v2340 = vpop.f32.mrf.mxu0
        %v2341 = vadd.f32 0.0, %v2340
        %v2342 = vpop.f32.mrf.mxu0
        %v2343 = vadd.f32 0.0, %v2342
        %2344 = vmatmul.bf16.gmra.mxu0 %v2264
        %v2345 = vpop.f32.mrf.mxu0
        %v2346 = vadd.f32 0.0, %v2345
        %v2347 = vpop.f32.mrf.mxu0
        %v2348 = vadd.f32 0.0, %v2347
        %2349 = vmatmul.bf16.gmra.mxu0 %v2267
        %v2350 = vpop.f32.mrf.mxu0
        %v2351 = vadd.f32 0.0, %v2350
        %v2352 = vpop.f32.mrf.mxu0
        %v2353 = vadd.f32 0.0, %v2352
        %2354 = vmatmul.bf16.gmra.mxu0 %v2270
        %v2355 = vpop.f32.mrf.mxu0
        %v2356 = vadd.f32 0.0, %v2355
        %v2357 = vpop.f32.mrf.mxu0
        %v2358 = vadd.f32 0.0, %v2357
        %2359 = vmatmul.bf16.gmra.mxu0 %v2273
        %v2360 = vpop.f32.mrf.mxu0
        %v2361 = vadd.f32 0.0, %v2360
        %v2362 = vpop.f32.mrf.mxu0
        %v2363 = vadd.f32 0.0, %v2362
        %2364 = vmatmul.bf16.gmra.mxu0 %v2276
        %v2365 = vpop.f32.mrf.mxu0
        %v2366 = vadd.f32 0.0, %v2365
        %v2367 = vpop.f32.mrf.mxu0
        %v2368 = vadd.f32 0.0, %v2367
        %2369 = vdwg.mxu0
        %v2370 = vadd.f32 %v1717, %v2291
        %v2371 = vadd.f32 %v1718, %v2293
        %v2372 = vadd.f32 %v1719, %v2296
        %v2373 = vadd.f32 %v1720, %v2298
        %v2374 = vadd.f32 %v1721, %v2301
        %v2375 = vadd.f32 %v1722, %v2303
        %v2376 = vadd.f32 %v1723, %v2306
        %v2377 = vadd.f32 %v1724, %v2308
        %v2378 = vadd.f32 %v1725, %v2311
        %v2379 = vadd.f32 %v1726, %v2313
        %v2380 = vadd.f32 %v1727, %v2316
        %v2381 = vadd.f32 %v1728, %v2318
        %v2382 = vadd.f32 %v1729, %v2321
        %v2383 = vadd.f32 %v1730, %v2323
        %v2384 = vadd.f32 %v1731, %v2326
        %v2385 = vadd.f32 %v1732, %v2328
        %v2386 = vadd.f32 %v1733, %v2331
        %v2387 = vadd.f32 %v1734, %v2333
        %v2388 = vadd.f32 %v1735, %v2336
        %v2389 = vadd.f32 %v1736, %v2338
        %v2390 = vadd.f32 %v1737, %v2341
        %v2391 = vadd.f32 %v1738, %v2343
        %v2392 = vadd.f32 %v1739, %v2346
        %v2393 = vadd.f32 %v1740, %v2348
        %v2394 = vadd.f32 %v1741, %v2351
        %v2395 = vadd.f32 %v1742, %v2353
        %v2396 = vadd.f32 %v1743, %v2356
        %v2397 = vadd.f32 %v1744, %v2358
        %v2398 = vadd.f32 %v1745, %v2361
        %v2399 = vadd.f32 %v1746, %v2363
        %v2400 = vadd.f32 %v1747, %v2366
        %v2401 = vadd.f32 %v1748, %v2368
        %v2402 = vld [vmem:[%s219 + $0x14] sm:$0xf]
        %v2403 = vld [vmem:[%s1464] sm:$0xe]
        %v2404 = vld [vmem:[%s1464 + $0xc] sm:$0xe]
        %v2405 = vld [vmem:[%s1464 + $0x18] sm:$0xe]
        %v2406 = vld [vmem:[%s1464 + $0x24] sm:$0xe]
        %v2407 = vld [vmem:[%s1464 + $0x30] sm:$0xe]
        %v2408 = vld [vmem:[%s1464 + $0x3c] sm:$0xe]
        %v2409 = vld [vmem:[%s1464 + $0x48] sm:$0xe]
        %v2410 = vld [vmem:[%s1464 + $0x54] sm:$0xe]
        %v2411 = vld [vmem:[%s1464 + $0x60] sm:$0xe]
        %v2412 = vld [vmem:[%s1464 + $0x6c] sm:$0xe]
        %v2413 = vld [vmem:[%s1464 + $0x78] sm:$0xe]
        %v2414 = vld [vmem:[%s1464 + $0x84] sm:$0xe]
        %v2415 = vld [vmem:[%s1464 + $0x90] sm:$0xe]
        %v2416 = vld [vmem:[%s1464 + $0x9c] sm:$0xe]
        %v2417 = vld [vmem:[%s1464 + $0xa8] sm:$0xe]
        %v2418 = vld [vmem:[%s1464 + $0xb4] sm:$0xe]
        %v2467 = vrot.slane %v2403, 5
        %v2468 = vrot.slane %v2467, 4
        %v2469 = vrot.slane %v1751, 5
        %v2470 = vsel %vm1127, %v2468, %v2469
        %v2471 = vrot.slane %v2469, 4
        %v2472 = vrot.slane %v1752, 5
        %v2473 = vsel %vm1127, %v2471, %v2472
        %v2474 = vrot.slane %v2404, 5
        %v2475 = vrot.slane %v2474, 4
        %v2476 = vrot.slane %v1754, 5
        %v2477 = vsel %vm1127, %v2475, %v2476
        %v2478 = vrot.slane %v2476, 4
        %v2479 = vrot.slane %v1755, 5
        %v2480 = vsel %vm1127, %v2478, %v2479
        %v2481 = vrot.slane %v2405, 5
        %v2482 = vrot.slane %v2481, 4
        %v2483 = vrot.slane %v1757, 5
        %v2484 = vsel %vm1127, %v2482, %v2483
        %v2485 = vrot.slane %v2483, 4
        %v2486 = vrot.slane %v1758, 5
        %v2487 = vsel %vm1127, %v2485, %v2486
        %v2488 = vrot.slane %v2406, 5
        %v2489 = vrot.slane %v2488, 4
        %v2490 = vrot.slane %v1760, 5
        %v2491 = vsel %vm1127, %v2489, %v2490
        %v2492 = vrot.slane %v2490, 4
        %v2493 = vrot.slane %v1761, 5
        %v2494 = vsel %vm1127, %v2492, %v2493
        %v2495 = vrot.slane %v2407, 5
        %v2496 = vrot.slane %v2495, 4
        %v2497 = vrot.slane %v1763, 5
        %v2498 = vsel %vm1127, %v2496, %v2497
        %v2499 = vrot.slane %v2497, 4
        %v2500 = vrot.slane %v1764, 5
        %v2501 = vsel %vm1127, %v2499, %v2500
        %v2502 = vrot.slane %v2408, 5
        %v2503 = vrot.slane %v2502, 4
        %v2504 = vrot.slane %v1766, 5
        %v2505 = vsel %vm1127, %v2503, %v2504
        %v2506 = vrot.slane %v2504, 4
        %v2507 = vrot.slane %v1767, 5
        %v2508 = vsel %vm1127, %v2506, %v2507
        %v2509 = vrot.slane %v2409, 5
        %v2510 = vrot.slane %v2509, 4
        %v2511 = vrot.slane %v1769, 5
        %v2512 = vsel %vm1127, %v2510, %v2511
        %v2513 = vrot.slane %v2511, 4
        %v2514 = vrot.slane %v1770, 5
        %v2515 = vsel %vm1127, %v2513, %v2514
        %v2516 = vrot.slane %v2410, 5
        %v2517 = vrot.slane %v2516, 4
        %v2518 = vrot.slane %v1772, 5
        %v2519 = vsel %vm1127, %v2517, %v2518
        %v2520 = vrot.slane %v2518, 4
        %v2521 = vrot.slane %v1773, 5
        %v2522 = vsel %vm1127, %v2520, %v2521
        %v2523 = vrot.slane %v2411, 5
        %v2524 = vrot.slane %v2523, 4
        %v2525 = vrot.slane %v1775, 5
        %v2526 = vsel %vm1127, %v2524, %v2525
        %v2527 = vrot.slane %v2525, 4
        %v2528 = vrot.slane %v1776, 5
        %v2529 = vsel %vm1127, %v2527, %v2528
        %v2530 = vrot.slane %v2412, 5
        %v2531 = vrot.slane %v2530, 4
        %v2532 = vrot.slane %v1778, 5
        %v2533 = vsel %vm1127, %v2531, %v2532
        %v2534 = vrot.slane %v2532, 4
        %v2535 = vrot.slane %v1779, 5
        %v2536 = vsel %vm1127, %v2534, %v2535
        %v2537 = vrot.slane %v2413, 5
        %v2538 = vrot.slane %v2537, 4
        %v2539 = vrot.slane %v1781, 5
        %v2540 = vsel %vm1127, %v2538, %v2539
        %v2541 = vrot.slane %v2539, 4
        %v2542 = vrot.slane %v1782, 5
        %v2543 = vsel %vm1127, %v2541, %v2542
        %v2544 = vrot.slane %v2414, 5
        %v2545 = vrot.slane %v2544, 4
        %v2546 = vrot.slane %v1784, 5
        %v2547 = vsel %vm1127, %v2545, %v2546
        %v2548 = vrot.slane %v2546, 4
        %v2549 = vrot.slane %v1785, 5
        %v2550 = vsel %vm1127, %v2548, %v2549
        %v2551 = vrot.slane %v2415, 5
        %v2552 = vrot.slane %v2551, 4
        %v2553 = vrot.slane %v1787, 5
        %v2554 = vsel %vm1127, %v2552, %v2553
        %v2555 = vrot.slane %v2553, 4
        %v2556 = vrot.slane %v1788, 5
        %v2557 = vsel %vm1127, %v2555, %v2556
        %v2558 = vrot.slane %v2416, 5
        %v2559 = vrot.slane %v2558, 4
        %v2560 = vrot.slane %v1790, 5
        %v2561 = vsel %vm1127, %v2559, %v2560
        %v2562 = vrot.slane %v2560, 4
        %v2563 = vrot.slane %v1791, 5
        %v2564 = vsel %vm1127, %v2562, %v2563
        %v2565 = vrot.slane %v2417, 5
        %v2566 = vrot.slane %v2565, 4
        %v2567 = vrot.slane %v1793, 5
        %v2568 = vsel %vm1127, %v2566, %v2567
        %v2569 = vrot.slane %v2567, 4
        %v2570 = vrot.slane %v1794, 5
        %v2571 = vsel %vm1127, %v2569, %v2570
        %v2572 = vrot.slane %v2418, 5
        %v2573 = vrot.slane %v2572, 4
        %v2574 = vrot.slane %v1796, 5
        %v2575 = vsel %vm1127, %v2573, %v2574
        %v2576 = vrot.slane %v2574, 4
        %v2577 = vrot.slane %v1797, 5
        %v2578 = vsel %vm1127, %v2576, %v2577
        %v2579 = vunpack.c.l.b16 %v2470
        %v2580 = vunpack.c.l.b16 %v2473
        %v2581 = vunpack.c.l.b16 %v2477
        %v2582 = vunpack.c.l.b16 %v2480
        %v2583 = vunpack.c.l.b16 %v2484
        %v2584 = vunpack.c.l.b16 %v2487
        %v2585 = vunpack.c.l.b16 %v2491
        %v2586 = vunpack.c.l.b16 %v2494
        %v2587 = vunpack.c.l.b16 %v2498
        %v2588 = vunpack.c.l.b16 %v2501
        %v2589 = vunpack.c.l.b16 %v2505
        %v2590 = vunpack.c.l.b16 %v2508
        %v2591 = vunpack.c.l.b16 %v2512
        %v2592 = vunpack.c.l.b16 %v2515
        %v2593 = vunpack.c.l.b16 %v2519
        %v2594 = vunpack.c.l.b16 %v2522
        %v2595 = vunpack.c.l.b16 %v2526
        %v2596 = vunpack.c.l.b16 %v2529
        %v2597 = vunpack.c.l.b16 %v2533
        %v2598 = vunpack.c.l.b16 %v2536
        %v2599 = vunpack.c.l.b16 %v2540
        %v2600 = vunpack.c.l.b16 %v2543
        %v2601 = vunpack.c.l.b16 %v2547
        %v2602 = vunpack.c.l.b16 %v2550
        %v2603 = vunpack.c.l.b16 %v2554
        %v2604 = vunpack.c.l.b16 %v2557
        %v2605 = vunpack.c.l.b16 %v2561
        %v2606 = vunpack.c.l.b16 %v2564
        %v2607 = vunpack.c.l.b16 %v2568
        %v2608 = vunpack.c.l.b16 %v2571
        %v2609 = vunpack.c.l.b16 %v2575
        %v2610 = vunpack.c.l.b16 %v2578
        %v2611 = vpack.c.b16 %v2580, %v2579
        %v2612 = vpack.c.b16 %v2582, %v2581
        %v2613 = vpack.c.b16 %v2584, %v2583
        %v2614 = vpack.c.b16 %v2586, %v2585
        %v2615 = vpack.c.b16 %v2588, %v2587
        %v2616 = vpack.c.b16 %v2590, %v2589
        %v2617 = vpack.c.b16 %v2592, %v2591
        %v2618 = vpack.c.b16 %v2594, %v2593
        %v2619 = vpack.c.b16 %v2596, %v2595
        %v2620 = vpack.c.b16 %v2598, %v2597
        %v2621 = vpack.c.b16 %v2600, %v2599
        %v2622 = vpack.c.b16 %v2602, %v2601
        %v2623 = vpack.c.b16 %v2604, %v2603
        %v2624 = vpack.c.b16 %v2606, %v2605
        %v2625 = vpack.c.b16 %v2608, %v2607
        %v2626 = vpack.c.b16 %v2610, %v2609
        %v2628 = vsel %vm714, %v2611, 0
        %v2631 = vsel %vm714, %v2612, 0
        %v2634 = vsel %vm714, %v2613, 0
        %v2637 = vsel %vm714, %v2614, 0
        %v2640 = vsel %vm714, %v2615, 0
        %v2643 = vsel %vm714, %v2616, 0
        %v2646 = vsel %vm714, %v2617, 0
        %v2649 = vsel %vm714, %v2618, 0
        %v2652 = vsel %vm714, %v2619, 0
        %v2655 = vsel %vm714, %v2620, 0
        %v2658 = vsel %vm714, %v2621, 0
        %v2661 = vsel %vm714, %v2622, 0
        %v2664 = vsel %vm714, %v2623, 0
        %v2667 = vsel %vm714, %v2624, 0
        %v2670 = vsel %vm714, %v2625, 0
        %v2673 = vsel %vm714, %v2626, 0
        %v2676 = vsel %vm763, %v2402, 0
        %2678 = vmatpush.bf16.msra.mxu0 0
        %2679 = vmatpush.bf16.msra.mxu0 0
        %2680 = vmatpush.bf16.msra.mxu0 0
        %2681 = vmatpush.bf16.msra.mxu0 0
        %2682 = vmatpush.bf16.msra.mxu0 0
        %2683 = vmatpush.bf16.msra.mxu0 0
        %2684 = vmatpush.bf16.msra.mxu0 0
        %2685 = vmatpush.bf16.msra.mxu0 %v2676
        %2686 = vmatmul.bf16.gmra.mxu0 %v2628
        %v2687 = vpop.f32.mrf.mxu0
        %v2688 = vadd.f32 0.0, %v2687
        %v2689 = vpop.f32.mrf.mxu0
        %v2690 = vadd.f32 0.0, %v2689
        %2691 = vmatmul.bf16.gmra.mxu0 %v2631
        %v2692 = vpop.f32.mrf.mxu0
        %v2693 = vadd.f32 0.0, %v2692
        %v2694 = vpop.f32.mrf.mxu0
        %v2695 = vadd.f32 0.0, %v2694
        %2696 = vmatmul.bf16.gmra.mxu0 %v2634
        %v2697 = vpop.f32.mrf.mxu0
        %v2698 = vadd.f32 0.0, %v2697
        %v2699 = vpop.f32.mrf.mxu0
        %v2700 = vadd.f32 0.0, %v2699
        %2701 = vmatmul.bf16.gmra.mxu0 %v2637
        %v2702 = vpop.f32.mrf.mxu0
        %v2703 = vadd.f32 0.0, %v2702
        %v2704 = vpop.f32.mrf.mxu0
        %v2705 = vadd.f32 0.0, %v2704
        %2706 = vmatmul.bf16.gmra.mxu0 %v2640
        %v2707 = vpop.f32.mrf.mxu0
        %v2708 = vadd.f32 0.0, %v2707
        %v2709 = vpop.f32.mrf.mxu0
        %v2710 = vadd.f32 0.0, %v2709
        %2711 = vmatmul.bf16.gmra.mxu0 %v2643
        %v2712 = vpop.f32.mrf.mxu0
        %v2713 = vadd.f32 0.0, %v2712
        %v2714 = vpop.f32.mrf.mxu0
        %v2715 = vadd.f32 0.0, %v2714
        %2716 = vmatmul.bf16.gmra.mxu0 %v2646
        %v2717 = vpop.f32.mrf.mxu0
        %v2718 = vadd.f32 0.0, %v2717
        %v2719 = vpop.f32.mrf.mxu0
        %v2720 = vadd.f32 0.0, %v2719
        %2721 = vmatmul.bf16.gmra.mxu0 %v2649
        %v2722 = vpop.f32.mrf.mxu0
        %v2723 = vadd.f32 0.0, %v2722
        %v2724 = vpop.f32.mrf.mxu0
        %v2725 = vadd.f32 0.0, %v2724
        %2726 = vmatmul.bf16.gmra.mxu0 %v2652
        %v2727 = vpop.f32.mrf.mxu0
        %v2728 = vadd.f32 0.0, %v2727
        %v2729 = vpop.f32.mrf.mxu0
        %v2730 = vadd.f32 0.0, %v2729
        %2731 = vmatmul.bf16.gmra.mxu0 %v2655
        %v2732 = vpop.f32.mrf.mxu0
        %v2733 = vadd.f32 0.0, %v2732
        %v2734 = vpop.f32.mrf.mxu0
        %v2735 = vadd.f32 0.0, %v2734
        %2736 = vmatmul.bf16.gmra.mxu0 %v2658
        %v2737 = vpop.f32.mrf.mxu0
        %v2738 = vadd.f32 0.0, %v2737
        %v2739 = vpop.f32.mrf.mxu0
        %v2740 = vadd.f32 0.0, %v2739
        %2741 = vmatmul.bf16.gmra.mxu0 %v2661
        %v2742 = vpop.f32.mrf.mxu0
        %v2743 = vadd.f32 0.0, %v2742
        %v2744 = vpop.f32.mrf.mxu0
        %v2745 = vadd.f32 0.0, %v2744
        %2746 = vmatmul.bf16.gmra.mxu0 %v2664
        %v2747 = vpop.f32.mrf.mxu0
        %v2748 = vadd.f32 0.0, %v2747
        %v2749 = vpop.f32.mrf.mxu0
        %v2750 = vadd.f32 0.0, %v2749
        %2751 = vmatmul.bf16.gmra.mxu0 %v2667
        %v2752 = vpop.f32.mrf.mxu0
        %v2753 = vadd.f32 0.0, %v2752
        %v2754 = vpop.f32.mrf.mxu0
        %v2755 = vadd.f32 0.0, %v2754
        %2756 = vmatmul.bf16.gmra.mxu0 %v2670
        %v2757 = vpop.f32.mrf.mxu0
        %v2758 = vadd.f32 0.0, %v2757
        %v2759 = vpop.f32.mrf.mxu0
        %v2760 = vadd.f32 0.0, %v2759
        %2761 = vmatmul.bf16.gmra.mxu0 %v2673
        %v2762 = vpop.f32.mrf.mxu0
        %v2763 = vadd.f32 0.0, %v2762
        %v2764 = vpop.f32.mrf.mxu0
        %v2765 = vadd.f32 0.0, %v2764
        %2766 = vdwg.mxu0
        %v2767 = vadd.f32 %v2370, %v2688
        %v2768 = vadd.f32 %v2371, %v2690
        %v2769 = vadd.f32 %v2372, %v2693
        %v2770 = vadd.f32 %v2373, %v2695
        %v2771 = vadd.f32 %v2374, %v2698
        %v2772 = vadd.f32 %v2375, %v2700
        %v2773 = vadd.f32 %v2376, %v2703
        %v2774 = vadd.f32 %v2377, %v2705
        %v2775 = vadd.f32 %v2378, %v2708
        %v2776 = vadd.f32 %v2379, %v2710
        %v2777 = vadd.f32 %v2380, %v2713
        %v2778 = vadd.f32 %v2381, %v2715
        %v2779 = vadd.f32 %v2382, %v2718
        %v2780 = vadd.f32 %v2383, %v2720
        %v2781 = vadd.f32 %v2384, %v2723
        %v2782 = vadd.f32 %v2385, %v2725
        %v2783 = vadd.f32 %v2386, %v2728
        %v2784 = vadd.f32 %v2387, %v2730
        %v2785 = vadd.f32 %v2388, %v2733
        %v2786 = vadd.f32 %v2389, %v2735
        %v2787 = vadd.f32 %v2390, %v2738
        %v2788 = vadd.f32 %v2391, %v2740
        %v2789 = vadd.f32 %v2392, %v2743
        %v2790 = vadd.f32 %v2393, %v2745
        %v2791 = vadd.f32 %v2394, %v2748
        %v2792 = vadd.f32 %v2395, %v2750
        %v2793 = vadd.f32 %v2396, %v2753
        %v2794 = vadd.f32 %v2397, %v2755
        %v2795 = vadd.f32 %v2398, %v2758
        %v2796 = vadd.f32 %v2399, %v2760
        %v2797 = vadd.f32 %v2400, %v2763
        %v2798 = vadd.f32 %v2401, %v2765
        %v2799 = vld [vmem:[%s219 + $0x18] sm:$0xf]
        %s2800 = sadd.s32 %s225, 2
        %s2801 = smul.u32 %s2800, 3
        %s2802 = smul.addr %s2801, 4
        %s2803 = scalar_lea.vmem %s215, %s2802
        %v2804 = vld [vmem:[%s2803] sm:$0xf]
        %v2805 = vld [vmem:[%s2803 + $0x4] sm:$0xf]
        %v2806 = vld [vmem:[%s2803 + $0xc] sm:$0xf]
        %v2807 = vld [vmem:[%s2803 + $0x10] sm:$0xf]
        %v2808 = vld [vmem:[%s2803 + $0x18] sm:$0xf]
        %v2809 = vld [vmem:[%s2803 + $0x1c] sm:$0xf]
        %v2810 = vld [vmem:[%s2803 + $0x24] sm:$0xf]
        %v2811 = vld [vmem:[%s2803 + $0x28] sm:$0xf]
        %v2812 = vld [vmem:[%s2803 + $0x30] sm:$0xf]
        %v2813 = vld [vmem:[%s2803 + $0x34] sm:$0xf]
        %v2814 = vld [vmem:[%s2803 + $0x3c] sm:$0xf]
        %v2815 = vld [vmem:[%s2803 + $0x40] sm:$0xf]
        %v2816 = vld [vmem:[%s2803 + $0x48] sm:$0xf]
        %v2817 = vld [vmem:[%s2803 + $0x4c] sm:$0xf]
        %v2818 = vld [vmem:[%s2803 + $0x54] sm:$0xf]
        %v2819 = vld [vmem:[%s2803 + $0x58] sm:$0xf]
        %v2820 = vld [vmem:[%s2803 + $0x60] sm:$0xf]
        %v2821 = vld [vmem:[%s2803 + $0x64] sm:$0xf]
        %v2822 = vld [vmem:[%s2803 + $0x6c] sm:$0xf]
        %v2823 = vld [vmem:[%s2803 + $0x70] sm:$0xf]
        %v2824 = vld [vmem:[%s2803 + $0x78] sm:$0xf]
        %v2825 = vld [vmem:[%s2803 + $0x7c] sm:$0xf]
        %v2826 = vld [vmem:[%s2803 + $0x84] sm:$0xf]
        %v2827 = vld [vmem:[%s2803 + $0x88] sm:$0xf]
        %v2828 = vld [vmem:[%s2803 + $0x90] sm:$0xf]
        %v2829 = vld [vmem:[%s2803 + $0x94] sm:$0xf]
        %v2830 = vld [vmem:[%s2803 + $0x9c] sm:$0xf]
        %v2831 = vld [vmem:[%s2803 + $0xa0] sm:$0xf]
        %v2832 = vld [vmem:[%s2803 + $0xa8] sm:$0xf]
        %v2833 = vld [vmem:[%s2803 + $0xac] sm:$0xf]
        %v2834 = vld [vmem:[%s2803 + $0xb4] sm:$0xf]
        %v2835 = vld [vmem:[%s2803 + $0xb8] sm:$0xf]
        %v2868 = vunpack.c.l.b16 %v2804
        %v2869 = vunpack.c.l.b16 %v2805
        %v2870 = vunpack.c.l.b16 %v2806
        %v2871 = vunpack.c.l.b16 %v2807
        %v2872 = vunpack.c.l.b16 %v2808
        %v2873 = vunpack.c.l.b16 %v2809
        %v2874 = vunpack.c.l.b16 %v2810
        %v2875 = vunpack.c.l.b16 %v2811
        %v2876 = vunpack.c.l.b16 %v2812
        %v2877 = vunpack.c.l.b16 %v2813
        %v2878 = vunpack.c.l.b16 %v2814
        %v2879 = vunpack.c.l.b16 %v2815
        %v2880 = vunpack.c.l.b16 %v2816
        %v2881 = vunpack.c.l.b16 %v2817
        %v2882 = vunpack.c.l.b16 %v2818
        %v2883 = vunpack.c.l.b16 %v2819
        %v2884 = vunpack.c.l.b16 %v2820
        %v2885 = vunpack.c.l.b16 %v2821
        %v2886 = vunpack.c.l.b16 %v2822
        %v2887 = vunpack.c.l.b16 %v2823
        %v2888 = vunpack.c.l.b16 %v2824
        %v2889 = vunpack.c.l.b16 %v2825
        %v2890 = vunpack.c.l.b16 %v2826
        %v2891 = vunpack.c.l.b16 %v2827
        %v2892 = vunpack.c.l.b16 %v2828
        %v2893 = vunpack.c.l.b16 %v2829
        %v2894 = vunpack.c.l.b16 %v2830
        %v2895 = vunpack.c.l.b16 %v2831
        %v2896 = vunpack.c.l.b16 %v2832
        %v2897 = vunpack.c.l.b16 %v2833
        %v2898 = vunpack.c.l.b16 %v2834
        %v2899 = vunpack.c.l.b16 %v2835
        %v2900 = vpack.c.b16 %v2869, %v2868
        %v2901 = vpack.c.b16 %v2871, %v2870
        %v2902 = vpack.c.b16 %v2873, %v2872
        %v2903 = vpack.c.b16 %v2875, %v2874
        %v2904 = vpack.c.b16 %v2877, %v2876
        %v2905 = vpack.c.b16 %v2879, %v2878
        %v2906 = vpack.c.b16 %v2881, %v2880
        %v2907 = vpack.c.b16 %v2883, %v2882
        %v2908 = vpack.c.b16 %v2885, %v2884
        %v2909 = vpack.c.b16 %v2887, %v2886
        %v2910 = vpack.c.b16 %v2889, %v2888
        %v2911 = vpack.c.b16 %v2891, %v2890
        %v2912 = vpack.c.b16 %v2893, %v2892
        %v2913 = vpack.c.b16 %v2895, %v2894
        %v2914 = vpack.c.b16 %v2897, %v2896
        %v2915 = vpack.c.b16 %v2899, %v2898
        %v2917 = vsel %vm714, %v2900, 0
        %v2920 = vsel %vm714, %v2901, 0
        %v2923 = vsel %vm714, %v2902, 0
        %v2926 = vsel %vm714, %v2903, 0
        %v2929 = vsel %vm714, %v2904, 0
        %v2932 = vsel %vm714, %v2905, 0
        %v2935 = vsel %vm714, %v2906, 0
        %v2938 = vsel %vm714, %v2907, 0
        %v2941 = vsel %vm714, %v2908, 0
        %v2944 = vsel %vm714, %v2909, 0
        %v2947 = vsel %vm714, %v2910, 0
        %v2950 = vsel %vm714, %v2911, 0
        %v2953 = vsel %vm714, %v2912, 0
        %v2956 = vsel %vm714, %v2913, 0
        %v2959 = vsel %vm714, %v2914, 0
        %v2962 = vsel %vm714, %v2915, 0
        %v2965 = vsel %vm763, %v2799, 0
        %2967 = vmatpush.bf16.msra.mxu0 0
        %2968 = vmatpush.bf16.msra.mxu0 0
        %2969 = vmatpush.bf16.msra.mxu0 0
        %2970 = vmatpush.bf16.msra.mxu0 0
        %2971 = vmatpush.bf16.msra.mxu0 0
        %2972 = vmatpush.bf16.msra.mxu0 0
        %2973 = vmatpush.bf16.msra.mxu0 0
        %2974 = vmatpush.bf16.msra.mxu0 %v2965
        %2975 = vmatmul.bf16.gmra.mxu0 %v2917
        %v2976 = vpop.f32.mrf.mxu0
        %v2977 = vadd.f32 0.0, %v2976
        %v2978 = vpop.f32.mrf.mxu0
        %v2979 = vadd.f32 0.0, %v2978
        %2980 = vmatmul.bf16.gmra.mxu0 %v2920
        %v2981 = vpop.f32.mrf.mxu0
        %v2982 = vadd.f32 0.0, %v2981
        %v2983 = vpop.f32.mrf.mxu0
        %v2984 = vadd.f32 0.0, %v2983
        %2985 = vmatmul.bf16.gmra.mxu0 %v2923
        %v2986 = vpop.f32.mrf.mxu0
        %v2987 = vadd.f32 0.0, %v2986
        %v2988 = vpop.f32.mrf.mxu0
        %v2989 = vadd.f32 0.0, %v2988
        %2990 = vmatmul.bf16.gmra.mxu0 %v2926
        %v2991 = vpop.f32.mrf.mxu0
        %v2992 = vadd.f32 0.0, %v2991
        %v2993 = vpop.f32.mrf.mxu0
        %v2994 = vadd.f32 0.0, %v2993
        %2995 = vmatmul.bf16.gmra.mxu0 %v2929
        %v2996 = vpop.f32.mrf.mxu0
        %v2997 = vadd.f32 0.0, %v2996
        %v2998 = vpop.f32.mrf.mxu0
        %v2999 = vadd.f32 0.0, %v2998
        %3000 = vmatmul.bf16.gmra.mxu0 %v2932
        %v3001 = vpop.f32.mrf.mxu0
        %v3002 = vadd.f32 0.0, %v3001
        %v3003 = vpop.f32.mrf.mxu0
        %v3004 = vadd.f32 0.0, %v3003
        %3005 = vmatmul.bf16.gmra.mxu0 %v2935
        %v3006 = vpop.f32.mrf.mxu0
        %v3007 = vadd.f32 0.0, %v3006
        %v3008 = vpop.f32.mrf.mxu0
        %v3009 = vadd.f32 0.0, %v3008
        %3010 = vmatmul.bf16.gmra.mxu0 %v2938
        %v3011 = vpop.f32.mrf.mxu0
        %v3012 = vadd.f32 0.0, %v3011
        %v3013 = vpop.f32.mrf.mxu0
        %v3014 = vadd.f32 0.0, %v3013
        %3015 = vmatmul.bf16.gmra.mxu0 %v2941
        %v3016 = vpop.f32.mrf.mxu0
        %v3017 = vadd.f32 0.0, %v3016
        %v3018 = vpop.f32.mrf.mxu0
        %v3019 = vadd.f32 0.0, %v3018
        %3020 = vmatmul.bf16.gmra.mxu0 %v2944
        %v3021 = vpop.f32.mrf.mxu0
        %v3022 = vadd.f32 0.0, %v3021
        %v3023 = vpop.f32.mrf.mxu0
        %v3024 = vadd.f32 0.0, %v3023
        %3025 = vmatmul.bf16.gmra.mxu0 %v2947
        %v3026 = vpop.f32.mrf.mxu0
        %v3027 = vadd.f32 0.0, %v3026
        %v3028 = vpop.f32.mrf.mxu0
        %v3029 = vadd.f32 0.0, %v3028
        %3030 = vmatmul.bf16.gmra.mxu0 %v2950
        %v3031 = vpop.f32.mrf.mxu0
        %v3032 = vadd.f32 0.0, %v3031
        %v3033 = vpop.f32.mrf.mxu0
        %v3034 = vadd.f32 0.0, %v3033
        %3035 = vmatmul.bf16.gmra.mxu0 %v2953
        %v3036 = vpop.f32.mrf.mxu0
        %v3037 = vadd.f32 0.0, %v3036
        %v3038 = vpop.f32.mrf.mxu0
        %v3039 = vadd.f32 0.0, %v3038
        %3040 = vmatmul.bf16.gmra.mxu0 %v2956
        %v3041 = vpop.f32.mrf.mxu0
        %v3042 = vadd.f32 0.0, %v3041
        %v3043 = vpop.f32.mrf.mxu0
        %v3044 = vadd.f32 0.0, %v3043
        %3045 = vmatmul.bf16.gmra.mxu0 %v2959
        %v3046 = vpop.f32.mrf.mxu0
        %v3047 = vadd.f32 0.0, %v3046
        %v3048 = vpop.f32.mrf.mxu0
        %v3049 = vadd.f32 0.0, %v3048
        %3050 = vmatmul.bf16.gmra.mxu0 %v2962
        %v3051 = vpop.f32.mrf.mxu0
        %v3052 = vadd.f32 0.0, %v3051
        %v3053 = vpop.f32.mrf.mxu0
        %v3054 = vadd.f32 0.0, %v3053
        %3055 = vdwg.mxu0
        %v3056 = vadd.f32 %v2767, %v2977
        %v3057 = vadd.f32 %v2768, %v2979
        %v3058 = vadd.f32 %v2769, %v2982
        %v3059 = vadd.f32 %v2770, %v2984
        %v3060 = vadd.f32 %v2771, %v2987
        %v3061 = vadd.f32 %v2772, %v2989
        %v3062 = vadd.f32 %v2773, %v2992
        %v3063 = vadd.f32 %v2774, %v2994
        %v3064 = vadd.f32 %v2775, %v2997
        %v3065 = vadd.f32 %v2776, %v2999
        %v3066 = vadd.f32 %v2777, %v3002
        %v3067 = vadd.f32 %v2778, %v3004
        %v3068 = vadd.f32 %v2779, %v3007
        %v3069 = vadd.f32 %v2780, %v3009
        %v3070 = vadd.f32 %v2781, %v3012
        %v3071 = vadd.f32 %v2782, %v3014
        %v3072 = vadd.f32 %v2783, %v3017
        %v3073 = vadd.f32 %v2784, %v3019
        %v3074 = vadd.f32 %v2785, %v3022
        %v3075 = vadd.f32 %v2786, %v3024
        %v3076 = vadd.f32 %v2787, %v3027
        %v3077 = vadd.f32 %v2788, %v3029
        %v3078 = vadd.f32 %v2789, %v3032
        %v3079 = vadd.f32 %v2790, %v3034
        %v3080 = vadd.f32 %v2791, %v3037
        %v3081 = vadd.f32 %v2792, %v3039
        %v3082 = vadd.f32 %v2793, %v3042
        %v3083 = vadd.f32 %v2794, %v3044
        %v3084 = vadd.f32 %v2795, %v3047
        %v3085 = vadd.f32 %v2796, %v3049
        %v3086 = vadd.f32 %v2797, %v3052
        %v3087 = vadd.f32 %v2798, %v3054
        %v3088 = vld [vmem:[%s219 + $0x1c] sm:$0xf]
        %v3089 = vld [vmem:[%s2803] sm:$0xf]
        %v3090 = vld [vmem:[%s2803 + $0x4] sm:$0xf]
        %v3091 = vld [vmem:[%s2803 + $0x8] sm:$0x1]
        %v3092 = vld [vmem:[%s2803 + $0xc] sm:$0xf]
        %v3093 = vld [vmem:[%s2803 + $0x10] sm:$0xf]
        %v3094 = vld [vmem:[%s2803 + $0x14] sm:$0x1]
        %v3095 = vld [vmem:[%s2803 + $0x18] sm:$0xf]
        %v3096 = vld [vmem:[%s2803 + $0x1c] sm:$0xf]
        %v3097 = vld [vmem:[%s2803 + $0x20] sm:$0x1]
        %v3098 = vld [vmem:[%s2803 + $0x24] sm:$0xf]
        %v3099 = vld [vmem:[%s2803 + $0x28] sm:$0xf]
        %v3100 = vld [vmem:[%s2803 + $0x2c] sm:$0x1]
        %v3101 = vld [vmem:[%s2803 + $0x30] sm:$0xf]
        %v3102 = vld [vmem:[%s2803 + $0x34] sm:$0xf]
        %v3103 = vld [vmem:[%s2803 + $0x38] sm:$0x1]
        %v3104 = vld [vmem:[%s2803 + $0x3c] sm:$0xf]
        %v3105 = vld [vmem:[%s2803 + $0x40] sm:$0xf]
        %v3106 = vld [vmem:[%s2803 + $0x44] sm:$0x1]
        %v3107 = vld [vmem:[%s2803 + $0x48] sm:$0xf]
        %v3108 = vld [vmem:[%s2803 + $0x4c] sm:$0xf]
        %v3109 = vld [vmem:[%s2803 + $0x50] sm:$0x1]
        %v3110 = vld [vmem:[%s2803 + $0x54] sm:$0xf]
        %v3111 = vld [vmem:[%s2803 + $0x58] sm:$0xf]
        %v3112 = vld [vmem:[%s2803 + $0x5c] sm:$0x1]
        %v3113 = vld [vmem:[%s2803 + $0x60] sm:$0xf]
        %v3114 = vld [vmem:[%s2803 + $0x64] sm:$0xf]
        %v3115 = vld [vmem:[%s2803 + $0x68] sm:$0x1]
        %v3116 = vld [vmem:[%s2803 + $0x6c] sm:$0xf]
        %v3117 = vld [vmem:[%s2803 + $0x70] sm:$0xf]
        %v3118 = vld [vmem:[%s2803 + $0x74] sm:$0x1]
        %v3119 = vld [vmem:[%s2803 + $0x78] sm:$0xf]
        %v3120 = vld [vmem:[%s2803 + $0x7c] sm:$0xf]
        %v3121 = vld [vmem:[%s2803 + $0x80] sm:$0x1]
        %v3122 = vld [vmem:[%s2803 + $0x84] sm:$0xf]
        %v3123 = vld [vmem:[%s2803 + $0x88] sm:$0xf]
        %v3124 = vld [vmem:[%s2803 + $0x8c] sm:$0x1]
        %v3125 = vld [vmem:[%s2803 + $0x90] sm:$0xf]
        %v3126 = vld [vmem:[%s2803 + $0x94] sm:$0xf]
        %v3127 = vld [vmem:[%s2803 + $0x98] sm:$0x1]
        %v3128 = vld [vmem:[%s2803 + $0x9c] sm:$0xf]
        %v3129 = vld [vmem:[%s2803 + $0xa0] sm:$0xf]
        %v3130 = vld [vmem:[%s2803 + $0xa4] sm:$0x1]
        %v3131 = vld [vmem:[%s2803 + $0xa8] sm:$0xf]
        %v3132 = vld [vmem:[%s2803 + $0xac] sm:$0xf]
        %v3133 = vld [vmem:[%s2803 + $0xb0] sm:$0x1]
        %v3134 = vld [vmem:[%s2803 + $0xb4] sm:$0xf]
        %v3135 = vld [vmem:[%s2803 + $0xb8] sm:$0xf]
        %v3136 = vld [vmem:[%s2803 + $0xbc] sm:$0x1]
        %v3138 = vshrl.u32 %v3089, 16
        %v3140 = vrot.slane %v3138, 4
        %v3141 = vshll.u32 %v3089, 16
        %v3143 = vrot.slane %v3141, 5
        %v3144 = vor.u32 %v3140, %v3143
        %v3145 = vrot.slane %v3144, 4
        %v3147 = vshll.u32 %v3090, 16
        %v3149 = vrot.slane %v3147, 5
        %v3150 = vsel %vm281, %v3145, %v3149
        %v3151 = vshrl.u32 %v3090, 16
        %v3153 = vrot.slane %v3151, 4
        %v3154 = vor.u32 %v3153, %v3149
        %v3155 = vrot.slane %v3154, 4
        %v3157 = vshll.u32 %v3091, 16
        %v3159 = vrot.slane %v3157, 5
        %v3160 = vsel %vm281, %v3155, %v3159
        %v3162 = vshrl.u32 %v3092, 16
        %v3164 = vrot.slane %v3162, 4
        %v3165 = vshll.u32 %v3092, 16
        %v3167 = vrot.slane %v3165, 5
        %v3168 = vor.u32 %v3164, %v3167
        %v3169 = vrot.slane %v3168, 4
        %v3171 = vshll.u32 %v3093, 16
        %v3173 = vrot.slane %v3171, 5
        %v3174 = vsel %vm281, %v3169, %v3173
        %v3175 = vshrl.u32 %v3093, 16
        %v3177 = vrot.slane %v3175, 4
        %v3178 = vor.u32 %v3177, %v3173
        %v3179 = vrot.slane %v3178, 4
        %v3181 = vshll.u32 %v3094, 16
        %v3183 = vrot.slane %v3181, 5
        %v3184 = vsel %vm281, %v3179, %v3183
        %v3186 = vshrl.u32 %v3095, 16
        %v3188 = vrot.slane %v3186, 4
        %v3189 = vshll.u32 %v3095, 16
        %v3191 = vrot.slane %v3189, 5
        %v3192 = vor.u32 %v3188, %v3191
        %v3193 = vrot.slane %v3192, 4
        %v3195 = vshll.u32 %v3096, 16
        %v3197 = vrot.slane %v3195, 5
        %v3198 = vsel %vm281, %v3193, %v3197
        %v3199 = vshrl.u32 %v3096, 16
        %v3201 = vrot.slane %v3199, 4
        %v3202 = vor.u32 %v3201, %v3197
        %v3203 = vrot.slane %v3202, 4
        %v3205 = vshll.u32 %v3097, 16
        %v3207 = vrot.slane %v3205, 5
        %v3208 = vsel %vm281, %v3203, %v3207
        %v3210 = vshrl.u32 %v3098, 16
        %v3212 = vrot.slane %v3210, 4
        %v3213 = vshll.u32 %v3098, 16
        %v3215 = vrot.slane %v3213, 5
        %v3216 = vor.u32 %v3212, %v3215
        %v3217 = vrot.slane %v3216, 4
        %v3219 = vshll.u32 %v3099, 16
        %v3221 = vrot.slane %v3219, 5
        %v3222 = vsel %vm281, %v3217, %v3221
        %v3223 = vshrl.u32 %v3099, 16
        %v3225 = vrot.slane %v3223, 4
        %v3226 = vor.u32 %v3225, %v3221
        %v3227 = vrot.slane %v3226, 4
        %v3229 = vshll.u32 %v3100, 16
        %v3231 = vrot.slane %v3229, 5
        %v3232 = vsel %vm281, %v3227, %v3231
        %v3234 = vshrl.u32 %v3101, 16
        %v3236 = vrot.slane %v3234, 4
        %v3237 = vshll.u32 %v3101, 16
        %v3239 = vrot.slane %v3237, 5
        %v3240 = vor.u32 %v3236, %v3239
        %v3241 = vrot.slane %v3240, 4
        %v3243 = vshll.u32 %v3102, 16
        %v3245 = vrot.slane %v3243, 5
        %v3246 = vsel %vm281, %v3241, %v3245
        %v3247 = vshrl.u32 %v3102, 16
        %v3249 = vrot.slane %v3247, 4
        %v3250 = vor.u32 %v3249, %v3245
        %v3251 = vrot.slane %v3250, 4
        %v3253 = vshll.u32 %v3103, 16
        %v3255 = vrot.slane %v3253, 5
        %v3256 = vsel %vm281, %v3251, %v3255
        %v3258 = vshrl.u32 %v3104, 16
        %v3260 = vrot.slane %v3258, 4
        %v3261 = vshll.u32 %v3104, 16
        %v3263 = vrot.slane %v3261, 5
        %v3264 = vor.u32 %v3260, %v3263
        %v3265 = vrot.slane %v3264, 4
        %v3267 = vshll.u32 %v3105, 16
        %v3269 = vrot.slane %v3267, 5
        %v3270 = vsel %vm281, %v3265, %v3269
        %v3271 = vshrl.u32 %v3105, 16
        %v3273 = vrot.slane %v3271, 4
        %v3274 = vor.u32 %v3273, %v3269
        %v3275 = vrot.slane %v3274, 4
        %v3277 = vshll.u32 %v3106, 16
        %v3279 = vrot.slane %v3277, 5
        %v3280 = vsel %vm281, %v3275, %v3279
        %v3282 = vshrl.u32 %v3107, 16
        %v3284 = vrot.slane %v3282, 4
        %v3285 = vshll.u32 %v3107, 16
        %v3287 = vrot.slane %v3285, 5
        %v3288 = vor.u32 %v3284, %v3287
        %v3289 = vrot.slane %v3288, 4
        %v3291 = vshll.u32 %v3108, 16
        %v3293 = vrot.slane %v3291, 5
        %v3294 = vsel %vm281, %v3289, %v3293
        %v3295 = vshrl.u32 %v3108, 16
        %v3297 = vrot.slane %v3295, 4
        %v3298 = vor.u32 %v3297, %v3293
        %v3299 = vrot.slane %v3298, 4
        %v3301 = vshll.u32 %v3109, 16
        %v3303 = vrot.slane %v3301, 5
        %v3304 = vsel %vm281, %v3299, %v3303
        %v3306 = vshrl.u32 %v3110, 16
        %v3308 = vrot.slane %v3306, 4
        %v3309 = vshll.u32 %v3110, 16
        %v3311 = vrot.slane %v3309, 5
        %v3312 = vor.u32 %v3308, %v3311
        %v3313 = vrot.slane %v3312, 4
        %v3315 = vshll.u32 %v3111, 16
        %v3317 = vrot.slane %v3315, 5
        %v3318 = vsel %vm281, %v3313, %v3317
        %v3319 = vshrl.u32 %v3111, 16
        %v3321 = vrot.slane %v3319, 4
        %v3322 = vor.u32 %v3321, %v3317
        %v3323 = vrot.slane %v3322, 4
        %v3325 = vshll.u32 %v3112, 16
        %v3327 = vrot.slane %v3325, 5
        %v3328 = vsel %vm281, %v3323, %v3327
        %v3330 = vshrl.u32 %v3113, 16
        %v3332 = vrot.slane %v3330, 4
        %v3333 = vshll.u32 %v3113, 16
        %v3335 = vrot.slane %v3333, 5
        %v3336 = vor.u32 %v3332, %v3335
        %v3337 = vrot.slane %v3336, 4
        %v3339 = vshll.u32 %v3114, 16
        %v3341 = vrot.slane %v3339, 5
        %v3342 = vsel %vm281, %v3337, %v3341
        %v3343 = vshrl.u32 %v3114, 16
        %v3345 = vrot.slane %v3343, 4
        %v3346 = vor.u32 %v3345, %v3341
        %v3347 = vrot.slane %v3346, 4
        %v3349 = vshll.u32 %v3115, 16
        %v3351 = vrot.slane %v3349, 5
        %v3352 = vsel %vm281, %v3347, %v3351
        %v3354 = vshrl.u32 %v3116, 16
        %v3356 = vrot.slane %v3354, 4
        %v3357 = vshll.u32 %v3116, 16
        %v3359 = vrot.slane %v3357, 5
        %v3360 = vor.u32 %v3356, %v3359
        %v3361 = vrot.slane %v3360, 4
        %v3363 = vshll.u32 %v3117, 16
        %v3365 = vrot.slane %v3363, 5
        %v3366 = vsel %vm281, %v3361, %v3365
        %v3367 = vshrl.u32 %v3117, 16
        %v3369 = vrot.slane %v3367, 4
        %v3370 = vor.u32 %v3369, %v3365
        %v3371 = vrot.slane %v3370, 4
        %v3373 = vshll.u32 %v3118, 16
        %v3375 = vrot.slane %v3373, 5
        %v3376 = vsel %vm281, %v3371, %v3375
        %v3378 = vshrl.u32 %v3119, 16
        %v3380 = vrot.slane %v3378, 4
        %v3381 = vshll.u32 %v3119, 16
        %v3383 = vrot.slane %v3381, 5
        %v3384 = vor.u32 %v3380, %v3383
        %v3385 = vrot.slane %v3384, 4
        %v3387 = vshll.u32 %v3120, 16
        %v3389 = vrot.slane %v3387, 5
        %v3390 = vsel %vm281, %v3385, %v3389
        %v3391 = vshrl.u32 %v3120, 16
        %v3393 = vrot.slane %v3391, 4
        %v3394 = vor.u32 %v3393, %v3389
        %v3395 = vrot.slane %v3394, 4
        %v3397 = vshll.u32 %v3121, 16
        %v3399 = vrot.slane %v3397, 5
        %v3400 = vsel %vm281, %v3395, %v3399
        %v3402 = vshrl.u32 %v3122, 16
        %v3404 = vrot.slane %v3402, 4
        %v3405 = vshll.u32 %v3122, 16
        %v3407 = vrot.slane %v3405, 5
        %v3408 = vor.u32 %v3404, %v3407
        %v3409 = vrot.slane %v3408, 4
        %v3411 = vshll.u32 %v3123, 16
        %v3413 = vrot.slane %v3411, 5
        %v3414 = vsel %vm281, %v3409, %v3413
        %v3415 = vshrl.u32 %v3123, 16
        %v3417 = vrot.slane %v3415, 4
        %v3418 = vor.u32 %v3417, %v3413
        %v3419 = vrot.slane %v3418, 4
        %v3421 = vshll.u32 %v3124, 16
        %v3423 = vrot.slane %v3421, 5
        %v3424 = vsel %vm281, %v3419, %v3423
        %v3426 = vshrl.u32 %v3125, 16
        %v3428 = vrot.slane %v3426, 4
        %v3429 = vshll.u32 %v3125, 16
        %v3431 = vrot.slane %v3429, 5
        %v3432 = vor.u32 %v3428, %v3431
        %v3433 = vrot.slane %v3432, 4
        %v3435 = vshll.u32 %v3126, 16
        %v3437 = vrot.slane %v3435, 5
        %v3438 = vsel %vm281, %v3433, %v3437
        %v3439 = vshrl.u32 %v3126, 16
        %v3441 = vrot.slane %v3439, 4
        %v3442 = vor.u32 %v3441, %v3437
        %v3443 = vrot.slane %v3442, 4
        %v3445 = vshll.u32 %v3127, 16
        %v3447 = vrot.slane %v3445, 5
        %v3448 = vsel %vm281, %v3443, %v3447
        %v3450 = vshrl.u32 %v3128, 16
        %v3452 = vrot.slane %v3450, 4
        %v3453 = vshll.u32 %v3128, 16
        %v3455 = vrot.slane %v3453, 5
        %v3456 = vor.u32 %v3452, %v3455
        %v3457 = vrot.slane %v3456, 4
        %v3459 = vshll.u32 %v3129, 16
        %v3461 = vrot.slane %v3459, 5
        %v3462 = vsel %vm281, %v3457, %v3461
        %v3463 = vshrl.u32 %v3129, 16
        %v3465 = vrot.slane %v3463, 4
        %v3466 = vor.u32 %v3465, %v3461
        %v3467 = vrot.slane %v3466, 4
        %v3469 = vshll.u32 %v3130, 16
        %v3471 = vrot.slane %v3469, 5
        %v3472 = vsel %vm281, %v3467, %v3471
        %v3474 = vshrl.u32 %v3131, 16
        %v3476 = vrot.slane %v3474, 4
        %v3477 = vshll.u32 %v3131, 16
        %v3479 = vrot.slane %v3477, 5
        %v3480 = vor.u32 %v3476, %v3479
        %v3481 = vrot.slane %v3480, 4
        %v3483 = vshll.u32 %v3132, 16
        %v3485 = vrot.slane %v3483, 5
        %v3486 = vsel %vm281, %v3481, %v3485
        %v3487 = vshrl.u32 %v3132, 16
        %v3489 = vrot.slane %v3487, 4
        %v3490 = vor.u32 %v3489, %v3485
        %v3491 = vrot.slane %v3490, 4
        %v3493 = vshll.u32 %v3133, 16
        %v3495 = vrot.slane %v3493, 5
        %v3496 = vsel %vm281, %v3491, %v3495
        %v3498 = vshrl.u32 %v3134, 16
        %v3500 = vrot.slane %v3498, 4
        %v3501 = vshll.u32 %v3134, 16
        %v3503 = vrot.slane %v3501, 5
        %v3504 = vor.u32 %v3500, %v3503
        %v3505 = vrot.slane %v3504, 4
        %v3507 = vshll.u32 %v3135, 16
        %v3509 = vrot.slane %v3507, 5
        %v3510 = vsel %vm281, %v3505, %v3509
        %v3511 = vshrl.u32 %v3135, 16
        %v3513 = vrot.slane %v3511, 4
        %v3514 = vor.u32 %v3513, %v3509
        %v3515 = vrot.slane %v3514, 4
        %v3517 = vshll.u32 %v3136, 16
        %v3519 = vrot.slane %v3517, 5
        %v3520 = vsel %vm281, %v3515, %v3519
        %v3521 = vunpack.c.l.b16 %v3150
        %v3522 = vunpack.c.l.b16 %v3160
        %v3523 = vunpack.c.l.b16 %v3174
        %v3524 = vunpack.c.l.b16 %v3184
        %v3525 = vunpack.c.l.b16 %v3198
        %v3526 = vunpack.c.l.b16 %v3208
        %v3527 = vunpack.c.l.b16 %v3222
        %v3528 = vunpack.c.l.b16 %v3232
        %v3529 = vunpack.c.l.b16 %v3246
        %v3530 = vunpack.c.l.b16 %v3256
        %v3531 = vunpack.c.l.b16 %v3270
        %v3532 = vunpack.c.l.b16 %v3280
        %v3533 = vunpack.c.l.b16 %v3294
        %v3534 = vunpack.c.l.b16 %v3304
        %v3535 = vunpack.c.l.b16 %v3318
        %v3536 = vunpack.c.l.b16 %v3328
        %v3537 = vunpack.c.l.b16 %v3342
        %v3538 = vunpack.c.l.b16 %v3352
        %v3539 = vunpack.c.l.b16 %v3366
        %v3540 = vunpack.c.l.b16 %v3376
        %v3541 = vunpack.c.l.b16 %v3390
        %v3542 = vunpack.c.l.b16 %v3400
        %v3543 = vunpack.c.l.b16 %v3414
        %v3544 = vunpack.c.l.b16 %v3424
        %v3545 = vunpack.c.l.b16 %v3438
        %v3546 = vunpack.c.l.b16 %v3448
        %v3547 = vunpack.c.l.b16 %v3462
        %v3548 = vunpack.c.l.b16 %v3472
        %v3549 = vunpack.c.l.b16 %v3486
        %v3550 = vunpack.c.l.b16 %v3496
        %v3551 = vunpack.c.l.b16 %v3510
        %v3552 = vunpack.c.l.b16 %v3520
        %v3553 = vpack.c.b16 %v3522, %v3521
        %v3554 = vpack.c.b16 %v3524, %v3523
        %v3555 = vpack.c.b16 %v3526, %v3525
        %v3556 = vpack.c.b16 %v3528, %v3527
        %v3557 = vpack.c.b16 %v3530, %v3529
        %v3558 = vpack.c.b16 %v3532, %v3531
        %v3559 = vpack.c.b16 %v3534, %v3533
        %v3560 = vpack.c.b16 %v3536, %v3535
        %v3561 = vpack.c.b16 %v3538, %v3537
        %v3562 = vpack.c.b16 %v3540, %v3539
        %v3563 = vpack.c.b16 %v3542, %v3541
        %v3564 = vpack.c.b16 %v3544, %v3543
        %v3565 = vpack.c.b16 %v3546, %v3545
        %v3566 = vpack.c.b16 %v3548, %v3547
        %v3567 = vpack.c.b16 %v3550, %v3549
        %v3568 = vpack.c.b16 %v3552, %v3551
        %v3570 = vsel %vm714, %v3553, 0
        %v3573 = vsel %vm714, %v3554, 0
        %v3576 = vsel %vm714, %v3555, 0
        %v3579 = vsel %vm714, %v3556, 0
        %v3582 = vsel %vm714, %v3557, 0
        %v3585 = vsel %vm714, %v3558, 0
        %v3588 = vsel %vm714, %v3559, 0
        %v3591 = vsel %vm714, %v3560, 0
        %v3594 = vsel %vm714, %v3561, 0
        %v3597 = vsel %vm714, %v3562, 0
        %v3600 = vsel %vm714, %v3563, 0
        %v3603 = vsel %vm714, %v3564, 0
        %v3606 = vsel %vm714, %v3565, 0
        %v3609 = vsel %vm714, %v3566, 0
        %v3612 = vsel %vm714, %v3567, 0
        %v3615 = vsel %vm714, %v3568, 0
        %v3618 = vsel %vm763, %v3088, 0
        %3620 = vmatpush.bf16.msra.mxu0 0
        %3621 = vmatpush.bf16.msra.mxu0 0
        %3622 = vmatpush.bf16.msra.mxu0 0
        %3623 = vmatpush.bf16.msra.mxu0 0
        %3624 = vmatpush.bf16.msra.mxu0 0
        %3625 = vmatpush.bf16.msra.mxu0 0
        %3626 = vmatpush.bf16.msra.mxu0 0
        %3627 = vmatpush.bf16.msra.mxu0 %v3618
        %3628 = vmatmul.bf16.gmra.mxu0 %v3570
        %v3629 = vpop.f32.mrf.mxu0
        %v3630 = vadd.f32 0.0, %v3629
        %v3631 = vpop.f32.mrf.mxu0
        %v3632 = vadd.f32 0.0, %v3631
        %3633 = vmatmul.bf16.gmra.mxu0 %v3573
        %v3634 = vpop.f32.mrf.mxu0
        %v3635 = vadd.f32 0.0, %v3634
        %v3636 = vpop.f32.mrf.mxu0
        %v3637 = vadd.f32 0.0, %v3636
        %3638 = vmatmul.bf16.gmra.mxu0 %v3576
        %v3639 = vpop.f32.mrf.mxu0
        %v3640 = vadd.f32 0.0, %v3639
        %v3641 = vpop.f32.mrf.mxu0
        %v3642 = vadd.f32 0.0, %v3641
        %3643 = vmatmul.bf16.gmra.mxu0 %v3579
        %v3644 = vpop.f32.mrf.mxu0
        %v3645 = vadd.f32 0.0, %v3644
        %v3646 = vpop.f32.mrf.mxu0
        %v3647 = vadd.f32 0.0, %v3646
        %3648 = vmatmul.bf16.gmra.mxu0 %v3582
        %v3649 = vpop.f32.mrf.mxu0
        %v3650 = vadd.f32 0.0, %v3649
        %v3651 = vpop.f32.mrf.mxu0
        %v3652 = vadd.f32 0.0, %v3651
        %3653 = vmatmul.bf16.gmra.mxu0 %v3585
        %v3654 = vpop.f32.mrf.mxu0
        %v3655 = vadd.f32 0.0, %v3654
        %v3656 = vpop.f32.mrf.mxu0
        %v3657 = vadd.f32 0.0, %v3656
        %3658 = vmatmul.bf16.gmra.mxu0 %v3588
        %v3659 = vpop.f32.mrf.mxu0
        %v3660 = vadd.f32 0.0, %v3659
        %v3661 = vpop.f32.mrf.mxu0
        %v3662 = vadd.f32 0.0, %v3661
        %3663 = vmatmul.bf16.gmra.mxu0 %v3591
        %v3664 = vpop.f32.mrf.mxu0
        %v3665 = vadd.f32 0.0, %v3664
        %v3666 = vpop.f32.mrf.mxu0
        %v3667 = vadd.f32 0.0, %v3666
        %3668 = vmatmul.bf16.gmra.mxu0 %v3594
        %v3669 = vpop.f32.mrf.mxu0
        %v3670 = vadd.f32 0.0, %v3669
        %v3671 = vpop.f32.mrf.mxu0
        %v3672 = vadd.f32 0.0, %v3671
        %3673 = vmatmul.bf16.gmra.mxu0 %v3597
        %v3674 = vpop.f32.mrf.mxu0
        %v3675 = vadd.f32 0.0, %v3674
        %v3676 = vpop.f32.mrf.mxu0
        %v3677 = vadd.f32 0.0, %v3676
        %3678 = vmatmul.bf16.gmra.mxu0 %v3600
        %v3679 = vpop.f32.mrf.mxu0
        %v3680 = vadd.f32 0.0, %v3679
        %v3681 = vpop.f32.mrf.mxu0
        %v3682 = vadd.f32 0.0, %v3681
        %3683 = vmatmul.bf16.gmra.mxu0 %v3603
        %v3684 = vpop.f32.mrf.mxu0
        %v3685 = vadd.f32 0.0, %v3684
        %v3686 = vpop.f32.mrf.mxu0
        %v3687 = vadd.f32 0.0, %v3686
        %3688 = vmatmul.bf16.gmra.mxu0 %v3606
        %v3689 = vpop.f32.mrf.mxu0
        %v3690 = vadd.f32 0.0, %v3689
        %v3691 = vpop.f32.mrf.mxu0
        %v3692 = vadd.f32 0.0, %v3691
        %3693 = vmatmul.bf16.gmra.mxu0 %v3609
        %v3694 = vpop.f32.mrf.mxu0
        %v3695 = vadd.f32 0.0, %v3694
        %v3696 = vpop.f32.mrf.mxu0
        %v3697 = vadd.f32 0.0, %v3696
        %3698 = vmatmul.bf16.gmra.mxu0 %v3612
        %v3699 = vpop.f32.mrf.mxu0
        %v3700 = vadd.f32 0.0, %v3699
        %v3701 = vpop.f32.mrf.mxu0
        %v3702 = vadd.f32 0.0, %v3701
        %3703 = vmatmul.bf16.gmra.mxu0 %v3615
        %v3704 = vpop.f32.mrf.mxu0
        %v3705 = vadd.f32 0.0, %v3704
        %v3706 = vpop.f32.mrf.mxu0
        %v3707 = vadd.f32 0.0, %v3706
        %3708 = vdwg.mxu0
        %v3709 = vadd.f32 %v3056, %v3630
        %v3710 = vadd.f32 %v3057, %v3632
        %v3711 = vadd.f32 %v3058, %v3635
        %v3712 = vadd.f32 %v3059, %v3637
        %v3713 = vadd.f32 %v3060, %v3640
        %v3714 = vadd.f32 %v3061, %v3642
        %v3715 = vadd.f32 %v3062, %v3645
        %v3716 = vadd.f32 %v3063, %v3647
        %v3717 = vadd.f32 %v3064, %v3650
        %v3718 = vadd.f32 %v3065, %v3652
        %v3719 = vadd.f32 %v3066, %v3655
        %v3720 = vadd.f32 %v3067, %v3657
        %v3721 = vadd.f32 %v3068, %v3660
        %v3722 = vadd.f32 %v3069, %v3662
        %v3723 = vadd.f32 %v3070, %v3665
        %v3724 = vadd.f32 %v3071, %v3667
        %v3725 = vadd.f32 %v3072, %v3670
        %v3726 = vadd.f32 %v3073, %v3672
        %v3727 = vadd.f32 %v3074, %v3675
        %v3728 = vadd.f32 %v3075, %v3677
        %v3729 = vadd.f32 %v3076, %v3680
        %v3730 = vadd.f32 %v3077, %v3682
        %v3731 = vadd.f32 %v3078, %v3685
        %v3732 = vadd.f32 %v3079, %v3687
        %v3733 = vadd.f32 %v3080, %v3690
        %v3734 = vadd.f32 %v3081, %v3692
        %v3735 = vadd.f32 %v3082, %v3695
        %v3736 = vadd.f32 %v3083, %v3697
        %v3737 = vadd.f32 %v3084, %v3700
        %v3738 = vadd.f32 %v3085, %v3702
        %v3739 = vadd.f32 %v3086, %v3705
        %v3740 = vadd.f32 %v3087, %v3707
        %v3741 = vld [vmem:[%s219 + $0x20] sm:$0xf]
        %v3742 = vld [vmem:[%s2803] sm:$0xe]
        %v3743 = vld [vmem:[%s2803 + $0xc] sm:$0xe]
        %v3744 = vld [vmem:[%s2803 + $0x18] sm:$0xe]
        %v3745 = vld [vmem:[%s2803 + $0x24] sm:$0xe]
        %v3746 = vld [vmem:[%s2803 + $0x30] sm:$0xe]
        %v3747 = vld [vmem:[%s2803 + $0x3c] sm:$0xe]
        %v3748 = vld [vmem:[%s2803 + $0x48] sm:$0xe]
        %v3749 = vld [vmem:[%s2803 + $0x54] sm:$0xe]
        %v3750 = vld [vmem:[%s2803 + $0x60] sm:$0xe]
        %v3751 = vld [vmem:[%s2803 + $0x6c] sm:$0xe]
        %v3752 = vld [vmem:[%s2803 + $0x78] sm:$0xe]
        %v3753 = vld [vmem:[%s2803 + $0x84] sm:$0xe]
        %v3754 = vld [vmem:[%s2803 + $0x90] sm:$0xe]
        %v3755 = vld [vmem:[%s2803 + $0x9c] sm:$0xe]
        %v3756 = vld [vmem:[%s2803 + $0xa8] sm:$0xe]
        %v3757 = vld [vmem:[%s2803 + $0xb4] sm:$0xe]
        %v3806 = vrot.slane %v3742, 5
        %v3807 = vrot.slane %v3806, 4
        %v3808 = vrot.slane %v3090, 5
        %v3809 = vsel %vm1127, %v3807, %v3808
        %v3810 = vrot.slane %v3808, 4
        %v3811 = vrot.slane %v3091, 5
        %v3812 = vsel %vm1127, %v3810, %v3811
        %v3813 = vrot.slane %v3743, 5
        %v3814 = vrot.slane %v3813, 4
        %v3815 = vrot.slane %v3093, 5
        %v3816 = vsel %vm1127, %v3814, %v3815
        %v3817 = vrot.slane %v3815, 4
        %v3818 = vrot.slane %v3094, 5
        %v3819 = vsel %vm1127, %v3817, %v3818
        %v3820 = vrot.slane %v3744, 5
        %v3821 = vrot.slane %v3820, 4
        %v3822 = vrot.slane %v3096, 5
        %v3823 = vsel %vm1127, %v3821, %v3822
        %v3824 = vrot.slane %v3822, 4
        %v3825 = vrot.slane %v3097, 5
        %v3826 = vsel %vm1127, %v3824, %v3825
        %v3827 = vrot.slane %v3745, 5
        %v3828 = vrot.slane %v3827, 4
        %v3829 = vrot.slane %v3099, 5
        %v3830 = vsel %vm1127, %v3828, %v3829
        %v3831 = vrot.slane %v3829, 4
        %v3832 = vrot.slane %v3100, 5
        %v3833 = vsel %vm1127, %v3831, %v3832
        %v3834 = vrot.slane %v3746, 5
        %v3835 = vrot.slane %v3834, 4
        %v3836 = vrot.slane %v3102, 5
        %v3837 = vsel %vm1127, %v3835, %v3836
        %v3838 = vrot.slane %v3836, 4
        %v3839 = vrot.slane %v3103, 5
        %v3840 = vsel %vm1127, %v3838, %v3839
        %v3841 = vrot.slane %v3747, 5
        %v3842 = vrot.slane %v3841, 4
        %v3843 = vrot.slane %v3105, 5
        %v3844 = vsel %vm1127, %v3842, %v3843
        %v3845 = vrot.slane %v3843, 4
        %v3846 = vrot.slane %v3106, 5
        %v3847 = vsel %vm1127, %v3845, %v3846
        %v3848 = vrot.slane %v3748, 5
        %v3849 = vrot.slane %v3848, 4
        %v3850 = vrot.slane %v3108, 5
        %v3851 = vsel %vm1127, %v3849, %v3850
        %v3852 = vrot.slane %v3850, 4
        %v3853 = vrot.slane %v3109, 5
        %v3854 = vsel %vm1127, %v3852, %v3853
        %v3855 = vrot.slane %v3749, 5
        %v3856 = vrot.slane %v3855, 4
        %v3857 = vrot.slane %v3111, 5
        %v3858 = vsel %vm1127, %v3856, %v3857
        %v3859 = vrot.slane %v3857, 4
        %v3860 = vrot.slane %v3112, 5
        %v3861 = vsel %vm1127, %v3859, %v3860
        %v3862 = vrot.slane %v3750, 5
        %v3863 = vrot.slane %v3862, 4
        %v3864 = vrot.slane %v3114, 5
        %v3865 = vsel %vm1127, %v3863, %v3864
        %v3866 = vrot.slane %v3864, 4
        %v3867 = vrot.slane %v3115, 5
        %v3868 = vsel %vm1127, %v3866, %v3867
        %v3869 = vrot.slane %v3751, 5
        %v3870 = vrot.slane %v3869, 4
        %v3871 = vrot.slane %v3117, 5
        %v3872 = vsel %vm1127, %v3870, %v3871
        %v3873 = vrot.slane %v3871, 4
        %v3874 = vrot.slane %v3118, 5
        %v3875 = vsel %vm1127, %v3873, %v3874
        %v3876 = vrot.slane %v3752, 5
        %v3877 = vrot.slane %v3876, 4
        %v3878 = vrot.slane %v3120, 5
        %v3879 = vsel %vm1127, %v3877, %v3878
        %v3880 = vrot.slane %v3878, 4
        %v3881 = vrot.slane %v3121, 5
        %v3882 = vsel %vm1127, %v3880, %v3881
        %v3883 = vrot.slane %v3753, 5
        %v3884 = vrot.slane %v3883, 4
        %v3885 = vrot.slane %v3123, 5
        %v3886 = vsel %vm1127, %v3884, %v3885
        %v3887 = vrot.slane %v3885, 4
        %v3888 = vrot.slane %v3124, 5
        %v3889 = vsel %vm1127, %v3887, %v3888
        %v3890 = vrot.slane %v3754, 5
        %v3891 = vrot.slane %v3890, 4
        %v3892 = vrot.slane %v3126, 5
        %v3893 = vsel %vm1127, %v3891, %v3892
        %v3894 = vrot.slane %v3892, 4
        %v3895 = vrot.slane %v3127, 5
        %v3896 = vsel %vm1127, %v3894, %v3895
        %v3897 = vrot.slane %v3755, 5
        %v3898 = vrot.slane %v3897, 4
        %v3899 = vrot.slane %v3129, 5
        %v3900 = vsel %vm1127, %v3898, %v3899
        %v3901 = vrot.slane %v3899, 4
        %v3902 = vrot.slane %v3130, 5
        %v3903 = vsel %vm1127, %v3901, %v3902
        %v3904 = vrot.slane %v3756, 5
        %v3905 = vrot.slane %v3904, 4
        %v3906 = vrot.slane %v3132, 5
        %v3907 = vsel %vm1127, %v3905, %v3906
        %v3908 = vrot.slane %v3906, 4
        %v3909 = vrot.slane %v3133, 5
        %v3910 = vsel %vm1127, %v3908, %v3909
        %v3911 = vrot.slane %v3757, 5
        %v3912 = vrot.slane %v3911, 4
        %v3913 = vrot.slane %v3135, 5
        %v3914 = vsel %vm1127, %v3912, %v3913
        %v3915 = vrot.slane %v3913, 4
        %v3916 = vrot.slane %v3136, 5
        %v3917 = vsel %vm1127, %v3915, %v3916
        %v3918 = vunpack.c.l.b16 %v3809
        %v3919 = vunpack.c.l.b16 %v3812
        %v3920 = vunpack.c.l.b16 %v3816
        %v3921 = vunpack.c.l.b16 %v3819
        %v3922 = vunpack.c.l.b16 %v3823
        %v3923 = vunpack.c.l.b16 %v3826
        %v3924 = vunpack.c.l.b16 %v3830
        %v3925 = vunpack.c.l.b16 %v3833
        %v3926 = vunpack.c.l.b16 %v3837
        %v3927 = vunpack.c.l.b16 %v3840
        %v3928 = vunpack.c.l.b16 %v3844
        %v3929 = vunpack.c.l.b16 %v3847
        %v3930 = vunpack.c.l.b16 %v3851
        %v3931 = vunpack.c.l.b16 %v3854
        %v3932 = vunpack.c.l.b16 %v3858
        %v3933 = vunpack.c.l.b16 %v3861
        %v3934 = vunpack.c.l.b16 %v3865
        %v3935 = vunpack.c.l.b16 %v3868
        %v3936 = vunpack.c.l.b16 %v3872
        %v3937 = vunpack.c.l.b16 %v3875
        %v3938 = vunpack.c.l.b16 %v3879
        %v3939 = vunpack.c.l.b16 %v3882
        %v3940 = vunpack.c.l.b16 %v3886
        %v3941 = vunpack.c.l.b16 %v3889
        %v3942 = vunpack.c.l.b16 %v3893
        %v3943 = vunpack.c.l.b16 %v3896
        %v3944 = vunpack.c.l.b16 %v3900
        %v3945 = vunpack.c.l.b16 %v3903
        %v3946 = vunpack.c.l.b16 %v3907
        %v3947 = vunpack.c.l.b16 %v3910
        %v3948 = vunpack.c.l.b16 %v3914
        %v3949 = vunpack.c.l.b16 %v3917
        %v3950 = vpack.c.b16 %v3919, %v3918
        %v3951 = vpack.c.b16 %v3921, %v3920
        %v3952 = vpack.c.b16 %v3923, %v3922
        %v3953 = vpack.c.b16 %v3925, %v3924
        %v3954 = vpack.c.b16 %v3927, %v3926
        %v3955 = vpack.c.b16 %v3929, %v3928
        %v3956 = vpack.c.b16 %v3931, %v3930
        %v3957 = vpack.c.b16 %v3933, %v3932
        %v3958 = vpack.c.b16 %v3935, %v3934
        %v3959 = vpack.c.b16 %v3937, %v3936
        %v3960 = vpack.c.b16 %v3939, %v3938
        %v3961 = vpack.c.b16 %v3941, %v3940
        %v3962 = vpack.c.b16 %v3943, %v3942
        %v3963 = vpack.c.b16 %v3945, %v3944
        %v3964 = vpack.c.b16 %v3947, %v3946
        %v3965 = vpack.c.b16 %v3949, %v3948
        %v3967 = vsel %vm714, %v3950, 0
        %v3970 = vsel %vm714, %v3951, 0
        %v3973 = vsel %vm714, %v3952, 0
        %v3976 = vsel %vm714, %v3953, 0
        %v3979 = vsel %vm714, %v3954, 0
        %v3982 = vsel %vm714, %v3955, 0
        %v3985 = vsel %vm714, %v3956, 0
        %v3988 = vsel %vm714, %v3957, 0
        %v3991 = vsel %vm714, %v3958, 0
        %v3994 = vsel %vm714, %v3959, 0
        %v3997 = vsel %vm714, %v3960, 0
        %v4000 = vsel %vm714, %v3961, 0
        %v4003 = vsel %vm714, %v3962, 0
        %v4006 = vsel %vm714, %v3963, 0
        %v4009 = vsel %vm714, %v3964, 0
        %v4012 = vsel %vm714, %v3965, 0
        %v4015 = vsel %vm763, %v3741, 0
        %4017 = vmatpush.bf16.msra.mxu0 0
        %4018 = vmatpush.bf16.msra.mxu0 0
        %4019 = vmatpush.bf16.msra.mxu0 0
        %4020 = vmatpush.bf16.msra.mxu0 0
        %4021 = vmatpush.bf16.msra.mxu0 0
        %4022 = vmatpush.bf16.msra.mxu0 0
        %4023 = vmatpush.bf16.msra.mxu0 0
        %4024 = vmatpush.bf16.msra.mxu0 %v4015
        %4025 = vmatmul.bf16.gmra.mxu0 %v3967
        %v4026 = vpop.f32.mrf.mxu0
        %v4027 = vadd.f32 0.0, %v4026
        %v4028 = vpop.f32.mrf.mxu0
        %v4029 = vadd.f32 0.0, %v4028
        %4030 = vmatmul.bf16.gmra.mxu0 %v3970
        %v4031 = vpop.f32.mrf.mxu0
        %v4032 = vadd.f32 0.0, %v4031
        %v4033 = vpop.f32.mrf.mxu0
        %v4034 = vadd.f32 0.0, %v4033
        %4035 = vmatmul.bf16.gmra.mxu0 %v3973
        %v4036 = vpop.f32.mrf.mxu0
        %v4037 = vadd.f32 0.0, %v4036
        %v4038 = vpop.f32.mrf.mxu0
        %v4039 = vadd.f32 0.0, %v4038
        %4040 = vmatmul.bf16.gmra.mxu0 %v3976
        %v4041 = vpop.f32.mrf.mxu0
        %v4042 = vadd.f32 0.0, %v4041
        %v4043 = vpop.f32.mrf.mxu0
        %v4044 = vadd.f32 0.0, %v4043
        %4045 = vmatmul.bf16.gmra.mxu0 %v3979
        %v4046 = vpop.f32.mrf.mxu0
        %v4047 = vadd.f32 0.0, %v4046
        %v4048 = vpop.f32.mrf.mxu0
        %v4049 = vadd.f32 0.0, %v4048
        %4050 = vmatmul.bf16.gmra.mxu0 %v3982
        %v4051 = vpop.f32.mrf.mxu0
        %v4052 = vadd.f32 0.0, %v4051
        %v4053 = vpop.f32.mrf.mxu0
        %v4054 = vadd.f32 0.0, %v4053
        %4055 = vmatmul.bf16.gmra.mxu0 %v3985
        %v4056 = vpop.f32.mrf.mxu0
        %v4057 = vadd.f32 0.0, %v4056
        %v4058 = vpop.f32.mrf.mxu0
        %v4059 = vadd.f32 0.0, %v4058
        %4060 = vmatmul.bf16.gmra.mxu0 %v3988
        %v4061 = vpop.f32.mrf.mxu0
        %v4062 = vadd.f32 0.0, %v4061
        %v4063 = vpop.f32.mrf.mxu0
        %v4064 = vadd.f32 0.0, %v4063
        %4065 = vmatmul.bf16.gmra.mxu0 %v3991
        %v4066 = vpop.f32.mrf.mxu0
        %v4067 = vadd.f32 0.0, %v4066
        %v4068 = vpop.f32.mrf.mxu0
        %v4069 = vadd.f32 0.0, %v4068
        %4070 = vmatmul.bf16.gmra.mxu0 %v3994
        %v4071 = vpop.f32.mrf.mxu0
        %v4072 = vadd.f32 0.0, %v4071
        %v4073 = vpop.f32.mrf.mxu0
        %v4074 = vadd.f32 0.0, %v4073
        %4075 = vmatmul.bf16.gmra.mxu0 %v3997
        %v4076 = vpop.f32.mrf.mxu0
        %v4077 = vadd.f32 0.0, %v4076
        %v4078 = vpop.f32.mrf.mxu0
        %v4079 = vadd.f32 0.0, %v4078
        %4080 = vmatmul.bf16.gmra.mxu0 %v4000
        %v4081 = vpop.f32.mrf.mxu0
        %v4082 = vadd.f32 0.0, %v4081
        %v4083 = vpop.f32.mrf.mxu0
        %v4084 = vadd.f32 0.0, %v4083
        %4085 = vmatmul.bf16.gmra.mxu0 %v4003
        %v4086 = vpop.f32.mrf.mxu0
        %v4087 = vadd.f32 0.0, %v4086
        %v4088 = vpop.f32.mrf.mxu0
        %v4089 = vadd.f32 0.0, %v4088
        %4090 = vmatmul.bf16.gmra.mxu0 %v4006
        %v4091 = vpop.f32.mrf.mxu0
        %v4092 = vadd.f32 0.0, %v4091
        %v4093 = vpop.f32.mrf.mxu0
        %v4094 = vadd.f32 0.0, %v4093
        %4095 = vmatmul.bf16.gmra.mxu0 %v4009
        %v4096 = vpop.f32.mrf.mxu0
        %v4097 = vadd.f32 0.0, %v4096
        %v4098 = vpop.f32.mrf.mxu0
        %v4099 = vadd.f32 0.0, %v4098
        %4100 = vmatmul.bf16.gmra.mxu0 %v4012
        %v4101 = vpop.f32.mrf.mxu0
        %v4102 = vadd.f32 0.0, %v4101
        %v4103 = vpop.f32.mrf.mxu0
        %v4104 = vadd.f32 0.0, %v4103
        %4105 = vdwg.mxu0
        %v4106 = vadd.f32 %v3709, %v4027
        %v4107 = vadd.f32 %v3710, %v4029
        %v4108 = vadd.f32 %v3711, %v4032
        %v4109 = vadd.f32 %v3712, %v4034
        %v4110 = vadd.f32 %v3713, %v4037
        %v4111 = vadd.f32 %v3714, %v4039
        %v4112 = vadd.f32 %v3715, %v4042
        %v4113 = vadd.f32 %v3716, %v4044
        %v4114 = vadd.f32 %v3717, %v4047
        %v4115 = vadd.f32 %v3718, %v4049
        %v4116 = vadd.f32 %v3719, %v4052
        %v4117 = vadd.f32 %v3720, %v4054
        %v4118 = vadd.f32 %v3721, %v4057
        %v4119 = vadd.f32 %v3722, %v4059
        %v4120 = vadd.f32 %v3723, %v4062
        %v4121 = vadd.f32 %v3724, %v4064
        %v4122 = vadd.f32 %v3725, %v4067
        %v4123 = vadd.f32 %v3726, %v4069
        %v4124 = vadd.f32 %v3727, %v4072
        %v4125 = vadd.f32 %v3728, %v4074
        %v4126 = vadd.f32 %v3729, %v4077
        %v4127 = vadd.f32 %v3730, %v4079
        %v4128 = vadd.f32 %v3731, %v4082
        %v4129 = vadd.f32 %v3732, %v4084
        %v4130 = vadd.f32 %v3733, %v4087
        %v4131 = vadd.f32 %v3734, %v4089
        %v4132 = vadd.f32 %v3735, %v4092
        %v4133 = vadd.f32 %v3736, %v4094
        %v4134 = vadd.f32 %v3737, %v4097
        %v4135 = vadd.f32 %v3738, %v4099
        %v4136 = vadd.f32 %v3739, %v4102
        %v4137 = vadd.f32 %v3740, %v4104
        %v4138 = vld [vmem:[%s222] sm:$0x1]
        %v4140 = vperm.slane %v4138, 0
        %v4142 = vadd.f32 %v4106, %v4140
        %v4143 = vadd.f32 %v4107, %v4140
        %v4144 = vadd.f32 %v4108, %v4140
        %v4145 = vadd.f32 %v4109, %v4140
        %v4146 = vadd.f32 %v4110, %v4140
        %v4147 = vadd.f32 %v4111, %v4140
        %v4148 = vadd.f32 %v4112, %v4140
        %v4149 = vadd.f32 %v4113, %v4140
        %v4150 = vadd.f32 %v4114, %v4140
        %v4151 = vadd.f32 %v4115, %v4140
        %v4152 = vadd.f32 %v4116, %v4140
        %v4153 = vadd.f32 %v4117, %v4140
        %v4154 = vadd.f32 %v4118, %v4140
        %v4155 = vadd.f32 %v4119, %v4140
        %v4156 = vadd.f32 %v4120, %v4140
        %v4157 = vadd.f32 %v4121, %v4140
        %v4158 = vadd.f32 %v4122, %v4140
        %v4159 = vadd.f32 %v4123, %v4140
        %v4160 = vadd.f32 %v4124, %v4140
        %v4161 = vadd.f32 %v4125, %v4140
        %v4162 = vadd.f32 %v4126, %v4140
        %v4163 = vadd.f32 %v4127, %v4140
        %v4164 = vadd.f32 %v4128, %v4140
        %v4165 = vadd.f32 %v4129, %v4140
        %v4166 = vadd.f32 %v4130, %v4140
        %v4167 = vadd.f32 %v4131, %v4140
        %v4168 = vadd.f32 %v4132, %v4140
        %v4169 = vadd.f32 %v4133, %v4140
        %v4170 = vadd.f32 %v4134, %v4140
        %v4171 = vadd.f32 %v4135, %v4140
        %v4172 = vadd.f32 %v4136, %v4140
        %v4173 = vadd.f32 %v4137, %v4140
        %4174 = vst [vmem:[%s210] sm:$0xff] %v4142
        %4175 = vst [vmem:[%s210 + $0x8] sm:$0xff] %v4143
        %4176 = vst [vmem:[%s210 + $0x10] sm:$0xff] %v4144
        %4177 = vst [vmem:[%s210 + $0x18] sm:$0xff] %v4145
        %4178 = vst [vmem:[%s210 + $0x20] sm:$0xff] %v4146
        %4179 = vst [vmem:[%s210 + $0x28] sm:$0xff] %v4147
        %4180 = vst [vmem:[%s210 + $0x30] sm:$0xff] %v4148
        %4181 = vst [vmem:[%s210 + $0x38] sm:$0xff] %v4149
        %4182 = vst [vmem:[%s210 + $0x40] sm:$0xff] %v4150
        %4183 = vst [vmem:[%s210 + $0x48] sm:$0xff] %v4151
        %4184 = vst [vmem:[%s210 + $0x50] sm:$0xff] %v4152
        %4185 = vst [vmem:[%s210 + $0x58] sm:$0xff] %v4153
        %4186 = vst [vmem:[%s210 + $0x60] sm:$0xff] %v4154
        %4187 = vst [vmem:[%s210 + $0x68] sm:$0xff] %v4155
        %4188 = vst [vmem:[%s210 + $0x70] sm:$0xff] %v4156
        %4189 = vst [vmem:[%s210 + $0x78] sm:$0xff] %v4157
        %4190 = vst [vmem:[%s210 + $0x80] sm:$0xff] %v4158
        %4191 = vst [vmem:[%s210 + $0x88] sm:$0xff] %v4159
        %4192 = vst [vmem:[%s210 + $0x90] sm:$0xff] %v4160
        %4193 = vst [vmem:[%s210 + $0x98] sm:$0xff] %v4161
        %4194 = vst [vmem:[%s210 + $0xa0] sm:$0xff] %v4162
        %4195 = vst [vmem:[%s210 + $0xa8] sm:$0xff] %v4163
        %4196 = vst [vmem:[%s210 + $0xb0] sm:$0xff] %v4164
        %4197 = vst [vmem:[%s210 + $0xb8] sm:$0xff] %v4165
        %4198 = vst [vmem:[%s210 + $0xc0] sm:$0xff] %v4166
        %4199 = vst [vmem:[%s210 + $0xc8] sm:$0xff] %v4167
        %4200 = vst [vmem:[%s210 + $0xd0] sm:$0xff] %v4168
        %4201 = vst [vmem:[%s210 + $0xd8] sm:$0xff] %v4169
        %4202 = vst [vmem:[%s210 + $0xe0] sm:$0xff] %v4170
        %4203 = vst [vmem:[%s210 + $0xe8] sm:$0xff] %v4171
        %4204 = vst [vmem:[%s210 + $0xf0] sm:$0xff] %v4172
        %4205 = vst [vmem:[%s210 + $0xf8] sm:$0xff] %v4173
        %s4206 = sand.u32 %s126, 1
        %s4207 = scalar_lea.sflag [#allocation3], %s4206
        %s4208 = sand.u32 %s126, 1
        %s4209 = smul.addr %s4208, 256
        %s4210 = scalar_lea.vmem [#allocation2], %s4209
        // Predicated region
        $region33: #{tpu_custom_call.1} parent=31 // pred_check
          %p4211 = pneg %p136
        $region34: #{tpu_custom_call.1} parent=31 // pred_check_branch
          %4213 = sbr.rel (%p4211) target = $region36
        $region35: #{tpu_custom_call.1} parent=31 // pred_region
          %s4214 = smul.u32 16, %s24
          %4216 = vsyncadd %s4207, 0
          %s4217 = smul.addr %s4214, 2
          %s4218 = sadd.s32 %s23, %s4217
          %s4219 = smul.addr %s22, 32
          %s4220 = sadd.s32 %s4218, %s4219
          %s4221 = smul.addr %s4220, 8
          %s4222 = scalar_lea.hbm %s3, %s4221
          %s4223 = sshll.u32 %s4210, 4
          %s4224 = int_to_ptr.vmem [resolvable:$true] %s4223
          %s4225 = sshll.u32 %s4222, 4
          %s4226 = int_to_ptr.hbm [resolvable:$true] %s4225
          %4231 = dma.vmem_to_hbm [thread:$0]  %s4224, 4096, %s4226, %s4207, 128, 128, 8
        $region36: #{tpu_custom_call.1} parent=31 // pred_fallthru
          _
      $region32: #{tpu_custom_call.1} parent=5 // pred_fallthru
        _
      %p4232 = scmp.le.s32.totalorder 2, %s12
      // Predicated region
      $region37: #{tpu_custom_call.1} parent=5 // pred_check
        %p4233 = pneg %p4232
      $region38: #{tpu_custom_call.1} parent=5 // pred_check_branch
        %4235 = sbr.rel (%p4233) target = $region40
      $region39: #{tpu_custom_call.1} parent=5 // pred_region
        %s4236 = ssub.s32 %s12, 2
        // Predicated region
        $region41: #{tpu_custom_call.1} parent=39 // pred_check
          %p4237 = pneg %p142
        $region42: #{tpu_custom_call.1} parent=39 // pred_check_branch
          %4239 = sbr.rel (%p4237) target = $region44
        $region43: #{tpu_custom_call.1} parent=39 // pred_region
          %s4240 = sand.u32 %s127, 1
          %s4241 = scalar_lea.sflag [#allocation3], %s4240
          %s4242 = sand.u32 %s127, 1
          %s4243 = smul.addr %s4242, 256
          %s4244 = scalar_lea.vmem [#allocation2], %s4243
          %4246 = dma.done %s4241, 4096
        $region44: #{tpu_custom_call.1} parent=39 // pred_fallthru
          _
      $region40: #{tpu_custom_call.1} parent=5 // pred_fallthru
        _
    $region6: #{tpu_custom_call.1} parent=1 // loop_footer
      %s16 = sadd.s32 1, %s12
    $region7: #{tpu_custom_call.1} parent=1 // loop_footer_branch
      %11 = sbr.rel target = $region3
    $region8: #{tpu_custom_call.1} parent=1 // loop_exit
      _
    %4247 = vsyncpa [#allocation3], 1
    %s4248 = scalar_lea.sflag [#allocation3], 1
    %4249 = vsyncpa %s4248, 1

</llo_original>
